<compile_context>
chip_gen: v5e
topology: v5e:2x2
jax: 0.10.0
libtpu: 0.0.40
codegen_flags: <defaults>
</compile_context>

<pallas_src>
import math

import jax
import jax.numpy as jnp
from jax import lax
from jax.experimental import pallas as pl
from jax.experimental.pallas import tpu as pltpu

# ----------------------------- config ---------------------------------------
B = 2                  # batch
S = 8                  # sequence length
H = 128                # hidden size (bert.config.hidden_size == config.embed_dim)
NUM_HEADS = 2
HEAD_DIM = H // NUM_HEADS
INTER = 256            # FFN intermediate size
VOCAB = 64
NUM_LAYERS = 2
OUT_DIM = 3            # config.output_dim
PAD_OUT = 128          # lane-dense padded classifier width
LN_EPS = 1e-12         # BERT LayerNorm eps
BS = B * S             # batch folded into the matmul M dimension


# --------------------------- in-kernel helpers -------------------------------
def _layernorm(x, g, b):
    mu = jnp.mean(x, axis=-1, keepdims=True)
    var = jnp.mean((x - mu) ** 2, axis=-1, keepdims=True)
    return (x - mu) * lax.rsqrt(var + LN_EPS) * g + b


def _gelu(x):
    # TODO(synk): HF BERT default is erf-GELU; tanh approximation deviates ~1e-3.
    return 0.5 * x * (1.0 + jnp.tanh(0.7978845608028654 * (x + 0.044715 * x * x * x)))


# ------------------------------ fused kernel ---------------------------------
def bert_fused_kernel(x_ref, eg_ref, eb_ref,
                      wqkv_ref, bqkv_ref, wo_ref, bo_ref, ln1g_ref, ln1b_ref,
                      w1_ref, b1_ref, w2_ref, b2_ref, ln2g_ref, ln2b_ref,
                      wp_ref, bp_ref, wd_ref, bd_ref,
                      pooled_ref, logits_ref):
    # embedding LayerNorm over the whole [B*S, H] slab
    x = _layernorm(x_ref[...].astype(jnp.float32), eg_ref[...], eb_ref[...])

    # per-head lane masks (hoisted constants): keep q/k/v tiles 128-lane dense
    # and make each head's score matmul contract only its own HEAD_DIM lanes.
    lane = lax.broadcasted_iota(jnp.int32, (BS, H), 1)
    head_mask = [(lane >= h * HEAD_DIM) & (lane < (h + 1) * HEAD_DIM)
                 for h in range(NUM_HEADS)]

    for l in range(NUM_LAYERS):                       # static unroll, 2 layers
        # fused QKV projection: one [BS,H] x [H,3H] MXU pass, then 128-aligned
        # lane slices.  1/sqrt(HEAD_DIM) is folded into the Q weight columns.
        qkv = jnp.dot(x.astype(jnp.bfloat16), wqkv_ref[l],
                      preferred_element_type=jnp.float32) + bqkv_ref[l]
        q = qkv[:, 0 * H:1 * H]
        k = qkv[:, 1 * H:2 * H]
        v = qkv[:, 2 * H:3 * H]

        k_heads = [jnp.where(head_mask[h], k, 0.0) for h in range(NUM_HEADS)]
        v_heads = [jnp.where(head_mask[h], v, 0.0) for h in range(NUM_HEADS)]

        # scores for every (batch, head) stacked along sublanes -> ONE softmax
        blocks = []
        for b in range(B):
            rows = slice(b * S, (b + 1) * S)
            for h in range(NUM_HEADS):
                blocks.append(lax.dot_general(
                    q[rows], k_heads[h][rows], (((1,), (1,)), ((), ())),
                    preferred_element_type=jnp.float32))
        scores = jnp.concatenate(blocks, axis=0)            # [B*NH*S, S]
        scores = scores - jnp.max(scores, axis=-1, keepdims=True)
        p = jnp.exp(scores)
        p = p * pl.reciprocal(jnp.sum(p, axis=-1, keepdims=True), approx=True)
        # TODO(synk): no attention_mask handling — padded tokens would be attended to.

        # context assembled lane-dense in vregs (no VMEM scratch round-trip):
        # masked V drops head h's context straight into lanes [h*HD,(h+1)*HD).
        ctx_blocks = []
        for b in range(B):
            rows = slice(b * S, (b + 1) * S)
            acc = None
            for h in range(NUM_HEADS):
                i = b * NUM_HEADS + h
                c = jnp.dot(p[i * S:(i + 1) * S], v_heads[h][rows],
                            preferred_element_type=jnp.float32)
                acc = c if acc is None else acc + c
            ctx_blocks.append(acc)
        ctx = jnp.concatenate(ctx_blocks, axis=0)            # [BS, H]

        attn = jnp.dot(ctx.astype(jnp.bfloat16), wo_ref[l],
                       preferred_element_type=jnp.float32) + bo_ref[l]
        x = _layernorm(x + attn, ln1g_ref[l], ln1b_ref[l])

        hmid = _gelu(jnp.dot(x.astype(jnp.bfloat16), w1_ref[l],
                             preferred_element_type=jnp.float32) + b1_ref[l])
        ffn = jnp.dot(hmid.astype(jnp.bfloat16), w2_ref[l],
                      preferred_element_type=jnp.float32) + b2_ref[l]
        x = _layernorm(x + ffn, ln2g_ref[l], ln2b_ref[l])

    # BertPooler: first ([CLS]) token of every sequence -> dense + tanh
    # (rows 0 and S are sublane-tile aligned slices; negligible tail cost)
    x0 = jnp.concatenate([x[b * S:b * S + 1, :] for b in range(B)], axis=0)  # [B,H]
    pooled = jnp.tanh(jnp.dot(x0.astype(jnp.bfloat16), wp_ref[...],
                              preferred_element_type=jnp.float32) + bp_ref[...])
    # TODO(synk): nn.Dropout is identity in eval mode; no train-mode masking here.
    logits = jnp.dot(pooled.astype(jnp.bfloat16), wd_ref[...],
                     preferred_element_type=jnp.float32) + bd_ref[...]
    pooled_ref[...] = pooled.astype(pooled_ref.dtype)
    logits_ref[...] = logits.astype(logits_ref.dtype)


# ------------------------------ wrapper ---------------------------------------
def _full_spec(a):
    nd = a.ndim
    return pl.BlockSpec(a.shape, lambda i, _nd=nd: (0,) * _nd)


def bert_forward_fused(emb_flat, p):
    args = (emb_flat, p["emb_ln_g"], p["emb_ln_b"],
            p["wqkv"], p["bqkv"], p["wo"], p["bo"], p["ln1g"], p["ln1b"],
            p["w1"], p["b1"], p["w2"], p["b2"], p["ln2g"], p["ln2b"],
            p["wp"], p["bp"], p["wd_pad"], p["bd_pad"])
    in_specs = [_full_spec(a) for a in args]
    out_shape = (jax.ShapeDtypeStruct((B, H), jnp.float32),
                 jax.ShapeDtypeStruct((B, PAD_OUT), jnp.float32))
    out_specs = (pl.BlockSpec((B, H), lambda i: (0, 0)),
                 pl.BlockSpec((B, PAD_OUT), lambda i: (0, 0)))
    # rough advisory cost (matmul flops dominate; transcendentals = exp/tanh)
    cost = pl.CostEstimate(flops=8_781_824, transcendentals=9_104,
                           bytes_accessed=700_000)
    pooled, logits_pad = pl.pallas_call(
        bert_fused_kernel,
        grid=(1,),
        in_specs=in_specs,
        out_specs=out_specs,
        out_shape=out_shape,
        cost_estimate=cost,
        compiler_params=pltpu.CompilerParams(
            dimension_semantics=("arbitrary",)),
    )(*args)
    return pooled, logits_pad[:, :OUT_DIM]


# ------------------------------ parameters ------------------------------------
def init_params(key):
    ks = iter(jax.random.split(key, 128))
    n = lambda shape: (0.02 * jax.random.normal(next(ks), shape)).astype(jnp.float32)
    zeros = lambda shape: jnp.zeros(shape, jnp.float32)
    ones = lambda shape: jnp.ones(shape, jnp.float32)
    bf16 = lambda a: a.astype(jnp.bfloat16)

    inv_sqrt_d = 1.0 / math.sqrt(HEAD_DIM)

    def make_wqkv():
        # fold 1/sqrt(HEAD_DIM) into the Q projection columns (free preprocessing)
        wq = n((H, H)) * inv_sqrt_d
        return jnp.concatenate([wq, n((H, H)), n((H, H))], axis=1)

    # stacked per-layer weights; matmul weights stored bf16, biases/LN params f32
    wqkv = jnp.stack([make_wqkv() for _ in range(NUM_LAYERS)])        # [L, H, 3H]
    wo = jnp.stack([n((H, H)) for _ in range(NUM_LAYERS)])            # [L, H, H]
    w1 = jnp.stack([n((H, INTER)) for _ in range(NUM_LAYERS)])        # [L, H, INTER]
    w2 = jnp.stack([n((INTER, H)) for _ in range(NUM_LAYERS)])        # [L, INTER, H]

    # NOTE: the Q slice of bqkv must carry the same 1/sqrt(HEAD_DIM) factor;
    # biases are zero here so it is a no-op.
    bqkv = zeros((NUM_LAYERS, 1, 3 * H))

    wd = n((H, OUT_DIM))
    wd_pad = jnp.zeros((H, PAD_OUT), jnp.float32).at[:, :OUT_DIM].set(wd)
    bd_pad = zeros((1, PAD_OUT))

    params = {
        "word_emb": n((VOCAB, H)),
        "pos_emb": n((S, H)),
        "type_emb": n((2, H)),
        "emb_ln_g": ones((1, H)),
        "emb_ln_b": zeros((1, H)),
        "wqkv": bf16(wqkv), "bqkv": bqkv,
        "wo": bf16(wo), "bo": zeros((NUM_LAYERS, 1, H)),
        "ln1g": ones((NUM_LAYERS, 1, H)), "ln1b": zeros((NUM_LAYERS, 1, H)),
        "w1": bf16(w1), "b1": zeros((NUM_LAYERS, 1, INTER)),
        "w2": bf16(w2), "b2": zeros((NUM_LAYERS, 1, H)),
        "ln2g": ones((NUM_LAYERS, 1, H)), "ln2b": zeros((NUM_LAYERS, 1, H)),
        "wp": bf16(n((H, H))), "bp": zeros((1, H)),        # BertPooler dense
        "wd_pad": bf16(wd_pad), "bd_pad": bd_pad,          # classifier (lane-padded)
    }
    return params


# ------------------------------ forward ---------------------------------------
def forward(text_indices, params):
    # embeddings (gather is plain-JAX glue); token_type_ids are all zeros
    emb = (params["word_emb"][text_indices]
           + params["pos_emb"][None, :, :]
           + params["type_emb"][0][None, None, :])          # [B, S, H]
    emb_flat = emb.reshape(BS, H)                            # fold batch into M
    pooled, logits = bert_forward_fused(emb_flat, params)
    return {"logits": logits, "hidden_state": pooled}


# --------------------------------- main ---------------------------------------
if __name__ == "__main__":
    key = jax.random.PRNGKey(0)
    params = init_params(key)
    text_indices = jax.random.randint(jax.random.fold_in(key, 123),
                                      (B, S), 0, VOCAB, dtype=jnp.int32)
    out = forward(text_indices, params)
    jax.block_until_ready(out)
    assert out["logits"].shape == (B, OUT_DIM)
    assert out["hidden_state"].shape == (B, H)
    assert jnp.all(jnp.isfinite(out["logits"]))
    assert jnp.all(jnp.isfinite(out["hidden_state"]))
    print("KERNEL_OK")
</pallas_src>

<mosaic_0001>
module attributes {stable_mosaic.version = 11 : i64} {
  func.func @bert_fused_kernel(%arg0: i32, %arg1: memref<16x128xf32, #tpu.memory_space<vmem>>, %arg2: memref<1x128xf32, #tpu.memory_space<vmem>>, %arg3: memref<1x128xf32, #tpu.memory_space<vmem>>, %arg4: memref<2x128x384xbf16, #tpu.memory_space<vmem>>, %arg5: memref<2x1x384xf32, #tpu.memory_space<vmem>>, %arg6: memref<2x128x128xbf16, #tpu.memory_space<vmem>>, %arg7: memref<2x1x128xf32, #tpu.memory_space<vmem>>, %arg8: memref<2x1x128xf32, #tpu.memory_space<vmem>>, %arg9: memref<2x1x128xf32, #tpu.memory_space<vmem>>, %arg10: memref<2x128x256xbf16, #tpu.memory_space<vmem>>, %arg11: memref<2x1x256xf32, #tpu.memory_space<vmem>>, %arg12: memref<2x256x128xbf16, #tpu.memory_space<vmem>>, %arg13: memref<2x1x128xf32, #tpu.memory_space<vmem>>, %arg14: memref<2x1x128xf32, #tpu.memory_space<vmem>>, %arg15: memref<2x1x128xf32, #tpu.memory_space<vmem>>, %arg16: memref<128x128xbf16, #tpu.memory_space<vmem>>, %arg17: memref<1x128xf32, #tpu.memory_space<vmem>>, %arg18: memref<128x128xbf16, #tpu.memory_space<vmem>>, %arg19: memref<1x128xf32, #tpu.memory_space<vmem>>, %arg20: memref<2x128xf32, #tpu.memory_space<vmem>>, %arg21: memref<2x128xf32, #tpu.memory_space<vmem>>) attributes {dimension_semantics = [#tpu.dimension_semantics<arbitrary>], iteration_bounds = array<i64: 1>, scalar_prefetch = 0 : i64, scratch_operands = 0 : i64, tpu.core_type = #tpu.core_type<tc>, window_params = [{pipeline_mode = #tpu.pipeline_mode<synchronous>, transform_indices = @transform_0, window_bounds = array<i64: 16, 128>}, {pipeline_mode = #tpu.pipeline_mode<synchronous>, transform_indices = @transform_1, window_bounds = array<i64: 1, 128>}, {pipeline_mode = #tpu.pipeline_mode<synchronous>, transform_indices = @transform_2, window_bounds = array<i64: 1, 128>}, {pipeline_mode = #tpu.pipeline_mode<synchronous>, transform_indices = @transform_3, window_bounds = array<i64: 2, 128, 384>}, {pipeline_mode = #tpu.pipeline_mode<synchronous>, transform_indices = @transform_4, window_bounds = array<i64: 2, 1, 384>}, {pipeline_mode = #tpu.pipeline_mode<synchronous>, transform_indices = @transform_5, window_bounds = array<i64: 2, 128, 128>}, {pipeline_mode = #tpu.pipeline_mode<synchronous>, transform_indices = @transform_6, window_bounds = array<i64: 2, 1, 128>}, {pipeline_mode = #tpu.pipeline_mode<synchronous>, transform_indices = @transform_7, window_bounds = array<i64: 2, 1, 128>}, {pipeline_mode = #tpu.pipeline_mode<synchronous>, transform_indices = @transform_8, window_bounds = array<i64: 2, 1, 128>}, {pipeline_mode = #tpu.pipeline_mode<synchronous>, transform_indices = @transform_9, window_bounds = array<i64: 2, 128, 256>}, {pipeline_mode = #tpu.pipeline_mode<synchronous>, transform_indices = @transform_10, window_bounds = array<i64: 2, 1, 256>}, {pipeline_mode = #tpu.pipeline_mode<synchronous>, transform_indices = @transform_11, window_bounds = array<i64: 2, 256, 128>}, {pipeline_mode = #tpu.pipeline_mode<synchronous>, transform_indices = @transform_12, window_bounds = array<i64: 2, 1, 128>}, {pipeline_mode = #tpu.pipeline_mode<synchronous>, transform_indices = @transform_13, window_bounds = array<i64: 2, 1, 128>}, {pipeline_mode = #tpu.pipeline_mode<synchronous>, transform_indices = @transform_14, window_bounds = array<i64: 2, 1, 128>}, {pipeline_mode = #tpu.pipeline_mode<synchronous>, transform_indices = @transform_15, window_bounds = array<i64: 128, 128>}, {pipeline_mode = #tpu.pipeline_mode<synchronous>, transform_indices = @transform_16, window_bounds = array<i64: 1, 128>}, {pipeline_mode = #tpu.pipeline_mode<synchronous>, transform_indices = @transform_17, window_bounds = array<i64: 128, 128>}, {pipeline_mode = #tpu.pipeline_mode<synchronous>, transform_indices = @transform_18, window_bounds = array<i64: 1, 128>}, {pipeline_mode = #tpu.pipeline_mode<synchronous>, transform_indices = @transform_19, window_bounds = array<i64: 2, 128>}, {pipeline_mode = #tpu.pipeline_mode<synchronous>, transform_indices = @transform_20, window_bounds = array<i64: 2, 128>}]} {
    %c0 = arith.constant 0 : index
    %c0_0 = arith.constant 0 : index
    %0 = vector.load %arg1[%c0, %c0_0] : memref<16x128xf32, #tpu.memory_space<vmem>>, vector<16x128xf32>
    %c0_1 = arith.constant 0 : index
    %c0_2 = arith.constant 0 : index
    %1 = vector.load %arg2[%c0_1, %c0_2] : memref<1x128xf32, #tpu.memory_space<vmem>>, vector<1x128xf32>
    %c0_3 = arith.constant 0 : index
    %c0_4 = arith.constant 0 : index
    %2 = vector.load %arg3[%c0_3, %c0_4] : memref<1x128xf32, #tpu.memory_space<vmem>>, vector<1x128xf32>
    %cst = arith.constant dense<0.000000e+00> : vector<16xf32>
    %3 = vector.multi_reduction <add>, %0, %cst [1] : vector<16x128xf32> to vector<16xf32>
    %4 = vector.shape_cast %3 : vector<16xf32> to vector<16x1xf32>
    %cst_5 = arith.constant 1.280000e+02 : f32
    %5 = vector.broadcast %cst_5 : f32 to vector<16x1xf32>
    %6 = arith.divf %4, %5 : vector<16x1xf32>
    %7 = vector.broadcast %6 : vector<16x1xf32> to vector<16x128xf32>
    %8 = arith.subf %0, %7 : vector<16x128xf32>
    %9 = arith.mulf %8, %8 : vector<16x128xf32>
    %cst_6 = arith.constant dense<0.000000e+00> : vector<16xf32>
    %10 = vector.multi_reduction <add>, %9, %cst_6 [1] : vector<16x128xf32> to vector<16xf32>
    %11 = vector.shape_cast %10 : vector<16xf32> to vector<16x1xf32>
    %cst_7 = arith.constant 1.280000e+02 : f32
    %12 = vector.broadcast %cst_7 : f32 to vector<16x1xf32>
    %13 = arith.divf %11, %12 : vector<16x1xf32>
    %14 = vector.broadcast %6 : vector<16x1xf32> to vector<16x128xf32>
    %15 = arith.subf %0, %14 : vector<16x128xf32>
    %cst_8 = arith.constant 9.99999996E-13 : f32
    %16 = vector.broadcast %cst_8 : f32 to vector<16x1xf32>
    %17 = arith.addf %13, %16 : vector<16x1xf32>
    %18 = math.rsqrt %17 : vector<16x1xf32>
    %19 = vector.broadcast %18 : vector<16x1xf32> to vector<16x128xf32>
    %20 = arith.mulf %15, %19 : vector<16x128xf32>
    %21 = vector.broadcast %1 : vector<1x128xf32> to vector<16x128xf32>
    %22 = arith.mulf %20, %21 : vector<16x128xf32>
    %23 = vector.broadcast %2 : vector<1x128xf32> to vector<16x128xf32>
    %24 = arith.addf %22, %23 : vector<16x128xf32>
    %25 = tpu.iota {dimensions = array<i32: 1>} : vector<16x128xi32>
    %c0_i32 = arith.constant 0 : i32
    %26 = vector.broadcast %c0_i32 : i32 to vector<16x128xi32>
    %27 = arith.cmpi sge, %25, %26 : vector<16x128xi32>
    %c64_i32 = arith.constant 64 : i32
    %28 = vector.broadcast %c64_i32 : i32 to vector<16x128xi32>
    %29 = arith.cmpi slt, %25, %28 : vector<16x128xi32>
    %30 = arith.andi %27, %29 : vector<16x128xi1>
    %c64_i32_9 = arith.constant 64 : i32
    %31 = vector.broadcast %c64_i32_9 : i32 to vector<16x128xi32>
    %32 = arith.cmpi sge, %25, %31 : vector<16x128xi32>
    %c128_i32 = arith.constant 128 : i32
    %33 = vector.broadcast %c128_i32 : i32 to vector<16x128xi32>
    %34 = arith.cmpi slt, %25, %33 : vector<16x128xi32>
    %35 = arith.andi %32, %34 : vector<16x128xi1>
    %36 = arith.truncf %24 : vector<16x128xf32> to vector<16x128xbf16>
    %c0_10 = arith.constant 0 : index
    %c0_11 = arith.constant 0 : index
    %c0_12 = arith.constant 0 : index
    %37 = vector.load %arg4[%c0_10, %c0_11, %c0_12] : memref<2x128x384xbf16, #tpu.memory_space<vmem>>, vector<1x128x384xbf16>
    %38 = vector.shape_cast %37 : vector<1x128x384xbf16> to vector<128x384xbf16>
    %cst_13 = arith.constant dense<0.000000e+00> : vector<16x384xf32>
    %39 = tpu.matmul %36, %38, %cst_13 {dimension_numbers = #tpu.dot_dimension_numbers<[1], [0], [0], [1], [0, 0, 1, 1], [], []>} : vector<16x128xbf16>, vector<128x384xbf16>, vector<16x384xf32> -> vector<16x384xf32>
    %c0_14 = arith.constant 0 : index
    %c0_15 = arith.constant 0 : index
    %c0_16 = arith.constant 0 : index
    %40 = vector.load %arg5[%c0_14, %c0_15, %c0_16] : memref<2x1x384xf32, #tpu.memory_space<vmem>>, vector<1x1x384xf32>
    %41 = vector.shape_cast %40 : vector<1x1x384xf32> to vector<1x384xf32>
    %42 = vector.broadcast %41 : vector<1x384xf32> to vector<16x384xf32>
    %43 = arith.addf %39, %42 : vector<16x384xf32>
    %44 = vector.extract_strided_slice %43 {offsets = [0, 0], sizes = [16, 128], strides = [1, 1]} : vector<16x384xf32> to vector<16x128xf32>
    %45 = vector.extract_strided_slice %43 {offsets = [0, 128], sizes = [16, 128], strides = [1, 1]} : vector<16x384xf32> to vector<16x128xf32>
    %46 = vector.extract_strided_slice %43 {offsets = [0, 256], sizes = [16, 128], strides = [1, 1]} : vector<16x384xf32> to vector<16x128xf32>
    %cst_17 = arith.constant 0.000000e+00 : f32
    %47 = vector.broadcast %cst_17 : f32 to vector<16x128xf32>
    %48 = arith.select %30, %45, %47 : vector<16x128xi1>, vector<16x128xf32>
    %cst_18 = arith.constant 0.000000e+00 : f32
    %49 = vector.broadcast %cst_18 : f32 to vector<16x128xf32>
    %50 = arith.select %35, %45, %49 : vector<16x128xi1>, vector<16x128xf32>
    %cst_19 = arith.constant 0.000000e+00 : f32
    %51 = vector.broadcast %cst_19 : f32 to vector<16x128xf32>
    %52 = arith.select %30, %46, %51 : vector<16x128xi1>, vector<16x128xf32>
    %cst_20 = arith.constant 0.000000e+00 : f32
    %53 = vector.broadcast %cst_20 : f32 to vector<16x128xf32>
    %54 = arith.select %35, %46, %53 : vector<16x128xi1>, vector<16x128xf32>
    %55 = vector.extract_strided_slice %44 {offsets = [0, 0], sizes = [8, 128], strides = [1, 1]} : vector<16x128xf32> to vector<8x128xf32>
    %56 = vector.extract_strided_slice %48 {offsets = [0, 0], sizes = [8, 128], strides = [1, 1]} : vector<16x128xf32> to vector<8x128xf32>
    %cst_21 = arith.constant dense<0.000000e+00> : vector<8x8xf32>
    %57 = tpu.matmul %55, %56, %cst_21 {dimension_numbers = #tpu.dot_dimension_numbers<[1], [1], [0], [0], [0, 0, 1, 0], [], []>} : vector<8x128xf32>, vector<8x128xf32>, vector<8x8xf32> -> vector<8x8xf32>
    %58 = vector.extract_strided_slice %44 {offsets = [0, 0], sizes = [8, 128], strides = [1, 1]} : vector<16x128xf32> to vector<8x128xf32>
    %59 = vector.extract_strided_slice %50 {offsets = [0, 0], sizes = [8, 128], strides = [1, 1]} : vector<16x128xf32> to vector<8x128xf32>
    %cst_22 = arith.constant dense<0.000000e+00> : vector<8x8xf32>
    %60 = tpu.matmul %58, %59, %cst_22 {dimension_numbers = #tpu.dot_dimension_numbers<[1], [1], [0], [0], [0, 0, 1, 0], [], []>} : vector<8x128xf32>, vector<8x128xf32>, vector<8x8xf32> -> vector<8x8xf32>
    %61 = vector.extract_strided_slice %44 {offsets = [8, 0], sizes = [8, 128], strides = [1, 1]} : vector<16x128xf32> to vector<8x128xf32>
    %62 = vector.extract_strided_slice %48 {offsets = [8, 0], sizes = [8, 128], strides = [1, 1]} : vector<16x128xf32> to vector<8x128xf32>
    %cst_23 = arith.constant dense<0.000000e+00> : vector<8x8xf32>
    %63 = tpu.matmul %61, %62, %cst_23 {dimension_numbers = #tpu.dot_dimension_numbers<[1], [1], [0], [0], [0, 0, 1, 0], [], []>} : vector<8x128xf32>, vector<8x128xf32>, vector<8x8xf32> -> vector<8x8xf32>
    %64 = vector.extract_strided_slice %44 {offsets = [8, 0], sizes = [8, 128], strides = [1, 1]} : vector<16x128xf32> to vector<8x128xf32>
    %65 = vector.extract_strided_slice %50 {offsets = [8, 0], sizes = [8, 128], strides = [1, 1]} : vector<16x128xf32> to vector<8x128xf32>
    %cst_24 = arith.constant dense<0.000000e+00> : vector<8x8xf32>
    %66 = tpu.matmul %64, %65, %cst_24 {dimension_numbers = #tpu.dot_dimension_numbers<[1], [1], [0], [0], [0, 0, 1, 0], [], []>} : vector<8x128xf32>, vector<8x128xf32>, vector<8x8xf32> -> vector<8x8xf32>
    %67 = tpu.concatenate %57, %60, %63, %66 in 0 : vector<8x8xf32>, vector<8x8xf32>, vector<8x8xf32>, vector<8x8xf32> -> vector<32x8xf32>
    %cst_25 = arith.constant dense<0xFF800000> : vector<32xf32>
    %68 = vector.multi_reduction <maximumf>, %67, %cst_25 [1] : vector<32x8xf32> to vector<32xf32>
    %69 = vector.shape_cast %68 : vector<32xf32> to vector<32x1xf32>
    %70 = vector.broadcast %69 : vector<32x1xf32> to vector<32x8xf32>
    %71 = arith.subf %67, %70 : vector<32x8xf32>
    %72 = math.exp %71 : vector<32x8xf32>
    %cst_26 = arith.constant dense<0.000000e+00> : vector<32xf32>
    %73 = vector.multi_reduction <add>, %72, %cst_26 [1] : vector<32x8xf32> to vector<32xf32>
    %74 = vector.shape_cast %73 : vector<32xf32> to vector<32x1xf32>
    %75 = tpu.reciprocal %74 {approx = true} : vector<32x1xf32> -> vector<32x1xf32>
    %76 = vector.broadcast %75 : vector<32x1xf32> to vector<32x8xf32>
    %77 = arith.mulf %72, %76 : vector<32x8xf32>
    %78 = vector.extract_strided_slice %77 {offsets = [0, 0], sizes = [8, 8], strides = [1, 1]} : vector<32x8xf32> to vector<8x8xf32>
    %79 = vector.extract_strided_slice %52 {offsets = [0, 0], sizes = [8, 128], strides = [1, 1]} : vector<16x128xf32> to vector<8x128xf32>
    %cst_27 = arith.constant dense<0.000000e+00> : vector<8x128xf32>
    %80 = tpu.matmul %78, %79, %cst_27 {dimension_numbers = #tpu.dot_dimension_numbers<[1], [0], [0], [1], [0, 0, 1, 1], [], []>} : vector<8x8xf32>, vector<8x128xf32>, vector<8x128xf32> -> vector<8x128xf32>
    %81 = vector.extract_strided_slice %77 {offsets = [8, 0], sizes = [8, 8], strides = [1, 1]} : vector<32x8xf32> to vector<8x8xf32>
    %82 = vector.extract_strided_slice %54 {offsets = [0, 0], sizes = [8, 128], strides = [1, 1]} : vector<16x128xf32> to vector<8x128xf32>
    %cst_28 = arith.constant dense<0.000000e+00> : vector<8x128xf32>
    %83 = tpu.matmul %81, %82, %cst_28 {dimension_numbers = #tpu.dot_dimension_numbers<[1], [0], [0], [1], [0, 0, 1, 1], [], []>} : vector<8x8xf32>, vector<8x128xf32>, vector<8x128xf32> -> vector<8x128xf32>
    %84 = arith.addf %80, %83 : vector<8x128xf32>
    %85 = vector.extract_strided_slice %77 {offsets = [16, 0], sizes = [8, 8], strides = [1, 1]} : vector<32x8xf32> to vector<8x8xf32>
    %86 = vector.extract_strided_slice %52 {offsets = [8, 0], sizes = [8, 128], strides = [1, 1]} : vector<16x128xf32> to vector<8x128xf32>
    %cst_29 = arith.constant dense<0.000000e+00> : vector<8x128xf32>
    %87 = tpu.matmul %85, %86, %cst_29 {dimension_numbers = #tpu.dot_dimension_numbers<[1], [0], [0], [1], [0, 0, 1, 1], [], []>} : vector<8x8xf32>, vector<8x128xf32>, vector<8x128xf32> -> vector<8x128xf32>
    %88 = vector.extract_strided_slice %77 {offsets = [24, 0], sizes = [8, 8], strides = [1, 1]} : vector<32x8xf32> to vector<8x8xf32>
    %89 = vector.extract_strided_slice %54 {offsets = [8, 0], sizes = [8, 128], strides = [1, 1]} : vector<16x128xf32> to vector<8x128xf32>
    %cst_30 = arith.constant dense<0.000000e+00> : vector<8x128xf32>
    %90 = tpu.matmul %88, %89, %cst_30 {dimension_numbers = #tpu.dot_dimension_numbers<[1], [0], [0], [1], [0, 0, 1, 1], [], []>} : vector<8x8xf32>, vector<8x128xf32>, vector<8x128xf32> -> vector<8x128xf32>
    %91 = arith.addf %87, %90 : vector<8x128xf32>
    %92 = tpu.concatenate %84, %91 in 0 : vector<8x128xf32>, vector<8x128xf32> -> vector<16x128xf32>
    %93 = arith.truncf %92 : vector<16x128xf32> to vector<16x128xbf16>
    %c0_31 = arith.constant 0 : index
    %c0_32 = arith.constant 0 : index
    %c0_33 = arith.constant 0 : index
    %94 = vector.load %arg6[%c0_31, %c0_32, %c0_33] : memref<2x128x128xbf16, #tpu.memory_space<vmem>>, vector<1x128x128xbf16>
    %95 = vector.shape_cast %94 : vector<1x128x128xbf16> to vector<128x128xbf16>
    %cst_34 = arith.constant dense<0.000000e+00> : vector<16x128xf32>
    %96 = tpu.matmul %93, %95, %cst_34 {dimension_numbers = #tpu.dot_dimension_numbers<[1], [0], [0], [1], [0, 0, 1, 1], [], []>} : vector<16x128xbf16>, vector<128x128xbf16>, vector<16x128xf32> -> vector<16x128xf32>
    %c0_35 = arith.constant 0 : index
    %c0_36 = arith.constant 0 : index
    %c0_37 = arith.constant 0 : index
    %97 = vector.load %arg7[%c0_35, %c0_36, %c0_37] : memref<2x1x128xf32, #tpu.memory_space<vmem>>, vector<1x1x128xf32>
    %98 = vector.shape_cast %97 : vector<1x1x128xf32> to vector<1x128xf32>
    %99 = vector.broadcast %98 : vector<1x128xf32> to vector<16x128xf32>
    %100 = arith.addf %96, %99 : vector<16x128xf32>
    %101 = arith.addf %24, %100 : vector<16x128xf32>
    %c0_38 = arith.constant 0 : index
    %c0_39 = arith.constant 0 : index
    %c0_40 = arith.constant 0 : index
    %102 = vector.load %arg8[%c0_38, %c0_39, %c0_40] : memref<2x1x128xf32, #tpu.memory_space<vmem>>, vector<1x1x128xf32>
    %103 = vector.shape_cast %102 : vector<1x1x128xf32> to vector<1x128xf32>
    %c0_41 = arith.constant 0 : index
    %c0_42 = arith.constant 0 : index
    %c0_43 = arith.constant 0 : index
    %104 = vector.load %arg9[%c0_41, %c0_42, %c0_43] : memref<2x1x128xf32, #tpu.memory_space<vmem>>, vector<1x1x128xf32>
    %105 = vector.shape_cast %104 : vector<1x1x128xf32> to vector<1x128xf32>
    %cst_44 = arith.constant dense<0.000000e+00> : vector<16xf32>
    %106 = vector.multi_reduction <add>, %101, %cst_44 [1] : vector<16x128xf32> to vector<16xf32>
    %107 = vector.shape_cast %106 : vector<16xf32> to vector<16x1xf32>
    %cst_45 = arith.constant 1.280000e+02 : f32
    %108 = vector.broadcast %cst_45 : f32 to vector<16x1xf32>
    %109 = arith.divf %107, %108 : vector<16x1xf32>
    %110 = vector.broadcast %109 : vector<16x1xf32> to vector<16x128xf32>
    %111 = arith.subf %101, %110 : vector<16x128xf32>
    %112 = arith.mulf %111, %111 : vector<16x128xf32>
    %cst_46 = arith.constant dense<0.000000e+00> : vector<16xf32>
    %113 = vector.multi_reduction <add>, %112, %cst_46 [1] : vector<16x128xf32> to vector<16xf32>
    %114 = vector.shape_cast %113 : vector<16xf32> to vector<16x1xf32>
    %cst_47 = arith.constant 1.280000e+02 : f32
    %115 = vector.broadcast %cst_47 : f32 to vector<16x1xf32>
    %116 = arith.divf %114, %115 : vector<16x1xf32>
    %117 = vector.broadcast %109 : vector<16x1xf32> to vector<16x128xf32>
    %118 = arith.subf %101, %117 : vector<16x128xf32>
    %cst_48 = arith.constant 9.99999996E-13 : f32
    %119 = vector.broadcast %cst_48 : f32 to vector<16x1xf32>
    %120 = arith.addf %116, %119 : vector<16x1xf32>
    %121 = math.rsqrt %120 : vector<16x1xf32>
    %122 = vector.broadcast %121 : vector<16x1xf32> to vector<16x128xf32>
    %123 = arith.mulf %118, %122 : vector<16x128xf32>
    %124 = vector.broadcast %103 : vector<1x128xf32> to vector<16x128xf32>
    %125 = arith.mulf %123, %124 : vector<16x128xf32>
    %126 = vector.broadcast %105 : vector<1x128xf32> to vector<16x128xf32>
    %127 = arith.addf %125, %126 : vector<16x128xf32>
    %128 = arith.truncf %127 : vector<16x128xf32> to vector<16x128xbf16>
    %c0_49 = arith.constant 0 : index
    %c0_50 = arith.constant 0 : index
    %c0_51 = arith.constant 0 : index
    %129 = vector.load %arg10[%c0_49, %c0_50, %c0_51] : memref<2x128x256xbf16, #tpu.memory_space<vmem>>, vector<1x128x256xbf16>
    %130 = vector.shape_cast %129 : vector<1x128x256xbf16> to vector<128x256xbf16>
    %cst_52 = arith.constant dense<0.000000e+00> : vector<16x256xf32>
    %131 = tpu.matmul %128, %130, %cst_52 {dimension_numbers = #tpu.dot_dimension_numbers<[1], [0], [0], [1], [0, 0, 1, 1], [], []>} : vector<16x128xbf16>, vector<128x256xbf16>, vector<16x256xf32> -> vector<16x256xf32>
    %c0_53 = arith.constant 0 : index
    %c0_54 = arith.constant 0 : index
    %c0_55 = arith.constant 0 : index
    %132 = vector.load %arg11[%c0_53, %c0_54, %c0_55] : memref<2x1x256xf32, #tpu.memory_space<vmem>>, vector<1x1x256xf32>
    %133 = vector.shape_cast %132 : vector<1x1x256xf32> to vector<1x256xf32>
    %134 = vector.broadcast %133 : vector<1x256xf32> to vector<16x256xf32>
    %135 = arith.addf %131, %134 : vector<16x256xf32>
    %cst_56 = arith.constant 5.000000e-01 : f32
    %136 = vector.broadcast %cst_56 : f32 to vector<16x256xf32>
    %137 = arith.mulf %136, %135 : vector<16x256xf32>
    %cst_57 = arith.constant 4.471500e-02 : f32
    %138 = vector.broadcast %cst_57 : f32 to vector<16x256xf32>
    %139 = arith.mulf %138, %135 : vector<16x256xf32>
    %140 = arith.mulf %139, %135 : vector<16x256xf32>
    %141 = arith.mulf %140, %135 : vector<16x256xf32>
    %142 = arith.addf %135, %141 : vector<16x256xf32>
    %cst_58 = arith.constant 0.797884583 : f32
    %143 = vector.broadcast %cst_58 : f32 to vector<16x256xf32>
    %144 = arith.mulf %143, %142 : vector<16x256xf32>
    %145 = math.tanh %144 : vector<16x256xf32>
    %cst_59 = arith.constant 1.000000e+00 : f32
    %146 = vector.broadcast %cst_59 : f32 to vector<16x256xf32>
    %147 = arith.addf %146, %145 : vector<16x256xf32>
    %148 = arith.mulf %137, %147 : vector<16x256xf32>
    %149 = arith.truncf %148 : vector<16x256xf32> to vector<16x256xbf16>
    %c0_60 = arith.constant 0 : index
    %c0_61 = arith.constant 0 : index
    %c0_62 = arith.constant 0 : index
    %150 = vector.load %arg12[%c0_60, %c0_61, %c0_62] : memref<2x256x128xbf16, #tpu.memory_space<vmem>>, vector<1x256x128xbf16>
    %151 = vector.shape_cast %150 : vector<1x256x128xbf16> to vector<256x128xbf16>
    %cst_63 = arith.constant dense<0.000000e+00> : vector<16x128xf32>
    %152 = tpu.matmul %149, %151, %cst_63 {dimension_numbers = #tpu.dot_dimension_numbers<[1], [0], [0], [1], [0, 0, 1, 1], [], []>} : vector<16x256xbf16>, vector<256x128xbf16>, vector<16x128xf32> -> vector<16x128xf32>
    %c0_64 = arith.constant 0 : index
    %c0_65 = arith.constant 0 : index
    %c0_66 = arith.constant 0 : index
    %153 = vector.load %arg13[%c0_64, %c0_65, %c0_66] : memref<2x1x128xf32, #tpu.memory_space<vmem>>, vector<1x1x128xf32>
    %154 = vector.shape_cast %153 : vector<1x1x128xf32> to vector<1x128xf32>
    %155 = vector.broadcast %154 : vector<1x128xf32> to vector<16x128xf32>
    %156 = arith.addf %152, %155 : vector<16x128xf32>
    %157 = arith.addf %127, %156 : vector<16x128xf32>
    %c0_67 = arith.constant 0 : index
    %c0_68 = arith.constant 0 : index
    %c0_69 = arith.constant 0 : index
    %158 = vector.load %arg14[%c0_67, %c0_68, %c0_69] : memref<2x1x128xf32, #tpu.memory_space<vmem>>, vector<1x1x128xf32>
    %159 = vector.shape_cast %158 : vector<1x1x128xf32> to vector<1x128xf32>
    %c0_70 = arith.constant 0 : index
    %c0_71 = arith.constant 0 : index
    %c0_72 = arith.constant 0 : index
    %160 = vector.load %arg15[%c0_70, %c0_71, %c0_72] : memref<2x1x128xf32, #tpu.memory_space<vmem>>, vector<1x1x128xf32>
    %161 = vector.shape_cast %160 : vector<1x1x128xf32> to vector<1x128xf32>
    %cst_73 = arith.constant dense<0.000000e+00> : vector<16xf32>
    %162 = vector.multi_reduction <add>, %157, %cst_73 [1] : vector<16x128xf32> to vector<16xf32>
    %163 = vector.shape_cast %162 : vector<16xf32> to vector<16x1xf32>
    %cst_74 = arith.constant 1.280000e+02 : f32
    %164 = vector.broadcast %cst_74 : f32 to vector<16x1xf32>
    %165 = arith.divf %163, %164 : vector<16x1xf32>
    %166 = vector.broadcast %165 : vector<16x1xf32> to vector<16x128xf32>
    %167 = arith.subf %157, %166 : vector<16x128xf32>
    %168 = arith.mulf %167, %167 : vector<16x128xf32>
    %cst_75 = arith.constant dense<0.000000e+00> : vector<16xf32>
    %169 = vector.multi_reduction <add>, %168, %cst_75 [1] : vector<16x128xf32> to vector<16xf32>
    %170 = vector.shape_cast %169 : vector<16xf32> to vector<16x1xf32>
    %cst_76 = arith.constant 1.280000e+02 : f32
    %171 = vector.broadcast %cst_76 : f32 to vector<16x1xf32>
    %172 = arith.divf %170, %171 : vector<16x1xf32>
    %173 = vector.broadcast %165 : vector<16x1xf32> to vector<16x128xf32>
    %174 = arith.subf %157, %173 : vector<16x128xf32>
    %cst_77 = arith.constant 9.99999996E-13 : f32
    %175 = vector.broadcast %cst_77 : f32 to vector<16x1xf32>
    %176 = arith.addf %172, %175 : vector<16x1xf32>
    %177 = math.rsqrt %176 : vector<16x1xf32>
    %178 = vector.broadcast %177 : vector<16x1xf32> to vector<16x128xf32>
    %179 = arith.mulf %174, %178 : vector<16x128xf32>
    %180 = vector.broadcast %159 : vector<1x128xf32> to vector<16x128xf32>
    %181 = arith.mulf %179, %180 : vector<16x128xf32>
    %182 = vector.broadcast %161 : vector<1x128xf32> to vector<16x128xf32>
    %183 = arith.addf %181, %182 : vector<16x128xf32>
    %184 = arith.truncf %183 : vector<16x128xf32> to vector<16x128xbf16>
    %c1 = arith.constant 1 : index
    %c0_78 = arith.constant 0 : index
    %c0_79 = arith.constant 0 : index
    %185 = vector.load %arg4[%c1, %c0_78, %c0_79] : memref<2x128x384xbf16, #tpu.memory_space<vmem>>, vector<1x128x384xbf16>
    %186 = vector.shape_cast %185 : vector<1x128x384xbf16> to vector<128x384xbf16>
    %cst_80 = arith.constant dense<0.000000e+00> : vector<16x384xf32>
    %187 = tpu.matmul %184, %186, %cst_80 {dimension_numbers = #tpu.dot_dimension_numbers<[1], [0], [0], [1], [0, 0, 1, 1], [], []>} : vector<16x128xbf16>, vector<128x384xbf16>, vector<16x384xf32> -> vector<16x384xf32>
    %c1_81 = arith.constant 1 : index
    %c0_82 = arith.constant 0 : index
    %c0_83 = arith.constant 0 : index
    %188 = vector.load %arg5[%c1_81, %c0_82, %c0_83] : memref<2x1x384xf32, #tpu.memory_space<vmem>>, vector<1x1x384xf32>
    %189 = vector.shape_cast %188 : vector<1x1x384xf32> to vector<1x384xf32>
    %190 = vector.broadcast %189 : vector<1x384xf32> to vector<16x384xf32>
    %191 = arith.addf %187, %190 : vector<16x384xf32>
    %192 = vector.extract_strided_slice %191 {offsets = [0, 0], sizes = [16, 128], strides = [1, 1]} : vector<16x384xf32> to vector<16x128xf32>
    %193 = vector.extract_strided_slice %191 {offsets = [0, 128], sizes = [16, 128], strides = [1, 1]} : vector<16x384xf32> to vector<16x128xf32>
    %194 = vector.extract_strided_slice %191 {offsets = [0, 256], sizes = [16, 128], strides = [1, 1]} : vector<16x384xf32> to vector<16x128xf32>
    %cst_84 = arith.constant 0.000000e+00 : f32
    %195 = vector.broadcast %cst_84 : f32 to vector<16x128xf32>
    %196 = arith.select %30, %193, %195 : vector<16x128xi1>, vector<16x128xf32>
    %cst_85 = arith.constant 0.000000e+00 : f32
    %197 = vector.broadcast %cst_85 : f32 to vector<16x128xf32>
    %198 = arith.select %35, %193, %197 : vector<16x128xi1>, vector<16x128xf32>
    %cst_86 = arith.constant 0.000000e+00 : f32
    %199 = vector.broadcast %cst_86 : f32 to vector<16x128xf32>
    %200 = arith.select %30, %194, %199 : vector<16x128xi1>, vector<16x128xf32>
    %cst_87 = arith.constant 0.000000e+00 : f32
    %201 = vector.broadcast %cst_87 : f32 to vector<16x128xf32>
    %202 = arith.select %35, %194, %201 : vector<16x128xi1>, vector<16x128xf32>
    %203 = vector.extract_strided_slice %192 {offsets = [0, 0], sizes = [8, 128], strides = [1, 1]} : vector<16x128xf32> to vector<8x128xf32>
    %204 = vector.extract_strided_slice %196 {offsets = [0, 0], sizes = [8, 128], strides = [1, 1]} : vector<16x128xf32> to vector<8x128xf32>
    %cst_88 = arith.constant dense<0.000000e+00> : vector<8x8xf32>
    %205 = tpu.matmul %203, %204, %cst_88 {dimension_numbers = #tpu.dot_dimension_numbers<[1], [1], [0], [0], [0, 0, 1, 0], [], []>} : vector<8x128xf32>, vector<8x128xf32>, vector<8x8xf32> -> vector<8x8xf32>
    %206 = vector.extract_strided_slice %192 {offsets = [0, 0], sizes = [8, 128], strides = [1, 1]} : vector<16x128xf32> to vector<8x128xf32>
    %207 = vector.extract_strided_slice %198 {offsets = [0, 0], sizes = [8, 128], strides = [1, 1]} : vector<16x128xf32> to vector<8x128xf32>
    %cst_89 = arith.constant dense<0.000000e+00> : vector<8x8xf32>
    %208 = tpu.matmul %206, %207, %cst_89 {dimension_numbers = #tpu.dot_dimension_numbers<[1], [1], [0], [0], [0, 0, 1, 0], [], []>} : vector<8x128xf32>, vector<8x128xf32>, vector<8x8xf32> -> vector<8x8xf32>
    %209 = vector.extract_strided_slice %192 {offsets = [8, 0], sizes = [8, 128], strides = [1, 1]} : vector<16x128xf32> to vector<8x128xf32>
    %210 = vector.extract_strided_slice %196 {offsets = [8, 0], sizes = [8, 128], strides = [1, 1]} : vector<16x128xf32> to vector<8x128xf32>
    %cst_90 = arith.constant dense<0.000000e+00> : vector<8x8xf32>
    %211 = tpu.matmul %209, %210, %cst_90 {dimension_numbers = #tpu.dot_dimension_numbers<[1], [1], [0], [0], [0, 0, 1, 0], [], []>} : vector<8x128xf32>, vector<8x128xf32>, vector<8x8xf32> -> vector<8x8xf32>
    %212 = vector.extract_strided_slice %192 {offsets = [8, 0], sizes = [8, 128], strides = [1, 1]} : vector<16x128xf32> to vector<8x128xf32>
    %213 = vector.extract_strided_slice %198 {offsets = [8, 0], sizes = [8, 128], strides = [1, 1]} : vector<16x128xf32> to vector<8x128xf32>
    %cst_91 = arith.constant dense<0.000000e+00> : vector<8x8xf32>
    %214 = tpu.matmul %212, %213, %cst_91 {dimension_numbers = #tpu.dot_dimension_numbers<[1], [1], [0], [0], [0, 0, 1, 0], [], []>} : vector<8x128xf32>, vector<8x128xf32>, vector<8x8xf32> -> vector<8x8xf32>
    %215 = tpu.concatenate %205, %208, %211, %214 in 0 : vector<8x8xf32>, vector<8x8xf32>, vector<8x8xf32>, vector<8x8xf32> -> vector<32x8xf32>
    %cst_92 = arith.constant dense<0xFF800000> : vector<32xf32>
    %216 = vector.multi_reduction <maximumf>, %215, %cst_92 [1] : vector<32x8xf32> to vector<32xf32>
    %217 = vector.shape_cast %216 : vector<32xf32> to vector<32x1xf32>
    %218 = vector.broadcast %217 : vector<32x1xf32> to vector<32x8xf32>
    %219 = arith.subf %215, %218 : vector<32x8xf32>
    %220 = math.exp %219 : vector<32x8xf32>
    %cst_93 = arith.constant dense<0.000000e+00> : vector<32xf32>
    %221 = vector.multi_reduction <add>, %220, %cst_93 [1] : vector<32x8xf32> to vector<32xf32>
    %222 = vector.shape_cast %221 : vector<32xf32> to vector<32x1xf32>
    %223 = tpu.reciprocal %222 {approx = true} : vector<32x1xf32> -> vector<32x1xf32>
    %224 = vector.broadcast %223 : vector<32x1xf32> to vector<32x8xf32>
    %225 = arith.mulf %220, %224 : vector<32x8xf32>
    %226 = vector.extract_strided_slice %225 {offsets = [0, 0], sizes = [8, 8], strides = [1, 1]} : vector<32x8xf32> to vector<8x8xf32>
    %227 = vector.extract_strided_slice %200 {offsets = [0, 0], sizes = [8, 128], strides = [1, 1]} : vector<16x128xf32> to vector<8x128xf32>
    %cst_94 = arith.constant dense<0.000000e+00> : vector<8x128xf32>
    %228 = tpu.matmul %226, %227, %cst_94 {dimension_numbers = #tpu.dot_dimension_numbers<[1], [0], [0], [1], [0, 0, 1, 1], [], []>} : vector<8x8xf32>, vector<8x128xf32>, vector<8x128xf32> -> vector<8x128xf32>
    %229 = vector.extract_strided_slice %225 {offsets = [8, 0], sizes = [8, 8], strides = [1, 1]} : vector<32x8xf32> to vector<8x8xf32>
    %230 = vector.extract_strided_slice %202 {offsets = [0, 0], sizes = [8, 128], strides = [1, 1]} : vector<16x128xf32> to vector<8x128xf32>
    %cst_95 = arith.constant dense<0.000000e+00> : vector<8x128xf32>
    %231 = tpu.matmul %229, %230, %cst_95 {dimension_numbers = #tpu.dot_dimension_numbers<[1], [0], [0], [1], [0, 0, 1, 1], [], []>} : vector<8x8xf32>, vector<8x128xf32>, vector<8x128xf32> -> vector<8x128xf32>
    %232 = arith.addf %228, %231 : vector<8x128xf32>
    %233 = vector.extract_strided_slice %225 {offsets = [16, 0], sizes = [8, 8], strides = [1, 1]} : vector<32x8xf32> to vector<8x8xf32>
    %234 = vector.extract_strided_slice %200 {offsets = [8, 0], sizes = [8, 128], strides = [1, 1]} : vector<16x128xf32> to vector<8x128xf32>
    %cst_96 = arith.constant dense<0.000000e+00> : vector<8x128xf32>
    %235 = tpu.matmul %233, %234, %cst_96 {dimension_numbers = #tpu.dot_dimension_numbers<[1], [0], [0], [1], [0, 0, 1, 1], [], []>} : vector<8x8xf32>, vector<8x128xf32>, vector<8x128xf32> -> vector<8x128xf32>
    %236 = vector.extract_strided_slice %225 {offsets = [24, 0], sizes = [8, 8], strides = [1, 1]} : vector<32x8xf32> to vector<8x8xf32>
    %237 = vector.extract_strided_slice %202 {offsets = [8, 0], sizes = [8, 128], strides = [1, 1]} : vector<16x128xf32> to vector<8x128xf32>
    %cst_97 = arith.constant dense<0.000000e+00> : vector<8x128xf32>
    %238 = tpu.matmul %236, %237, %cst_97 {dimension_numbers = #tpu.dot_dimension_numbers<[1], [0], [0], [1], [0, 0, 1, 1], [], []>} : vector<8x8xf32>, vector<8x128xf32>, vector<8x128xf32> -> vector<8x128xf32>
    %239 = arith.addf %235, %238 : vector<8x128xf32>
    %240 = tpu.concatenate %232, %239 in 0 : vector<8x128xf32>, vector<8x128xf32> -> vector<16x128xf32>
    %241 = arith.truncf %240 : vector<16x128xf32> to vector<16x128xbf16>
    %c1_98 = arith.constant 1 : index
    %c0_99 = arith.constant 0 : index
    %c0_100 = arith.constant 0 : index
    %242 = vector.load %arg6[%c1_98, %c0_99, %c0_100] : memref<2x128x128xbf16, #tpu.memory_space<vmem>>, vector<1x128x128xbf16>
    %243 = vector.shape_cast %242 : vector<1x128x128xbf16> to vector<128x128xbf16>
    %cst_101 = arith.constant dense<0.000000e+00> : vector<16x128xf32>
    %244 = tpu.matmul %241, %243, %cst_101 {dimension_numbers = #tpu.dot_dimension_numbers<[1], [0], [0], [1], [0, 0, 1, 1], [], []>} : vector<16x128xbf16>, vector<128x128xbf16>, vector<16x128xf32> -> vector<16x128xf32>
    %c1_102 = arith.constant 1 : index
    %c0_103 = arith.constant 0 : index
    %c0_104 = arith.constant 0 : index
    %245 = vector.load %arg7[%c1_102, %c0_103, %c0_104] : memref<2x1x128xf32, #tpu.memory_space<vmem>>, vector<1x1x128xf32>
    %246 = vector.shape_cast %245 : vector<1x1x128xf32> to vector<1x128xf32>
    %247 = vector.broadcast %246 : vector<1x128xf32> to vector<16x128xf32>
    %248 = arith.addf %244, %247 : vector<16x128xf32>
    %249 = arith.addf %183, %248 : vector<16x128xf32>
    %c1_105 = arith.constant 1 : index
    %c0_106 = arith.constant 0 : index
    %c0_107 = arith.constant 0 : index
    %250 = vector.load %arg8[%c1_105, %c0_106, %c0_107] : memref<2x1x128xf32, #tpu.memory_space<vmem>>, vector<1x1x128xf32>
    %251 = vector.shape_cast %250 : vector<1x1x128xf32> to vector<1x128xf32>
    %c1_108 = arith.constant 1 : index
    %c0_109 = arith.constant 0 : index
    %c0_110 = arith.constant 0 : index
    %252 = vector.load %arg9[%c1_108, %c0_109, %c0_110] : memref<2x1x128xf32, #tpu.memory_space<vmem>>, vector<1x1x128xf32>
    %253 = vector.shape_cast %252 : vector<1x1x128xf32> to vector<1x128xf32>
    %cst_111 = arith.constant dense<0.000000e+00> : vector<16xf32>
    %254 = vector.multi_reduction <add>, %249, %cst_111 [1] : vector<16x128xf32> to vector<16xf32>
    %255 = vector.shape_cast %254 : vector<16xf32> to vector<16x1xf32>
    %cst_112 = arith.constant 1.280000e+02 : f32
    %256 = vector.broadcast %cst_112 : f32 to vector<16x1xf32>
    %257 = arith.divf %255, %256 : vector<16x1xf32>
    %258 = vector.broadcast %257 : vector<16x1xf32> to vector<16x128xf32>
    %259 = arith.subf %249, %258 : vector<16x128xf32>
    %260 = arith.mulf %259, %259 : vector<16x128xf32>
    %cst_113 = arith.constant dense<0.000000e+00> : vector<16xf32>
    %261 = vector.multi_reduction <add>, %260, %cst_113 [1] : vector<16x128xf32> to vector<16xf32>
    %262 = vector.shape_cast %261 : vector<16xf32> to vector<16x1xf32>
    %cst_114 = arith.constant 1.280000e+02 : f32
    %263 = vector.broadcast %cst_114 : f32 to vector<16x1xf32>
    %264 = arith.divf %262, %263 : vector<16x1xf32>
    %265 = vector.broadcast %257 : vector<16x1xf32> to vector<16x128xf32>
    %266 = arith.subf %249, %265 : vector<16x128xf32>
    %cst_115 = arith.constant 9.99999996E-13 : f32
    %267 = vector.broadcast %cst_115 : f32 to vector<16x1xf32>
    %268 = arith.addf %264, %267 : vector<16x1xf32>
    %269 = math.rsqrt %268 : vector<16x1xf32>
    %270 = vector.broadcast %269 : vector<16x1xf32> to vector<16x128xf32>
    %271 = arith.mulf %266, %270 : vector<16x128xf32>
    %272 = vector.broadcast %251 : vector<1x128xf32> to vector<16x128xf32>
    %273 = arith.mulf %271, %272 : vector<16x128xf32>
    %274 = vector.broadcast %253 : vector<1x128xf32> to vector<16x128xf32>
    %275 = arith.addf %273, %274 : vector<16x128xf32>
    %276 = arith.truncf %275 : vector<16x128xf32> to vector<16x128xbf16>
    %c1_116 = arith.constant 1 : index
    %c0_117 = arith.constant 0 : index
    %c0_118 = arith.constant 0 : index
    %277 = vector.load %arg10[%c1_116, %c0_117, %c0_118] : memref<2x128x256xbf16, #tpu.memory_space<vmem>>, vector<1x128x256xbf16>
    %278 = vector.shape_cast %277 : vector<1x128x256xbf16> to vector<128x256xbf16>
    %cst_119 = arith.constant dense<0.000000e+00> : vector<16x256xf32>
    %279 = tpu.matmul %276, %278, %cst_119 {dimension_numbers = #tpu.dot_dimension_numbers<[1], [0], [0], [1], [0, 0, 1, 1], [], []>} : vector<16x128xbf16>, vector<128x256xbf16>, vector<16x256xf32> -> vector<16x256xf32>
    %c1_120 = arith.constant 1 : index
    %c0_121 = arith.constant 0 : index
    %c0_122 = arith.constant 0 : index
    %280 = vector.load %arg11[%c1_120, %c0_121, %c0_122] : memref<2x1x256xf32, #tpu.memory_space<vmem>>, vector<1x1x256xf32>
    %281 = vector.shape_cast %280 : vector<1x1x256xf32> to vector<1x256xf32>
    %282 = vector.broadcast %281 : vector<1x256xf32> to vector<16x256xf32>
    %283 = arith.addf %279, %282 : vector<16x256xf32>
    %cst_123 = arith.constant 5.000000e-01 : f32
    %284 = vector.broadcast %cst_123 : f32 to vector<16x256xf32>
    %285 = arith.mulf %284, %283 : vector<16x256xf32>
    %cst_124 = arith.constant 4.471500e-02 : f32
    %286 = vector.broadcast %cst_124 : f32 to vector<16x256xf32>
    %287 = arith.mulf %286, %283 : vector<16x256xf32>
    %288 = arith.mulf %287, %283 : vector<16x256xf32>
    %289 = arith.mulf %288, %283 : vector<16x256xf32>
    %290 = arith.addf %283, %289 : vector<16x256xf32>
    %cst_125 = arith.constant 0.797884583 : f32
    %291 = vector.broadcast %cst_125 : f32 to vector<16x256xf32>
    %292 = arith.mulf %291, %290 : vector<16x256xf32>
    %293 = math.tanh %292 : vector<16x256xf32>
    %cst_126 = arith.constant 1.000000e+00 : f32
    %294 = vector.broadcast %cst_126 : f32 to vector<16x256xf32>
    %295 = arith.addf %294, %293 : vector<16x256xf32>
    %296 = arith.mulf %285, %295 : vector<16x256xf32>
    %297 = arith.truncf %296 : vector<16x256xf32> to vector<16x256xbf16>
    %c1_127 = arith.constant 1 : index
    %c0_128 = arith.constant 0 : index
    %c0_129 = arith.constant 0 : index
    %298 = vector.load %arg12[%c1_127, %c0_128, %c0_129] : memref<2x256x128xbf16, #tpu.memory_space<vmem>>, vector<1x256x128xbf16>
    %299 = vector.shape_cast %298 : vector<1x256x128xbf16> to vector<256x128xbf16>
    %cst_130 = arith.constant dense<0.000000e+00> : vector<16x128xf32>
    %300 = tpu.matmul %297, %299, %cst_130 {dimension_numbers = #tpu.dot_dimension_numbers<[1], [0], [0], [1], [0, 0, 1, 1], [], []>} : vector<16x256xbf16>, vector<256x128xbf16>, vector<16x128xf32> -> vector<16x128xf32>
    %c1_131 = arith.constant 1 : index
    %c0_132 = arith.constant 0 : index
    %c0_133 = arith.constant 0 : index
    %301 = vector.load %arg13[%c1_131, %c0_132, %c0_133] : memref<2x1x128xf32, #tpu.memory_space<vmem>>, vector<1x1x128xf32>
    %302 = vector.shape_cast %301 : vector<1x1x128xf32> to vector<1x128xf32>
    %303 = vector.broadcast %302 : vector<1x128xf32> to vector<16x128xf32>
    %304 = arith.addf %300, %303 : vector<16x128xf32>
    %305 = arith.addf %275, %304 : vector<16x128xf32>
    %c1_134 = arith.constant 1 : index
    %c0_135 = arith.constant 0 : index
    %c0_136 = arith.constant 0 : index
    %306 = vector.load %arg14[%c1_134, %c0_135, %c0_136] : memref<2x1x128xf32, #tpu.memory_space<vmem>>, vector<1x1x128xf32>
    %307 = vector.shape_cast %306 : vector<1x1x128xf32> to vector<1x128xf32>
    %c1_137 = arith.constant 1 : index
    %c0_138 = arith.constant 0 : index
    %c0_139 = arith.constant 0 : index
    %308 = vector.load %arg15[%c1_137, %c0_138, %c0_139] : memref<2x1x128xf32, #tpu.memory_space<vmem>>, vector<1x1x128xf32>
    %309 = vector.shape_cast %308 : vector<1x1x128xf32> to vector<1x128xf32>
    %cst_140 = arith.constant dense<0.000000e+00> : vector<16xf32>
    %310 = vector.multi_reduction <add>, %305, %cst_140 [1] : vector<16x128xf32> to vector<16xf32>
    %311 = vector.shape_cast %310 : vector<16xf32> to vector<16x1xf32>
    %cst_141 = arith.constant 1.280000e+02 : f32
    %312 = vector.broadcast %cst_141 : f32 to vector<16x1xf32>
    %313 = arith.divf %311, %312 : vector<16x1xf32>
    %314 = vector.broadcast %313 : vector<16x1xf32> to vector<16x128xf32>
    %315 = arith.subf %305, %314 : vector<16x128xf32>
    %316 = arith.mulf %315, %315 : vector<16x128xf32>
    %cst_142 = arith.constant dense<0.000000e+00> : vector<16xf32>
    %317 = vector.multi_reduction <add>, %316, %cst_142 [1] : vector<16x128xf32> to vector<16xf32>
    %318 = vector.shape_cast %317 : vector<16xf32> to vector<16x1xf32>
    %cst_143 = arith.constant 1.280000e+02 : f32
    %319 = vector.broadcast %cst_143 : f32 to vector<16x1xf32>
    %320 = arith.divf %318, %319 : vector<16x1xf32>
    %321 = vector.broadcast %313 : vector<16x1xf32> to vector<16x128xf32>
    %322 = arith.subf %305, %321 : vector<16x128xf32>
    %cst_144 = arith.constant 9.99999996E-13 : f32
    %323 = vector.broadcast %cst_144 : f32 to vector<16x1xf32>
    %324 = arith.addf %320, %323 : vector<16x1xf32>
    %325 = math.rsqrt %324 : vector<16x1xf32>
    %326 = vector.broadcast %325 : vector<16x1xf32> to vector<16x128xf32>
    %327 = arith.mulf %322, %326 : vector<16x128xf32>
    %328 = vector.broadcast %307 : vector<1x128xf32> to vector<16x128xf32>
    %329 = arith.mulf %327, %328 : vector<16x128xf32>
    %330 = vector.broadcast %309 : vector<1x128xf32> to vector<16x128xf32>
    %331 = arith.addf %329, %330 : vector<16x128xf32>
    %332 = vector.extract_strided_slice %331 {offsets = [0, 0], sizes = [1, 128], strides = [1, 1]} : vector<16x128xf32> to vector<1x128xf32>
    %333 = vector.extract_strided_slice %331 {offsets = [8, 0], sizes = [1, 128], strides = [1, 1]} : vector<16x128xf32> to vector<1x128xf32>
    %334 = tpu.concatenate %332, %333 in 0 : vector<1x128xf32>, vector<1x128xf32> -> vector<2x128xf32>
    %335 = arith.truncf %334 : vector<2x128xf32> to vector<2x128xbf16>
    %c0_145 = arith.constant 0 : index
    %c0_146 = arith.constant 0 : index
    %336 = vector.load %arg16[%c0_145, %c0_146] : memref<128x128xbf16, #tpu.memory_space<vmem>>, vector<128x128xbf16>
    %cst_147 = arith.constant dense<0.000000e+00> : vector<2x128xf32>
    %337 = tpu.matmul %335, %336, %cst_147 {dimension_numbers = #tpu.dot_dimension_numbers<[1], [0], [0], [1], [0, 0, 1, 1], [], []>} : vector<2x128xbf16>, vector<128x128xbf16>, vector<2x128xf32> -> vector<2x128xf32>
    %c0_148 = arith.constant 0 : index
    %c0_149 = arith.constant 0 : index
    %338 = vector.load %arg17[%c0_148, %c0_149] : memref<1x128xf32, #tpu.memory_space<vmem>>, vector<1x128xf32>
    %339 = vector.broadcast %338 : vector<1x128xf32> to vector<2x128xf32>
    %340 = arith.addf %337, %339 : vector<2x128xf32>
    %341 = math.tanh %340 : vector<2x128xf32>
    %342 = arith.truncf %341 : vector<2x128xf32> to vector<2x128xbf16>
    %c0_150 = arith.constant 0 : index
    %c0_151 = arith.constant 0 : index
    %343 = vector.load %arg18[%c0_150, %c0_151] : memref<128x128xbf16, #tpu.memory_space<vmem>>, vector<128x128xbf16>
    %cst_152 = arith.constant dense<0.000000e+00> : vector<2x128xf32>
    %344 = tpu.matmul %342, %343, %cst_152 {dimension_numbers = #tpu.dot_dimension_numbers<[1], [0], [0], [1], [0, 0, 1, 1], [], []>} : vector<2x128xbf16>, vector<128x128xbf16>, vector<2x128xf32> -> vector<2x128xf32>
    %c0_153 = arith.constant 0 : index
    %c0_154 = arith.constant 0 : index
    %345 = vector.load %arg19[%c0_153, %c0_154] : memref<1x128xf32, #tpu.memory_space<vmem>>, vector<1x128xf32>
    %346 = vector.broadcast %345 : vector<1x128xf32> to vector<2x128xf32>
    %347 = arith.addf %344, %346 : vector<2x128xf32>
    %c0_155 = arith.constant 0 : index
    %c0_156 = arith.constant 0 : index
    %348 = vector.load %arg20[%c0_155, %c0_156] : memref<2x128xf32, #tpu.memory_space<vmem>>, vector<2x128xf32>
    tpu.vector_store %arg20[%c0_155, %c0_156], %341 {strides = array<i32>} : memref<2x128xf32, #tpu.memory_space<vmem>>, vector<2x128xf32>,
    %c0_157 = arith.constant 0 : index
    %c0_158 = arith.constant 0 : index
    %349 = vector.load %arg21[%c0_157, %c0_158] : memref<2x128xf32, #tpu.memory_space<vmem>>, vector<2x128xf32>
    tpu.vector_store %arg21[%c0_157, %c0_158], %347 {strides = array<i32>} : memref<2x128xf32, #tpu.memory_space<vmem>>, vector<2x128xf32>,
    return
  }
  func.func @transform_0(%arg0: i32) -> (i32, i32) {
    %c0_i32 = arith.constant 0 : i32
    %c0_i32_0 = arith.constant 0 : i32
    %c0_i32_1 = arith.constant 0 : i32
    return %c0_i32, %c0_i32_0 : i32, i32
  }
  func.func @transform_1(%arg0: i32) -> (i32, i32) {
    %c0_i32 = arith.constant 0 : i32
    %c0_i32_0 = arith.constant 0 : i32
    %c0_i32_1 = arith.constant 0 : i32
    return %c0_i32, %c0_i32_0 : i32, i32
  }
  func.func @transform_2(%arg0: i32) -> (i32, i32) {
    %c0_i32 = arith.constant 0 : i32
    %c0_i32_0 = arith.constant 0 : i32
    %c0_i32_1 = arith.constant 0 : i32
    return %c0_i32, %c0_i32_0 : i32, i32
  }
  func.func @transform_3(%arg0: i32) -> (i32, i32, i32) {
    %c0_i32 = arith.constant 0 : i32
    %c0_i32_0 = arith.constant 0 : i32
    %c0_i32_1 = arith.constant 0 : i32
    %c0_i32_2 = arith.constant 0 : i32
    return %c0_i32, %c0_i32_0, %c0_i32_1 : i32, i32, i32
  }
  func.func @transform_4(%arg0: i32) -> (i32, i32, i32) {
    %c0_i32 = arith.constant 0 : i32
    %c0_i32_0 = arith.constant 0 : i32
    %c0_i32_1 = arith.constant 0 : i32
    %c0_i32_2 = arith.constant 0 : i32
    return %c0_i32, %c0_i32_0, %c0_i32_1 : i32, i32, i32
  }
  func.func @transform_5(%arg0: i32) -> (i32, i32, i32) {
    %c0_i32 = arith.constant 0 : i32
    %c0_i32_0 = arith.constant 0 : i32
    %c0_i32_1 = arith.constant 0 : i32
    %c0_i32_2 = arith.constant 0 : i32
    return %c0_i32, %c0_i32_0, %c0_i32_1 : i32, i32, i32
  }
  func.func @transform_6(%arg0: i32) -> (i32, i32, i32) {
    %c0_i32 = arith.constant 0 : i32
    %c0_i32_0 = arith.constant 0 : i32
    %c0_i32_1 = arith.constant 0 : i32
    %c0_i32_2 = arith.constant 0 : i32
    return %c0_i32, %c0_i32_0, %c0_i32_1 : i32, i32, i32
  }
  func.func @transform_7(%arg0: i32) -> (i32, i32, i32) {
    %c0_i32 = arith.constant 0 : i32
    %c0_i32_0 = arith.constant 0 : i32
    %c0_i32_1 = arith.constant 0 : i32
    %c0_i32_2 = arith.constant 0 : i32
    return %c0_i32, %c0_i32_0, %c0_i32_1 : i32, i32, i32
  }
  func.func @transform_8(%arg0: i32) -> (i32, i32, i32) {
    %c0_i32 = arith.constant 0 : i32
    %c0_i32_0 = arith.constant 0 : i32
    %c0_i32_1 = arith.constant 0 : i32
    %c0_i32_2 = arith.constant 0 : i32
    return %c0_i32, %c0_i32_0, %c0_i32_1 : i32, i32, i32
  }
  func.func @transform_9(%arg0: i32) -> (i32, i32, i32) {
    %c0_i32 = arith.constant 0 : i32
    %c0_i32_0 = arith.constant 0 : i32
    %c0_i32_1 = arith.constant 0 : i32
    %c0_i32_2 = arith.constant 0 : i32
    return %c0_i32, %c0_i32_0, %c0_i32_1 : i32, i32, i32
  }
  func.func @transform_10(%arg0: i32) -> (i32, i32, i32) {
    %c0_i32 = arith.constant 0 : i32
    %c0_i32_0 = arith.constant 0 : i32
    %c0_i32_1 = arith.constant 0 : i32
    %c0_i32_2 = arith.constant 0 : i32
    return %c0_i32, %c0_i32_0, %c0_i32_1 : i32, i32, i32
  }
  func.func @transform_11(%arg0: i32) -> (i32, i32, i32) {
    %c0_i32 = arith.constant 0 : i32
    %c0_i32_0 = arith.constant 0 : i32
    %c0_i32_1 = arith.constant 0 : i32
    %c0_i32_2 = arith.constant 0 : i32
    return %c0_i32, %c0_i32_0, %c0_i32_1 : i32, i32, i32
  }
  func.func @transform_12(%arg0: i32) -> (i32, i32, i32) {
    %c0_i32 = arith.constant 0 : i32
    %c0_i32_0 = arith.constant 0 : i32
    %c0_i32_1 = arith.constant 0 : i32
    %c0_i32_2 = arith.constant 0 : i32
    return %c0_i32, %c0_i32_0, %c0_i32_1 : i32, i32, i32
  }
  func.func @transform_13(%arg0: i32) -> (i32, i32, i32) {
    %c0_i32 = arith.constant 0 : i32
    %c0_i32_0 = arith.constant 0 : i32
    %c0_i32_1 = arith.constant 0 : i32
    %c0_i32_2 = arith.constant 0 : i32
    return %c0_i32, %c0_i32_0, %c0_i32_1 : i32, i32, i32
  }
  func.func @transform_14(%arg0: i32) -> (i32, i32, i32) {
    %c0_i32 = arith.constant 0 : i32
    %c0_i32_0 = arith.constant 0 : i32
    %c0_i32_1 = arith.constant 0 : i32
    %c0_i32_2 = arith.constant 0 : i32
    return %c0_i32, %c0_i32_0, %c0_i32_1 : i32, i32, i32
  }
  func.func @transform_15(%arg0: i32) -> (i32, i32) {
    %c0_i32 = arith.constant 0 : i32
    %c0_i32_0 = arith.constant 0 : i32
    %c0_i32_1 = arith.constant 0 : i32
    return %c0_i32, %c0_i32_0 : i32, i32
  }
  func.func @transform_16(%arg0: i32) -> (i32, i32) {
    %c0_i32 = arith.constant 0 : i32
    %c0_i32_0 = arith.constant 0 : i32
    %c0_i32_1 = arith.constant 0 : i32
    return %c0_i32, %c0_i32_0 : i32, i32
  }
  func.func @transform_17(%arg0: i32) -> (i32, i32) {
    %c0_i32 = arith.constant 0 : i32
    %c0_i32_0 = arith.constant 0 : i32
    %c0_i32_1 = arith.constant 0 : i32
    return %c0_i32, %c0_i32_0 : i32, i32
  }
  func.func @transform_18(%arg0: i32) -> (i32, i32) {
    %c0_i32 = arith.constant 0 : i32
    %c0_i32_0 = arith.constant 0 : i32
    %c0_i32_1 = arith.constant 0 : i32
    return %c0_i32, %c0_i32_0 : i32, i32
  }
  func.func @transform_19(%arg0: i32) -> (i32, i32) {
    %c0_i32 = arith.constant 0 : i32
    %c0_i32_0 = arith.constant 0 : i32
    %c0_i32_1 = arith.constant 0 : i32
    return %c0_i32, %c0_i32_0 : i32, i32
  }
  func.func @transform_20(%arg0: i32) -> (i32, i32) {
    %c0_i32 = arith.constant 0 : i32
    %c0_i32_0 = arith.constant 0 : i32
    %c0_i32_1 = arith.constant 0 : i32
    return %c0_i32, %c0_i32_0 : i32, i32
  }
}

</mosaic_0001>

<llo_original>
// kernel: tpu_custom_call.1
$region0: #{tpu_custom_call.1}
  #allocation0 [shape = 'u32[]', space=smem, size = 0x4, offset = 0x4, fixed_abs, tag = 'smem constant byte address 0x4 - core index']
  #allocation1 [shape = 'u32[72,128]{1,0:T(1,128)}', space=vmem, size = 0x9000, scoped, tag = 'internal scratch']
  %s0 = inlined_call_operand.hbm [shape: f32[16,128], index: 0, kind: input, shape index: {}]
  %s1 = inlined_call_operand.hbm [shape: f32[1,128], index: 1, kind: input, shape index: {}]
  %s2 = inlined_call_operand.hbm [shape: f32[1,128], index: 2, kind: input, shape index: {}]
  %s3 = inlined_call_operand.hbm [shape: bf16[2,128,384], index: 3, kind: input, shape index: {}]
  %s4 = inlined_call_operand.hbm [shape: f32[2,1,384], index: 4, kind: input, shape index: {}]
  %s5 = inlined_call_operand.hbm [shape: bf16[2,128,128], index: 5, kind: input, shape index: {}]
  %s6 = inlined_call_operand.vmem [shape: f32[2,1,128], index: 6, kind: input, shape index: {}]
  %s7 = inlined_call_operand.hbm [shape: f32[2,1,128], index: 7, kind: input, shape index: {}]
  %s8 = inlined_call_operand.hbm [shape: f32[2,1,128], index: 8, kind: input, shape index: {}]
  %s9 = inlined_call_operand.hbm [shape: bf16[2,128,256], index: 9, kind: input, shape index: {}]
  %s10 = inlined_call_operand.vmem [shape: f32[2,1,256], index: 10, kind: input, shape index: {}]
  %s11 = inlined_call_operand.hbm [shape: bf16[2,256,128], index: 11, kind: input, shape index: {}]
  %s12 = inlined_call_operand.vmem [shape: f32[2,1,128], index: 12, kind: input, shape index: {}]
  %s13 = inlined_call_operand.vmem [shape: f32[2,1,128], index: 13, kind: input, shape index: {}]
  %s14 = inlined_call_operand.vmem [shape: f32[2,1,128], index: 14, kind: input, shape index: {}]
  %s15 = inlined_call_operand.hbm [shape: bf16[128,128], index: 15, kind: input, shape index: {}]
  %s16 = inlined_call_operand.vmem [shape: f32[1,128], index: 16, kind: input, shape index: {}]
  %s17 = inlined_call_operand.hbm [shape: bf16[128,128], index: 17, kind: input, shape index: {}]
  %s18 = inlined_call_operand.vmem [shape: f32[1,128], index: 18, kind: input, shape index: {}]
  %s19 = inlined_call_operand.hbm [shape: f32[2,128], index: 19, kind: output, shape index: {0}]
  %s20 = inlined_call_operand.hbm [shape: f32[2,128], index: 20, kind: output, shape index: {1}]
  %21 = xla_tuple %s19, %s20
  %s22 = sld [smem:[#allocation0]]
  $region142: #{tpu_custom_call.1} parent=0
    _
  %s24 = ssub.s32 1, %s22
  %s25 = scalar_select 0, %s24, %s22
  $region1: #{tpu_custom_call.1} parent=0
    #allocation2 [shape = 'u8[8192]{0}', space=vmem, size = 0x2000, scoped, tag = 'input window, operand 0, single buffered']
    #allocation3 [shape = 's32[1]{0}', space=sflag, size = 0x4, scoped, tag = 'scoped memory for tpu_custom_call.1']
    #allocation4 [shape = 's32[1]{0}', space=sflag, size = 0x4, scoped, tag = 'scoped memory for tpu_custom_call.1']
    #allocation5 [shape = 'u8[512]{0}', space=vmem, size = 0x400, scoped, tag = 'input window, operand 1, single buffered']
    #allocation6 [shape = 's32[1]{0}', space=sflag, size = 0x4, scoped, tag = 'scoped memory for tpu_custom_call.1']
    #allocation7 [shape = 'u8[512]{0}', space=vmem, size = 0x400, scoped, tag = 'input window, operand 2, single buffered']
    #allocation8 [shape = 'u8[196608]{0}', space=vmem, size = 0x30000, scoped, tag = 'input window, operand 3, single buffered']
    #allocation9 [shape = 's32[1]{0}', space=sflag, size = 0x4, scoped, tag = 'scoped memory for tpu_custom_call.1']
    #allocation10 [shape = 'u8[3072]{0}', space=vmem, size = 0xc00, scoped, tag = 'input window, operand 4, single buffered']
    #allocation11 [shape = 'u8[65536]{0}', space=vmem, size = 0x10000, scoped, tag = 'input window, operand 5, single buffered']
    #allocation12 [shape = 's32[1]{0}', space=sflag, size = 0x4, scoped, tag = 'scoped memory for tpu_custom_call.1']
    #allocation13 [shape = 'u8[1024]{0}', space=vmem, size = 0x400, scoped, tag = 'input window, operand 7, single buffered']
    #allocation14 [shape = 'u8[1024]{0}', space=vmem, size = 0x400, scoped, tag = 'input window, operand 8, single buffered']
    #allocation15 [shape = 's32[1]{0}', space=sflag, size = 0x4, scoped, tag = 'scoped memory for tpu_custom_call.1']
    #allocation16 [shape = 'u8[131072]{0}', space=vmem, size = 0x20000, scoped, tag = 'input window, operand 9, single buffered']
    #allocation17 [shape = 'u8[131072]{0}', space=vmem, size = 0x20000, scoped, tag = 'input window, operand 11, single buffered']
    #allocation18 [shape = 's32[1]{0}', space=sflag, size = 0x4, scoped, tag = 'scoped memory for tpu_custom_call.1']
    #allocation19 [shape = 'u8[32768]{0}', space=vmem, size = 0x8000, scoped, tag = 'input window, operand 15, single buffered']
    #allocation20 [shape = 'u8[32768]{0}', space=vmem, size = 0x8000, scoped, tag = 'input window, operand 17, single buffered']
    #allocation21 [shape = 's32[1]{0}', space=sflag, size = 0x4, scoped, tag = 'scoped memory for tpu_custom_call.1']
    #allocation22 [shape = 'u8[1024]{0}', space=vmem, size = 0x400, scoped, tag = 'output window, operand 0, single buffered']
    #allocation23 [shape = 'u8[1024]{0}', space=vmem, size = 0x400, scoped, tag = 'output window, operand 1, single buffered']
    #allocation24 [shape = 's32[1]{0}', space=sflag, size = 0x4, scoped, tag = 'scoped memory for tpu_custom_call.1']
    %26 = vsyncpa [#allocation3], 0
    %27 = vsyncpa [#allocation6], 0
    %28 = vsyncpa [#allocation9], 0
    %29 = vsyncpa [#allocation12], 0
    %30 = vsyncpa [#allocation15], 0
    %31 = vsyncpa [#allocation18], 0
    %32 = vsyncpa [#allocation21], 0
    %33 = vsyncpa [#allocation4], 0
    %34 = vsyncpa [#allocation24], 0
    // Predicated region
    $region2: #{tpu_custom_call.1} parent=1 // pred_check
      _
    $region3: #{tpu_custom_call.1} parent=1 // pred_check_branch
      %36 = sbr.rel (0) target = $region5
    $region4: #{tpu_custom_call.1} parent=1 // pred_region
      %38 = vsyncadd [#allocation3], 0
      %s39 = sshll.u32 %s0, 4
      %s40 = int_to_ptr.hbm [resolvable:$true] %s39
      %s41 = sshll.u32 [#allocation2], 4
      %s42 = int_to_ptr.vmem [resolvable:$true] %s41
      %47 = dma.hbm_to_vmem [thread:$0]  %s40, 256, %s42, [#allocation3], 128, 128, 8
    $region5: #{tpu_custom_call.1} parent=1 // pred_fallthru
      _
    // Predicated region
    $region6: #{tpu_custom_call.1} parent=1 // pred_check
      _
    $region7: #{tpu_custom_call.1} parent=1 // pred_check_branch
      %49 = sbr.rel (0) target = $region9
    $region8: #{tpu_custom_call.1} parent=1 // pred_region
      %51 = vsyncadd [#allocation6], 0
      %s53 = sshll.u32 %s1, 4
      %s54 = int_to_ptr.hbm [resolvable:$true] %s53
      %s55 = sshll.u32 [#allocation5], 4
      %s56 = int_to_ptr.vmem [resolvable:$true] %s55
      %58 = dma.hbm_to_vmem [thread:$0]  %s54, 16, %s56, [#allocation6]
    $region9: #{tpu_custom_call.1} parent=1 // pred_fallthru
      _
    // Predicated region
    $region10: #{tpu_custom_call.1} parent=1 // pred_check
      _
    $region11: #{tpu_custom_call.1} parent=1 // pred_check_branch
      %60 = sbr.rel (0) target = $region13
    $region12: #{tpu_custom_call.1} parent=1 // pred_region
      %62 = vsyncadd [#allocation6], 0
      %s64 = sshll.u32 %s2, 4
      %s65 = int_to_ptr.hbm [resolvable:$true] %s64
      %s66 = sshll.u32 [#allocation7], 4
      %s67 = int_to_ptr.vmem [resolvable:$true] %s66
      %69 = dma.hbm_to_vmem [thread:$0]  %s65, 16, %s67, [#allocation6]
    $region13: #{tpu_custom_call.1} parent=1 // pred_fallthru
      _
    // Predicated region
    $region14: #{tpu_custom_call.1} parent=1 // pred_check
      _
    $region15: #{tpu_custom_call.1} parent=1 // pred_check_branch
      %71 = sbr.rel (0) target = $region17
    $region16: #{tpu_custom_call.1} parent=1 // pred_region
      %73 = vsyncadd [#allocation9], 0
      %s74 = sshll.u32 %s3, 4
      %s75 = int_to_ptr.hbm [resolvable:$true] %s74
      %s76 = sshll.u32 [#allocation8], 4
      %s77 = int_to_ptr.vmem [resolvable:$true] %s76
      %82 = dma.hbm_to_vmem [thread:$0]  %s75, 6144, %s77, [#allocation9], 192, 192, 12
    $region17: #{tpu_custom_call.1} parent=1 // pred_fallthru
      _
    // Predicated region
    $region18: #{tpu_custom_call.1} parent=1 // pred_check
      _
    $region19: #{tpu_custom_call.1} parent=1 // pred_check_branch
      %84 = sbr.rel (0) target = $region21
    $region20: #{tpu_custom_call.1} parent=1 // pred_region
      %86 = vsyncadd [#allocation9], 0
      %s87 = sshll.u32 %s4, 4
      %s88 = int_to_ptr.hbm [resolvable:$true] %s87
      %s89 = sshll.u32 [#allocation10], 4
      %s90 = int_to_ptr.vmem [resolvable:$true] %s89
      %95 = dma.hbm_to_vmem [thread:$0]  %s88, 96, %s90, [#allocation9], 48, 48, 3
    $region21: #{tpu_custom_call.1} parent=1 // pred_fallthru
      _
    // Predicated region
    $region22: #{tpu_custom_call.1} parent=1 // pred_check
      _
    $region23: #{tpu_custom_call.1} parent=1 // pred_check_branch
      %97 = sbr.rel (0) target = $region25
    $region24: #{tpu_custom_call.1} parent=1 // pred_region
      %99 = vsyncadd [#allocation12], 0
      %s100 = sshll.u32 %s5, 4
      %s101 = int_to_ptr.hbm [resolvable:$true] %s100
      %s102 = sshll.u32 [#allocation11], 4
      %s103 = int_to_ptr.vmem [resolvable:$true] %s102
      %108 = dma.hbm_to_vmem [thread:$0]  %s101, 2048, %s103, [#allocation12], 64, 64, 4
    $region25: #{tpu_custom_call.1} parent=1 // pred_fallthru
      _
    // Predicated region
    $region26: #{tpu_custom_call.1} parent=1 // pred_check
      _
    $region27: #{tpu_custom_call.1} parent=1 // pred_check_branch
      %110 = sbr.rel (0) target = $region29
    $region28: #{tpu_custom_call.1} parent=1 // pred_region
      _
    $region29: #{tpu_custom_call.1} parent=1 // pred_fallthru
      _
    // Predicated region
    $region30: #{tpu_custom_call.1} parent=1 // pred_check
      _
    $region31: #{tpu_custom_call.1} parent=1 // pred_check_branch
      %112 = sbr.rel (0) target = $region33
    $region32: #{tpu_custom_call.1} parent=1 // pred_region
      %114 = vsyncadd [#allocation12], 0
      %s115 = sshll.u32 %s7, 4
      %s116 = int_to_ptr.hbm [resolvable:$true] %s115
      %s117 = sshll.u32 [#allocation13], 4
      %s118 = int_to_ptr.vmem [resolvable:$true] %s117
      %123 = dma.hbm_to_vmem [thread:$0]  %s116, 32, %s118, [#allocation12], 16, 16, 1
    $region33: #{tpu_custom_call.1} parent=1 // pred_fallthru
      _
    // Predicated region
    $region34: #{tpu_custom_call.1} parent=1 // pred_check
      _
    $region35: #{tpu_custom_call.1} parent=1 // pred_check_branch
      %125 = sbr.rel (0) target = $region37
    $region36: #{tpu_custom_call.1} parent=1 // pred_region
      %127 = vsyncadd [#allocation15], 0
      %s128 = sshll.u32 %s8, 4
      %s129 = int_to_ptr.hbm [resolvable:$true] %s128
      %s130 = sshll.u32 [#allocation14], 4
      %s131 = int_to_ptr.vmem [resolvable:$true] %s130
      %136 = dma.hbm_to_vmem [thread:$0]  %s129, 32, %s131, [#allocation15], 16, 16, 1
    $region37: #{tpu_custom_call.1} parent=1 // pred_fallthru
      _
    // Predicated region
    $region38: #{tpu_custom_call.1} parent=1 // pred_check
      _
    $region39: #{tpu_custom_call.1} parent=1 // pred_check_branch
      %138 = sbr.rel (0) target = $region41
    $region40: #{tpu_custom_call.1} parent=1 // pred_region
      %140 = vsyncadd [#allocation15], 0
      %s141 = sshll.u32 %s9, 4
      %s142 = int_to_ptr.hbm [resolvable:$true] %s141
      %s143 = sshll.u32 [#allocation16], 4
      %s144 = int_to_ptr.vmem [resolvable:$true] %s143
      %149 = dma.hbm_to_vmem [thread:$0]  %s142, 4096, %s144, [#allocation15], 128, 128, 8
    $region41: #{tpu_custom_call.1} parent=1 // pred_fallthru
      _
    // Predicated region
    $region42: #{tpu_custom_call.1} parent=1 // pred_check
      _
    $region43: #{tpu_custom_call.1} parent=1 // pred_check_branch
      %151 = sbr.rel (0) target = $region45
    $region44: #{tpu_custom_call.1} parent=1 // pred_region
      _
    $region45: #{tpu_custom_call.1} parent=1 // pred_fallthru
      _
    // Predicated region
    $region46: #{tpu_custom_call.1} parent=1 // pred_check
      _
    $region47: #{tpu_custom_call.1} parent=1 // pred_check_branch
      %153 = sbr.rel (0) target = $region49
    $region48: #{tpu_custom_call.1} parent=1 // pred_region
      %155 = vsyncadd [#allocation18], 0
      %s156 = sshll.u32 %s11, 4
      %s157 = int_to_ptr.hbm [resolvable:$true] %s156
      %s158 = sshll.u32 [#allocation17], 4
      %s159 = int_to_ptr.vmem [resolvable:$true] %s158
      %164 = dma.hbm_to_vmem [thread:$0]  %s157, 4096, %s159, [#allocation18], 64, 64, 4
    $region49: #{tpu_custom_call.1} parent=1 // pred_fallthru
      _
    // Predicated region
    $region50: #{tpu_custom_call.1} parent=1 // pred_check
      _
    $region51: #{tpu_custom_call.1} parent=1 // pred_check_branch
      %166 = sbr.rel (0) target = $region53
    $region52: #{tpu_custom_call.1} parent=1 // pred_region
      _
    $region53: #{tpu_custom_call.1} parent=1 // pred_fallthru
      _
    // Predicated region
    $region54: #{tpu_custom_call.1} parent=1 // pred_check
      _
    $region55: #{tpu_custom_call.1} parent=1 // pred_check_branch
      %168 = sbr.rel (0) target = $region57
    $region56: #{tpu_custom_call.1} parent=1 // pred_region
      _
    $region57: #{tpu_custom_call.1} parent=1 // pred_fallthru
      _
    // Predicated region
    $region58: #{tpu_custom_call.1} parent=1 // pred_check
      _
    $region59: #{tpu_custom_call.1} parent=1 // pred_check_branch
      %170 = sbr.rel (0) target = $region61
    $region60: #{tpu_custom_call.1} parent=1 // pred_region
      _
    $region61: #{tpu_custom_call.1} parent=1 // pred_fallthru
      _
    // Predicated region
    $region62: #{tpu_custom_call.1} parent=1 // pred_check
      _
    $region63: #{tpu_custom_call.1} parent=1 // pred_check_branch
      %172 = sbr.rel (0) target = $region65
    $region64: #{tpu_custom_call.1} parent=1 // pred_region
      %174 = vsyncadd [#allocation18], 0
      %s175 = sshll.u32 %s15, 4
      %s176 = int_to_ptr.hbm [resolvable:$true] %s175
      %s177 = sshll.u32 [#allocation19], 4
      %s178 = int_to_ptr.vmem [resolvable:$true] %s177
      %183 = dma.hbm_to_vmem [thread:$0]  %s176, 1024, %s178, [#allocation18], 64, 64, 4
    $region65: #{tpu_custom_call.1} parent=1 // pred_fallthru
      _
    // Predicated region
    $region66: #{tpu_custom_call.1} parent=1 // pred_check
      _
    $region67: #{tpu_custom_call.1} parent=1 // pred_check_branch
      %185 = sbr.rel (0) target = $region69
    $region68: #{tpu_custom_call.1} parent=1 // pred_region
      _
    $region69: #{tpu_custom_call.1} parent=1 // pred_fallthru
      _
    // Predicated region
    $region70: #{tpu_custom_call.1} parent=1 // pred_check
      _
    $region71: #{tpu_custom_call.1} parent=1 // pred_check_branch
      %187 = sbr.rel (0) target = $region73
    $region72: #{tpu_custom_call.1} parent=1 // pred_region
      %189 = vsyncadd [#allocation21], 0
      %s190 = sshll.u32 %s17, 4
      %s191 = int_to_ptr.hbm [resolvable:$true] %s190
      %s192 = sshll.u32 [#allocation20], 4
      %s193 = int_to_ptr.vmem [resolvable:$true] %s192
      %198 = dma.hbm_to_vmem [thread:$0]  %s191, 1024, %s193, [#allocation21], 64, 64, 4
    $region73: #{tpu_custom_call.1} parent=1 // pred_fallthru
      _
    // Predicated region
    $region74: #{tpu_custom_call.1} parent=1 // pred_check
      _
    $region75: #{tpu_custom_call.1} parent=1 // pred_check_branch
      %200 = sbr.rel (0) target = $region77
    $region76: #{tpu_custom_call.1} parent=1 // pred_region
      _
    $region77: #{tpu_custom_call.1} parent=1 // pred_fallthru
      _
    // Predicated region
    $region78: #{tpu_custom_call.1} parent=1 // pred_check
      _
    $region79: #{tpu_custom_call.1} parent=1 // pred_check_branch
      %202 = sbr.rel (0) target = $region81
    $region80: #{tpu_custom_call.1} parent=1 // pred_region
      %204 = dma.done [#allocation3], 256
    $region81: #{tpu_custom_call.1} parent=1 // pred_fallthru
      _
    // Predicated region
    $region82: #{tpu_custom_call.1} parent=1 // pred_check
      _
    $region83: #{tpu_custom_call.1} parent=1 // pred_check_branch
      %206 = sbr.rel (0) target = $region85
    $region84: #{tpu_custom_call.1} parent=1 // pred_region
      %208 = dma.done [#allocation6], 16
    $region85: #{tpu_custom_call.1} parent=1 // pred_fallthru
      _
    // Predicated region
    $region86: #{tpu_custom_call.1} parent=1 // pred_check
      _
    $region87: #{tpu_custom_call.1} parent=1 // pred_check_branch
      %210 = sbr.rel (0) target = $region89
    $region88: #{tpu_custom_call.1} parent=1 // pred_region
      %212 = dma.done [#allocation6], 16
    $region89: #{tpu_custom_call.1} parent=1 // pred_fallthru
      _
    // Predicated region
    $region90: #{tpu_custom_call.1} parent=1 // pred_check
      _
    $region91: #{tpu_custom_call.1} parent=1 // pred_check_branch
      %214 = sbr.rel (0) target = $region93
    $region92: #{tpu_custom_call.1} parent=1 // pred_region
      %216 = dma.done [#allocation9], 6144
    $region93: #{tpu_custom_call.1} parent=1 // pred_fallthru
      _
    // Predicated region
    $region94: #{tpu_custom_call.1} parent=1 // pred_check
      _
    $region95: #{tpu_custom_call.1} parent=1 // pred_check_branch
      %218 = sbr.rel (0) target = $region97
    $region96: #{tpu_custom_call.1} parent=1 // pred_region
      %220 = dma.done [#allocation9], 96
    $region97: #{tpu_custom_call.1} parent=1 // pred_fallthru
      _
    // Predicated region
    $region98: #{tpu_custom_call.1} parent=1 // pred_check
      _
    $region99: #{tpu_custom_call.1} parent=1 // pred_check_branch
      %222 = sbr.rel (0) target = $region101
    $region100: #{tpu_custom_call.1} parent=1 // pred_region
      %224 = dma.done [#allocation12], 2048
    $region101: #{tpu_custom_call.1} parent=1 // pred_fallthru
      _
    // Predicated region
    $region102: #{tpu_custom_call.1} parent=1 // pred_check
      _
    $region103: #{tpu_custom_call.1} parent=1 // pred_check_branch
      %226 = sbr.rel (0) target = $region105
    $region104: #{tpu_custom_call.1} parent=1 // pred_region
      %228 = dma.done [#allocation12], 32
    $region105: #{tpu_custom_call.1} parent=1 // pred_fallthru
      _
    // Predicated region
    $region106: #{tpu_custom_call.1} parent=1 // pred_check
      _
    $region107: #{tpu_custom_call.1} parent=1 // pred_check_branch
      %230 = sbr.rel (0) target = $region109
    $region108: #{tpu_custom_call.1} parent=1 // pred_region
      %232 = dma.done [#allocation15], 32
    $region109: #{tpu_custom_call.1} parent=1 // pred_fallthru
      _
    // Predicated region
    $region110: #{tpu_custom_call.1} parent=1 // pred_check
      _
    $region111: #{tpu_custom_call.1} parent=1 // pred_check_branch
      %234 = sbr.rel (0) target = $region113
    $region112: #{tpu_custom_call.1} parent=1 // pred_region
      %236 = dma.done [#allocation15], 4096
    $region113: #{tpu_custom_call.1} parent=1 // pred_fallthru
      _
    // Predicated region
    $region114: #{tpu_custom_call.1} parent=1 // pred_check
      _
    $region115: #{tpu_custom_call.1} parent=1 // pred_check_branch
      %238 = sbr.rel (0) target = $region117
    $region116: #{tpu_custom_call.1} parent=1 // pred_region
      %240 = dma.done [#allocation18], 4096
    $region117: #{tpu_custom_call.1} parent=1 // pred_fallthru
      _
    // Predicated region
    $region118: #{tpu_custom_call.1} parent=1 // pred_check
      _
    $region119: #{tpu_custom_call.1} parent=1 // pred_check_branch
      %242 = sbr.rel (0) target = $region121
    $region120: #{tpu_custom_call.1} parent=1 // pred_region
      %244 = dma.done [#allocation18], 1024
    $region121: #{tpu_custom_call.1} parent=1 // pred_fallthru
      _
    // Predicated region
    $region122: #{tpu_custom_call.1} parent=1 // pred_check
      _
    $region123: #{tpu_custom_call.1} parent=1 // pred_check_branch
      %246 = sbr.rel (0) target = $region125
    $region124: #{tpu_custom_call.1} parent=1 // pred_region
      %248 = dma.done [#allocation21], 1024
    $region125: #{tpu_custom_call.1} parent=1 // pred_fallthru
      _
    %v249 = vld [vmem:[#allocation2] sm:$0xff]
    %v250 = vld [vmem:[#allocation2 + $0x8] sm:$0xff]
    %v251 = vld [vmem:[#allocation5] sm:$0x1]
    %v252 = vld [vmem:[#allocation7] sm:$0x1]
    %253 = vadd.xlane.f32.xlu0 %v249
    %v254 = vpop.xlane.xlu0 %253
    %255 = vadd.xlane.f32.xlu0 %v250
    %v256 = vpop.xlane.xlu0 %255
    %v257 = vrcp.pop 128.0
    %v258 = vmul.f32 128.0, %v257
    %v259 = vsub.f32 1.0, %v258
    %v260 = vmul.f32 %v257, %v259
    %v261 = vadd.f32 %v257, %v260
    %vm262 = vweird.f32 %v257
    %v263 = vsel %vm262, %v257, %v261
    %v264 = vmul.f32 %v254, %v263
    %v265 = vmul.f32 %v256, %v263
    %v266 = vsub.f32 %v249, %v264
    %v267 = vsub.f32 %v250, %v265
    %v268 = vmul.f32 %v266, %v266
    %v269 = vmul.f32 %v267, %v267
    %270 = vadd.xlane.f32.xlu0 %v268
    %v271 = vpop.xlane.xlu0 %270
    %272 = vadd.xlane.f32.xlu0 %v269
    %v273 = vpop.xlane.xlu0 %272
    %v274 = vmul.f32 %v271, %v263
    %v275 = vmul.f32 %v273, %v263
    %v276 = vadd.f32 %v274, 1e-12
    %v277 = vadd.f32 %v275, 1e-12
    %v278 = vrsqrt.pop %v276
    %v279 = vmul.f32 %v278, %v276
    %v280 = vmul.f32 %v279, %v278
    %v281 = vmul.f32 0.5, %v280
    %v282 = vsub.f32 1.5, %v281
    %v283 = vmul.f32 %v278, %v282
    %vm284 = vweird.f32 %v276
    %vm285 = vweird.f32 %v278
    %vm286 = vmor %vm284, %vm285
    %v287 = vsel %vm286, %v278, %v283
    %v288 = vrsqrt.pop %v277
    %v289 = vmul.f32 %v288, %v277
    %v290 = vmul.f32 %v289, %v288
    %v291 = vmul.f32 0.5, %v290
    %v292 = vsub.f32 1.5, %v291
    %v293 = vmul.f32 %v288, %v292
    %vm294 = vweird.f32 %v277
    %vm295 = vweird.f32 %v288
    %vm296 = vmor %vm294, %vm295
    %v297 = vsel %vm296, %v288, %v293
    %v298 = vmul.f32 %v266, %v287
    %v299 = vmul.f32 %v267, %v297
    %v301 = vperm.slane %v251, 0
    %v303 = vmul.f32 %v298, %v301
    %v304 = vmul.f32 %v299, %v301
    %v306 = vperm.slane %v252, 0
    %v308 = vadd.f32 %v303, %v306
    %v309 = vadd.f32 %v304, %v306
    %v310 = vlaneseq
    %v311 = vand.u32 %v310, 127
    %vm312 = vcmp.ge.s32.totalorder %v311, 0
    %vm313 = vcmp.lt.s32.totalorder %v311, 64
    %vm314 = vmand %vm312, %vm313
    %vm315 = vcmp.ge.s32.totalorder %v311, 64
    %vm316 = vcmp.lt.s32.totalorder %v311, 128
    %vm317 = vmand %vm315, %vm316
    %v318 = vpack.c.bf16 %v309, %v308
    %v319 = vld [vmem:[#allocation8] sm:$0xff]
    %v320 = vld [vmem:[#allocation8 + $0x8] sm:$0xf]
    %v321 = vld [vmem:[#allocation8 + $0xc] sm:$0xff]
    %v322 = vld [vmem:[#allocation8 + $0x14] sm:$0xf]
    %v323 = vld [vmem:[#allocation8 + $0x18] sm:$0xff]
    %v324 = vld [vmem:[#allocation8 + $0x20] sm:$0xf]
    %v325 = vld [vmem:[#allocation8 + $0x24] sm:$0xff]
    %v326 = vld [vmem:[#allocation8 + $0x2c] sm:$0xf]
    %v327 = vld [vmem:[#allocation8 + $0x30] sm:$0xff]
    %v328 = vld [vmem:[#allocation8 + $0x38] sm:$0xf]
    %v329 = vld [vmem:[#allocation8 + $0x3c] sm:$0xff]
    %v330 = vld [vmem:[#allocation8 + $0x44] sm:$0xf]
    %v331 = vld [vmem:[#allocation8 + $0x48] sm:$0xff]
    %v332 = vld [vmem:[#allocation8 + $0x50] sm:$0xf]
    %v333 = vld [vmem:[#allocation8 + $0x54] sm:$0xff]
    %v334 = vld [vmem:[#allocation8 + $0x5c] sm:$0xf]
    %v335 = vld [vmem:[#allocation8 + $0x60] sm:$0xff]
    %v336 = vld [vmem:[#allocation8 + $0x68] sm:$0xf]
    %v337 = vld [vmem:[#allocation8 + $0x6c] sm:$0xff]
    %v338 = vld [vmem:[#allocation8 + $0x74] sm:$0xf]
    %v339 = vld [vmem:[#allocation8 + $0x78] sm:$0xff]
    %v340 = vld [vmem:[#allocation8 + $0x80] sm:$0xf]
    %v341 = vld [vmem:[#allocation8 + $0x84] sm:$0xff]
    %v342 = vld [vmem:[#allocation8 + $0x8c] sm:$0xf]
    %v343 = vld [vmem:[#allocation8 + $0x90] sm:$0xff]
    %v344 = vld [vmem:[#allocation8 + $0x98] sm:$0xf]
    %v345 = vld [vmem:[#allocation8 + $0x9c] sm:$0xff]
    %v346 = vld [vmem:[#allocation8 + $0xa4] sm:$0xf]
    %v347 = vld [vmem:[#allocation8 + $0xa8] sm:$0xff]
    %v348 = vld [vmem:[#allocation8 + $0xb0] sm:$0xf]
    %v349 = vld [vmem:[#allocation8 + $0xb4] sm:$0xff]
    %v350 = vld [vmem:[#allocation8 + $0xbc] sm:$0xf]
    %v351 = vld [vmem:[#allocation10] sm:$0x7]
    %v353 = vperm.slane %v351, 0
    %v354 = vperm.slane %v351, 1
    %v355 = vperm.slane %v351, 2
    %v391 = vunpack.c.l.b16 %v319
    %v392 = vunpack.c.h.b16 %v319
    %v393 = vunpack.c.l.b16 %v320
    %v394 = vunpack.c.l.b16 %v321
    %v395 = vunpack.c.h.b16 %v321
    %v396 = vunpack.c.l.b16 %v322
    %v397 = vunpack.c.l.b16 %v323
    %v398 = vunpack.c.h.b16 %v323
    %v399 = vunpack.c.l.b16 %v324
    %v400 = vunpack.c.l.b16 %v325
    %v401 = vunpack.c.h.b16 %v325
    %v402 = vunpack.c.l.b16 %v326
    %v403 = vunpack.c.l.b16 %v327
    %v404 = vunpack.c.h.b16 %v327
    %v405 = vunpack.c.l.b16 %v328
    %v406 = vunpack.c.l.b16 %v329
    %v407 = vunpack.c.h.b16 %v329
    %v408 = vunpack.c.l.b16 %v330
    %v409 = vunpack.c.l.b16 %v331
    %v410 = vunpack.c.h.b16 %v331
    %v411 = vunpack.c.l.b16 %v332
    %v412 = vunpack.c.l.b16 %v333
    %v413 = vunpack.c.h.b16 %v333
    %v414 = vunpack.c.l.b16 %v334
    %v415 = vunpack.c.l.b16 %v335
    %v416 = vunpack.c.h.b16 %v335
    %v417 = vunpack.c.l.b16 %v336
    %v418 = vunpack.c.l.b16 %v337
    %v419 = vunpack.c.h.b16 %v337
    %v420 = vunpack.c.l.b16 %v338
    %v421 = vunpack.c.l.b16 %v339
    %v422 = vunpack.c.h.b16 %v339
    %v423 = vunpack.c.l.b16 %v340
    %v424 = vunpack.c.l.b16 %v341
    %v425 = vunpack.c.h.b16 %v341
    %v426 = vunpack.c.l.b16 %v342
    %v427 = vunpack.c.l.b16 %v343
    %v428 = vunpack.c.h.b16 %v343
    %v429 = vunpack.c.l.b16 %v344
    %v430 = vunpack.c.l.b16 %v345
    %v431 = vunpack.c.h.b16 %v345
    %v432 = vunpack.c.l.b16 %v346
    %v433 = vunpack.c.l.b16 %v347
    %v434 = vunpack.c.h.b16 %v347
    %v435 = vunpack.c.l.b16 %v348
    %v436 = vunpack.c.l.b16 %v349
    %v437 = vunpack.c.h.b16 %v349
    %v438 = vunpack.c.l.b16 %v350
    %v439 = vpack.c.b16 %v394, %v391
    %v440 = vpack.c.b16 %v395, %v392
    %v441 = vpack.c.b16 %v396, %v393
    %v442 = vpack.c.b16 %v400, %v397
    %v443 = vpack.c.b16 %v401, %v398
    %v444 = vpack.c.b16 %v402, %v399
    %v445 = vpack.c.b16 %v406, %v403
    %v446 = vpack.c.b16 %v407, %v404
    %v447 = vpack.c.b16 %v408, %v405
    %v448 = vpack.c.b16 %v412, %v409
    %v449 = vpack.c.b16 %v413, %v410
    %v450 = vpack.c.b16 %v414, %v411
    %v451 = vpack.c.b16 %v418, %v415
    %v452 = vpack.c.b16 %v419, %v416
    %v453 = vpack.c.b16 %v420, %v417
    %v454 = vpack.c.b16 %v424, %v421
    %v455 = vpack.c.b16 %v425, %v422
    %v456 = vpack.c.b16 %v426, %v423
    %v457 = vpack.c.b16 %v430, %v427
    %v458 = vpack.c.b16 %v431, %v428
    %v459 = vpack.c.b16 %v432, %v429
    %v460 = vpack.c.b16 %v436, %v433
    %v461 = vpack.c.b16 %v437, %v434
    %v462 = vpack.c.b16 %v438, %v435
    %487 = vmatpush.bf16.msra.mxu0 %v460
    %488 = vmatpush.bf16.msra.mxu0 %v457
    %489 = vmatpush.bf16.msra.mxu0 %v454
    %490 = vmatpush.bf16.msra.mxu0 %v451
    %491 = vmatpush.bf16.msra.mxu0 %v448
    %492 = vmatpush.bf16.msra.mxu0 %v445
    %493 = vmatpush.bf16.msra.mxu0 %v442
    %494 = vmatpush.bf16.msra.mxu0 %v439
    %495 = vmatmul.bf16.gmra.mxu0 %v318
    %v496 = vpop.f32.mrf.mxu0
    %v497 = vadd.f32 %v353, %v496
    %v498 = vpop.f32.mrf.mxu0
    %v499 = vadd.f32 %v353, %v498
    %500 = vdwg.mxu0
    %501 = vmatpush.bf16.msra.mxu0 %v461
    %502 = vmatpush.bf16.msra.mxu0 %v458
    %503 = vmatpush.bf16.msra.mxu0 %v455
    %504 = vmatpush.bf16.msra.mxu0 %v452
    %505 = vmatpush.bf16.msra.mxu0 %v449
    %506 = vmatpush.bf16.msra.mxu0 %v446
    %507 = vmatpush.bf16.msra.mxu0 %v443
    %508 = vmatpush.bf16.msra.mxu0 %v440
    %509 = vmatmul.bf16.gmra.mxu0 %v318
    %v510 = vpop.f32.mrf.mxu0
    %v511 = vadd.f32 %v354, %v510
    %v512 = vpop.f32.mrf.mxu0
    %v513 = vadd.f32 %v354, %v512
    %514 = vdwg.mxu0
    %515 = vmatpush.bf16.msra.mxu0 %v462
    %516 = vmatpush.bf16.msra.mxu0 %v459
    %517 = vmatpush.bf16.msra.mxu0 %v456
    %518 = vmatpush.bf16.msra.mxu0 %v453
    %519 = vmatpush.bf16.msra.mxu0 %v450
    %520 = vmatpush.bf16.msra.mxu0 %v447
    %521 = vmatpush.bf16.msra.mxu0 %v444
    %522 = vmatpush.bf16.msra.mxu0 %v441
    %523 = vmatmul.bf16.gmra.mxu0 %v318
    %v524 = vpop.f32.mrf.mxu0
    %v525 = vadd.f32 %v355, %v524
    %v526 = vpop.f32.mrf.mxu0
    %v527 = vadd.f32 %v355, %v526
    %528 = vdwg.mxu0
    %v529 = vsel %vm314, %v511, 0.0
    %v530 = vsel %vm314, %v513, 0.0
    %v531 = vsel %vm317, %v511, 0.0
    %v532 = vsel %vm317, %v513, 0.0
    %v533 = vsel %vm314, %v525, 0.0
    %v534 = vsel %vm314, %v527, 0.0
    %v535 = vsel %vm317, %v525, 0.0
    %v536 = vsel %vm317, %v527, 0.0
    %537 = vmatpush.xpose.msra.mxu0 0.0
    %538 = vmatpush.xpose.msra.mxu0 0.0
    %539 = vmatpush.xpose.msra.mxu0 0.0
    %540 = vmatpush.xpose.msra.mxu0 0.0
    %541 = vmatpush.xpose.msra.mxu0 0.0
    %542 = vmatpush.xpose.msra.mxu0 0.0
    %543 = vmatpush.xpose.msra.mxu0 0.0
    %544 = vmatpush.xpose.msra.mxu0 0.0
    %545 = vmatpush.xpose.msra.mxu0 0.0
    %546 = vmatpush.xpose.msra.mxu0 0.0
    %547 = vmatpush.xpose.msra.mxu0 0.0
    %548 = vmatpush.xpose.msra.mxu0 0.0
    %549 = vmatpush.xpose.msra.mxu0 0.0
    %550 = vmatpush.xpose.msra.mxu0 0.0
    %551 = vmatpush.xpose.msra.mxu0 0.0
    %552 = vmatpush.xpose.msra.mxu0 %v529
    %553 = vmatmul.f32.gmra.mxu0 %v497
    %v554 = vpop.f32.mrf.mxu0
    %v555 = vadd.f32 0.0, %v554
    %556 = vdwg.mxu0
    %557 = vmatpush.xpose.msra.mxu0 0.0
    %558 = vmatpush.xpose.msra.mxu0 0.0
    %559 = vmatpush.xpose.msra.mxu0 0.0
    %560 = vmatpush.xpose.msra.mxu0 0.0
    %561 = vmatpush.xpose.msra.mxu0 0.0
    %562 = vmatpush.xpose.msra.mxu0 0.0
    %563 = vmatpush.xpose.msra.mxu0 0.0
    %564 = vmatpush.xpose.msra.mxu0 0.0
    %565 = vmatpush.xpose.msra.mxu0 0.0
    %566 = vmatpush.xpose.msra.mxu0 0.0
    %567 = vmatpush.xpose.msra.mxu0 0.0
    %568 = vmatpush.xpose.msra.mxu0 0.0
    %569 = vmatpush.xpose.msra.mxu0 0.0
    %570 = vmatpush.xpose.msra.mxu0 0.0
    %571 = vmatpush.xpose.msra.mxu0 0.0
    %572 = vmatpush.xpose.msra.mxu0 %v531
    %573 = vmatmul.f32.gmra.mxu0 %v497
    %v574 = vpop.f32.mrf.mxu0
    %v575 = vadd.f32 0.0, %v574
    %576 = vdwg.mxu0
    %577 = vmatpush.xpose.msra.mxu0 0.0
    %578 = vmatpush.xpose.msra.mxu0 0.0
    %579 = vmatpush.xpose.msra.mxu0 0.0
    %580 = vmatpush.xpose.msra.mxu0 0.0
    %581 = vmatpush.xpose.msra.mxu0 0.0
    %582 = vmatpush.xpose.msra.mxu0 0.0
    %583 = vmatpush.xpose.msra.mxu0 0.0
    %584 = vmatpush.xpose.msra.mxu0 0.0
    %585 = vmatpush.xpose.msra.mxu0 0.0
    %586 = vmatpush.xpose.msra.mxu0 0.0
    %587 = vmatpush.xpose.msra.mxu0 0.0
    %588 = vmatpush.xpose.msra.mxu0 0.0
    %589 = vmatpush.xpose.msra.mxu0 0.0
    %590 = vmatpush.xpose.msra.mxu0 0.0
    %591 = vmatpush.xpose.msra.mxu0 0.0
    %592 = vmatpush.xpose.msra.mxu0 %v530
    %593 = vmatmul.f32.gmra.mxu0 %v499
    %v594 = vpop.f32.mrf.mxu0
    %v595 = vadd.f32 0.0, %v594
    %596 = vdwg.mxu0
    %597 = vmatpush.xpose.msra.mxu0 0.0
    %598 = vmatpush.xpose.msra.mxu0 0.0
    %599 = vmatpush.xpose.msra.mxu0 0.0
    %600 = vmatpush.xpose.msra.mxu0 0.0
    %601 = vmatpush.xpose.msra.mxu0 0.0
    %602 = vmatpush.xpose.msra.mxu0 0.0
    %603 = vmatpush.xpose.msra.mxu0 0.0
    %604 = vmatpush.xpose.msra.mxu0 0.0
    %605 = vmatpush.xpose.msra.mxu0 0.0
    %606 = vmatpush.xpose.msra.mxu0 0.0
    %607 = vmatpush.xpose.msra.mxu0 0.0
    %608 = vmatpush.xpose.msra.mxu0 0.0
    %609 = vmatpush.xpose.msra.mxu0 0.0
    %610 = vmatpush.xpose.msra.mxu0 0.0
    %611 = vmatpush.xpose.msra.mxu0 0.0
    %612 = vmatpush.xpose.msra.mxu0 %v532
    %613 = vmatmul.f32.gmra.mxu0 %v499
    %v614 = vpop.f32.mrf.mxu0
    %v615 = vadd.f32 0.0, %v614
    %616 = vdwg.mxu0
    %vm617 = vcmask 64512
    %v618 = vsel %vm617, %v555, -inf
    %619 = vmax.xlane.f32.xlu0 %v618
    %v620 = vpop.xlane.xlu0 %619
    %v621 = vsel %vm617, %v575, -inf
    %622 = vmax.xlane.f32.xlu0 %v621
    %v623 = vpop.xlane.xlu0 %622
    %v624 = vsel %vm617, %v595, -inf
    %625 = vmax.xlane.f32.xlu0 %v624
    %v626 = vpop.xlane.xlu0 %625
    %v627 = vsel %vm617, %v615, -inf
    %628 = vmax.xlane.f32.xlu0 %v627
    %v629 = vpop.xlane.xlu0 %628
    %v630 = vsub.f32 %v555, %v620
    %v631 = vsub.f32 %v575, %v623
    %v632 = vsub.f32 %v595, %v626
    %v633 = vsub.f32 %v615, %v629
    %v634 = vmul.f32 %v630, 1.442695
    %v635 = vpow.pop %v634
    %v636 = vmul.f32 %v631, 1.442695
    %v637 = vpow.pop %v636
    %v638 = vmul.f32 %v632, 1.442695
    %v639 = vpow.pop %v638
    %v640 = vmul.f32 %v633, 1.442695
    %v641 = vpow.pop %v640
    %v642 = vsel %vm617, %v635, 0.0
    %643 = vadd.xlane.f32.xlu0 %v642
    %v644 = vpop.xlane.xlu0 %643
    %v645 = vsel %vm617, %v637, 0.0
    %646 = vadd.xlane.f32.xlu0 %v645
    %v647 = vpop.xlane.xlu0 %646
    %v648 = vsel %vm617, %v639, 0.0
    %649 = vadd.xlane.f32.xlu0 %v648
    %v650 = vpop.xlane.xlu0 %649
    %v651 = vsel %vm617, %v641, 0.0
    %652 = vadd.xlane.f32.xlu0 %v651
    %v653 = vpop.xlane.xlu0 %652
    %v654 = vrcp.pop %v644
    %v655 = vrcp.pop %v647
    %v656 = vrcp.pop %v650
    %v657 = vrcp.pop %v653
    %v658 = vmul.f32 %v635, %v654
    %v659 = vmul.f32 %v637, %v655
    %v660 = vmul.f32 %v639, %v656
    %v661 = vmul.f32 %v641, %v657
    %v663 = vsel %vm617, %v659, 0
    %665 = vmatpush.msra.mxu0 0.0
    %666 = vmatpush.msra.mxu0 0.0
    %667 = vmatpush.msra.mxu0 0.0
    %668 = vmatpush.msra.mxu0 0.0
    %669 = vmatpush.msra.mxu0 0.0
    %670 = vmatpush.msra.mxu0 0.0
    %671 = vmatpush.msra.mxu0 0.0
    %672 = vmatpush.msra.mxu0 0.0
    %673 = vmatpush.msra.mxu0 0.0
    %674 = vmatpush.msra.mxu0 0.0
    %675 = vmatpush.msra.mxu0 0.0
    %676 = vmatpush.msra.mxu0 0.0
    %677 = vmatpush.msra.mxu0 0.0
    %678 = vmatpush.msra.mxu0 0.0
    %679 = vmatpush.msra.mxu0 0.0
    %680 = vmatpush.msra.mxu0 %v535
    %681 = vmatmul.f32.gmra.mxu0 %v663
    %v682 = vpop.f32.mrf.mxu0
    %v683 = vadd.f32 0.0, %v682
    %684 = vdwg.mxu0
    %v686 = vsel %vm617, %v658, 0
    %688 = vmatpush.msra.mxu0 0.0
    %689 = vmatpush.msra.mxu0 0.0
    %690 = vmatpush.msra.mxu0 0.0
    %691 = vmatpush.msra.mxu0 0.0
    %692 = vmatpush.msra.mxu0 0.0
    %693 = vmatpush.msra.mxu0 0.0
    %694 = vmatpush.msra.mxu0 0.0
    %695 = vmatpush.msra.mxu0 0.0
    %696 = vmatpush.msra.mxu0 0.0
    %697 = vmatpush.msra.mxu0 0.0
    %698 = vmatpush.msra.mxu0 0.0
    %699 = vmatpush.msra.mxu0 0.0
    %700 = vmatpush.msra.mxu0 0.0
    %701 = vmatpush.msra.mxu0 0.0
    %702 = vmatpush.msra.mxu0 0.0
    %703 = vmatpush.msra.mxu0 %v533
    %704 = vmatmul.f32.gmra.mxu0 %v686
    %v705 = vpop.f32.mrf.mxu0
    %v706 = vadd.f32 %v683, %v705
    %707 = vdwg.mxu0
    %v709 = vsel %vm617, %v661, 0
    %711 = vmatpush.msra.mxu0 0.0
    %712 = vmatpush.msra.mxu0 0.0
    %713 = vmatpush.msra.mxu0 0.0
    %714 = vmatpush.msra.mxu0 0.0
    %715 = vmatpush.msra.mxu0 0.0
    %716 = vmatpush.msra.mxu0 0.0
    %717 = vmatpush.msra.mxu0 0.0
    %718 = vmatpush.msra.mxu0 0.0
    %719 = vmatpush.msra.mxu0 0.0
    %720 = vmatpush.msra.mxu0 0.0
    %721 = vmatpush.msra.mxu0 0.0
    %722 = vmatpush.msra.mxu0 0.0
    %723 = vmatpush.msra.mxu0 0.0
    %724 = vmatpush.msra.mxu0 0.0
    %725 = vmatpush.msra.mxu0 0.0
    %726 = vmatpush.msra.mxu0 %v536
    %727 = vmatmul.f32.gmra.mxu0 %v709
    %v728 = vpop.f32.mrf.mxu0
    %v729 = vadd.f32 0.0, %v728
    %730 = vdwg.mxu0
    %v732 = vsel %vm617, %v660, 0
    %734 = vmatpush.msra.mxu0 0.0
    %735 = vmatpush.msra.mxu0 0.0
    %736 = vmatpush.msra.mxu0 0.0
    %737 = vmatpush.msra.mxu0 0.0
    %738 = vmatpush.msra.mxu0 0.0
    %739 = vmatpush.msra.mxu0 0.0
    %740 = vmatpush.msra.mxu0 0.0
    %741 = vmatpush.msra.mxu0 0.0
    %742 = vmatpush.msra.mxu0 0.0
    %743 = vmatpush.msra.mxu0 0.0
    %744 = vmatpush.msra.mxu0 0.0
    %745 = vmatpush.msra.mxu0 0.0
    %746 = vmatpush.msra.mxu0 0.0
    %747 = vmatpush.msra.mxu0 0.0
    %748 = vmatpush.msra.mxu0 0.0
    %749 = vmatpush.msra.mxu0 %v534
    %750 = vmatmul.f32.gmra.mxu0 %v732
    %v751 = vpop.f32.mrf.mxu0
    %v752 = vadd.f32 %v729, %v751
    %753 = vdwg.mxu0
    %v754 = vpack.c.bf16 %v752, %v706
    %v755 = vld [vmem:[#allocation11] sm:$0xf]
    %v756 = vld [vmem:[#allocation11 + $0x4] sm:$0xf]
    %v757 = vld [vmem:[#allocation11 + $0x8] sm:$0xf]
    %v758 = vld [vmem:[#allocation11 + $0xc] sm:$0xf]
    %v759 = vld [vmem:[#allocation11 + $0x10] sm:$0xf]
    %v760 = vld [vmem:[#allocation11 + $0x14] sm:$0xf]
    %v761 = vld [vmem:[#allocation11 + $0x18] sm:$0xf]
    %v762 = vld [vmem:[#allocation11 + $0x1c] sm:$0xf]
    %v763 = vld [vmem:[#allocation11 + $0x20] sm:$0xf]
    %v764 = vld [vmem:[#allocation11 + $0x24] sm:$0xf]
    %v765 = vld [vmem:[#allocation11 + $0x28] sm:$0xf]
    %v766 = vld [vmem:[#allocation11 + $0x2c] sm:$0xf]
    %v767 = vld [vmem:[#allocation11 + $0x30] sm:$0xf]
    %v768 = vld [vmem:[#allocation11 + $0x34] sm:$0xf]
    %v769 = vld [vmem:[#allocation11 + $0x38] sm:$0xf]
    %v770 = vld [vmem:[#allocation11 + $0x3c] sm:$0xf]
    %v771 = vld [vmem:[%s6] sm:$0x1]
    %v773 = vperm.slane %v771, 0
    %v791 = vunpack.c.l.b16 %v755
    %v792 = vunpack.c.l.b16 %v756
    %v793 = vunpack.c.l.b16 %v757
    %v794 = vunpack.c.l.b16 %v758
    %v795 = vunpack.c.l.b16 %v759
    %v796 = vunpack.c.l.b16 %v760
    %v797 = vunpack.c.l.b16 %v761
    %v798 = vunpack.c.l.b16 %v762
    %v799 = vunpack.c.l.b16 %v763
    %v800 = vunpack.c.l.b16 %v764
    %v801 = vunpack.c.l.b16 %v765
    %v802 = vunpack.c.l.b16 %v766
    %v803 = vunpack.c.l.b16 %v767
    %v804 = vunpack.c.l.b16 %v768
    %v805 = vunpack.c.l.b16 %v769
    %v806 = vunpack.c.l.b16 %v770
    %v807 = vpack.c.b16 %v792, %v791
    %v808 = vpack.c.b16 %v794, %v793
    %v809 = vpack.c.b16 %v796, %v795
    %v810 = vpack.c.b16 %v798, %v797
    %v811 = vpack.c.b16 %v800, %v799
    %v812 = vpack.c.b16 %v802, %v801
    %v813 = vpack.c.b16 %v804, %v803
    %v814 = vpack.c.b16 %v806, %v805
    %823 = vmatpush.bf16.msra.mxu0 %v814
    %824 = vmatpush.bf16.msra.mxu0 %v813
    %825 = vmatpush.bf16.msra.mxu0 %v812
    %826 = vmatpush.bf16.msra.mxu0 %v811
    %827 = vmatpush.bf16.msra.mxu0 %v810
    %828 = vmatpush.bf16.msra.mxu0 %v809
    %829 = vmatpush.bf16.msra.mxu0 %v808
    %830 = vmatpush.bf16.msra.mxu0 %v807
    %831 = vmatmul.bf16.gmra.mxu0 %v754
    %v832 = vpop.f32.mrf.mxu0
    %v833 = vadd.f32 %v773, %v832
    %v834 = vpop.f32.mrf.mxu0
    %v835 = vadd.f32 %v773, %v834
    %836 = vdwg.mxu0
    %v837 = vadd.f32 %v308, %v833
    %v838 = vadd.f32 %v309, %v835
    %v839 = vld [vmem:[#allocation13] sm:$0x1]
    %v840 = vld [vmem:[#allocation14] sm:$0x1]
    %841 = vadd.xlane.f32.xlu0 %v837
    %v842 = vpop.xlane.xlu0 %841
    %843 = vadd.xlane.f32.xlu0 %v838
    %v844 = vpop.xlane.xlu0 %843
    %v845 = vmul.f32 %v842, %v263
    %v846 = vmul.f32 %v844, %v263
    %v847 = vsub.f32 %v837, %v845
    %v848 = vsub.f32 %v838, %v846
    %v849 = vmul.f32 %v847, %v847
    %v850 = vmul.f32 %v848, %v848
    %851 = vadd.xlane.f32.xlu0 %v849
    %v852 = vpop.xlane.xlu0 %851
    %853 = vadd.xlane.f32.xlu0 %v850
    %v854 = vpop.xlane.xlu0 %853
    %v855 = vmul.f32 %v852, %v263
    %v856 = vmul.f32 %v854, %v263
    %v857 = vadd.f32 %v855, 1e-12
    %v858 = vadd.f32 %v856, 1e-12
    %v859 = vrsqrt.pop %v857
    %v860 = vmul.f32 %v859, %v857
    %v861 = vmul.f32 %v860, %v859
    %v862 = vmul.f32 0.5, %v861
    %v863 = vsub.f32 1.5, %v862
    %v864 = vmul.f32 %v859, %v863
    %vm865 = vweird.f32 %v857
    %vm866 = vweird.f32 %v859
    %vm867 = vmor %vm865, %vm866
    %v868 = vsel %vm867, %v859, %v864
    %v869 = vrsqrt.pop %v858
    %v870 = vmul.f32 %v869, %v858
    %v871 = vmul.f32 %v870, %v869
    %v872 = vmul.f32 0.5, %v871
    %v873 = vsub.f32 1.5, %v872
    %v874 = vmul.f32 %v869, %v873
    %vm875 = vweird.f32 %v858
    %vm876 = vweird.f32 %v869
    %vm877 = vmor %vm875, %vm876
    %v878 = vsel %vm877, %v869, %v874
    %v879 = vmul.f32 %v847, %v868
    %v880 = vmul.f32 %v848, %v878
    %v882 = vperm.slane %v839, 0
    %v884 = vmul.f32 %v879, %v882
    %v885 = vmul.f32 %v880, %v882
    %v887 = vperm.slane %v840, 0
    %v889 = vadd.f32 %v884, %v887
    %v890 = vadd.f32 %v885, %v887
    %v891 = vpack.c.bf16 %v890, %v889
    %v892 = vld [vmem:[#allocation16] sm:$0xff]
    %v893 = vld [vmem:[#allocation16 + $0x8] sm:$0xff]
    %v894 = vld [vmem:[#allocation16 + $0x10] sm:$0xff]
    %v895 = vld [vmem:[#allocation16 + $0x18] sm:$0xff]
    %v896 = vld [vmem:[#allocation16 + $0x20] sm:$0xff]
    %v897 = vld [vmem:[#allocation16 + $0x28] sm:$0xff]
    %v898 = vld [vmem:[#allocation16 + $0x30] sm:$0xff]
    %v899 = vld [vmem:[#allocation16 + $0x38] sm:$0xff]
    %v900 = vld [vmem:[#allocation16 + $0x40] sm:$0xff]
    %v901 = vld [vmem:[#allocation16 + $0x48] sm:$0xff]
    %v902 = vld [vmem:[#allocation16 + $0x50] sm:$0xff]
    %v903 = vld [vmem:[#allocation16 + $0x58] sm:$0xff]
    %v904 = vld [vmem:[#allocation16 + $0x60] sm:$0xff]
    %v905 = vld [vmem:[#allocation16 + $0x68] sm:$0xff]
    %v906 = vld [vmem:[#allocation16 + $0x70] sm:$0xff]
    %v907 = vld [vmem:[#allocation16 + $0x78] sm:$0xff]
    %v908 = vld [vmem:[%s10] sm:$0x3]
    %v910 = vperm.slane %v908, 0
    %v911 = vperm.slane %v908, 1
    %v930 = vunpack.c.l.b16 %v892
    %v931 = vunpack.c.h.b16 %v892
    %v932 = vunpack.c.l.b16 %v893
    %v933 = vunpack.c.h.b16 %v893
    %v934 = vunpack.c.l.b16 %v894
    %v935 = vunpack.c.h.b16 %v894
    %v936 = vunpack.c.l.b16 %v895
    %v937 = vunpack.c.h.b16 %v895
    %v938 = vunpack.c.l.b16 %v896
    %v939 = vunpack.c.h.b16 %v896
    %v940 = vunpack.c.l.b16 %v897
    %v941 = vunpack.c.h.b16 %v897
    %v942 = vunpack.c.l.b16 %v898
    %v943 = vunpack.c.h.b16 %v898
    %v944 = vunpack.c.l.b16 %v899
    %v945 = vunpack.c.h.b16 %v899
    %v946 = vunpack.c.l.b16 %v900
    %v947 = vunpack.c.h.b16 %v900
    %v948 = vunpack.c.l.b16 %v901
    %v949 = vunpack.c.h.b16 %v901
    %v950 = vunpack.c.l.b16 %v902
    %v951 = vunpack.c.h.b16 %v902
    %v952 = vunpack.c.l.b16 %v903
    %v953 = vunpack.c.h.b16 %v903
    %v954 = vunpack.c.l.b16 %v904
    %v955 = vunpack.c.h.b16 %v904
    %v956 = vunpack.c.l.b16 %v905
    %v957 = vunpack.c.h.b16 %v905
    %v958 = vunpack.c.l.b16 %v906
    %v959 = vunpack.c.h.b16 %v906
    %v960 = vunpack.c.l.b16 %v907
    %v961 = vunpack.c.h.b16 %v907
    %v962 = vpack.c.b16 %v932, %v930
    %v963 = vpack.c.b16 %v933, %v931
    %v964 = vpack.c.b16 %v936, %v934
    %v965 = vpack.c.b16 %v937, %v935
    %v966 = vpack.c.b16 %v940, %v938
    %v967 = vpack.c.b16 %v941, %v939
    %v968 = vpack.c.b16 %v944, %v942
    %v969 = vpack.c.b16 %v945, %v943
    %v970 = vpack.c.b16 %v948, %v946
    %v971 = vpack.c.b16 %v949, %v947
    %v972 = vpack.c.b16 %v952, %v950
    %v973 = vpack.c.b16 %v953, %v951
    %v974 = vpack.c.b16 %v956, %v954
    %v975 = vpack.c.b16 %v957, %v955
    %v976 = vpack.c.b16 %v960, %v958
    %v977 = vpack.c.b16 %v961, %v959
    %994 = vmatpush.bf16.msra.mxu0 %v976
    %995 = vmatpush.bf16.msra.mxu0 %v974
    %996 = vmatpush.bf16.msra.mxu0 %v972
    %997 = vmatpush.bf16.msra.mxu0 %v970
    %998 = vmatpush.bf16.msra.mxu0 %v968
    %999 = vmatpush.bf16.msra.mxu0 %v966
    %1000 = vmatpush.bf16.msra.mxu0 %v964
    %1001 = vmatpush.bf16.msra.mxu0 %v962
    %1002 = vmatmul.bf16.gmra.mxu0 %v891
    %v1003 = vpop.f32.mrf.mxu0
    %v1004 = vadd.f32 %v910, %v1003
    %v1005 = vpop.f32.mrf.mxu0
    %v1006 = vadd.f32 %v910, %v1005
    %1007 = vdwg.mxu0
    %1008 = vmatpush.bf16.msra.mxu0 %v977
    %1009 = vmatpush.bf16.msra.mxu0 %v975
    %1010 = vmatpush.bf16.msra.mxu0 %v973
    %1011 = vmatpush.bf16.msra.mxu0 %v971
    %1012 = vmatpush.bf16.msra.mxu0 %v969
    %1013 = vmatpush.bf16.msra.mxu0 %v967
    %1014 = vmatpush.bf16.msra.mxu0 %v965
    %1015 = vmatpush.bf16.msra.mxu0 %v963
    %1016 = vmatmul.bf16.gmra.mxu0 %v891
    %v1017 = vpop.f32.mrf.mxu0
    %v1018 = vadd.f32 %v911, %v1017
    %v1019 = vpop.f32.mrf.mxu0
    %v1020 = vadd.f32 %v911, %v1019
    %1021 = vdwg.mxu0
    %v1022 = vmul.f32 %v1004, 0.5
    %v1023 = vmul.f32 %v1018, 0.5
    %v1024 = vmul.f32 %v1006, 0.5
    %v1025 = vmul.f32 %v1020, 0.5
    %v1026 = vmul.f32 %v1004, 0.044715
    %v1027 = vmul.f32 %v1018, 0.044715
    %v1028 = vmul.f32 %v1006, 0.044715
    %v1029 = vmul.f32 %v1020, 0.044715
    %v1030 = vmul.f32 %v1026, %v1004
    %v1031 = vmul.f32 %v1027, %v1018
    %v1032 = vmul.f32 %v1028, %v1006
    %v1033 = vmul.f32 %v1029, %v1020
    %v1034 = vmul.f32 %v1030, %v1004
    %v1035 = vmul.f32 %v1031, %v1018
    %v1036 = vmul.f32 %v1032, %v1006
    %v1037 = vmul.f32 %v1033, %v1020
    %v1038 = vadd.f32 %v1004, %v1034
    %v1039 = vadd.f32 %v1018, %v1035
    %v1040 = vadd.f32 %v1006, %v1036
    %v1041 = vadd.f32 %v1020, %v1037
    %v1042 = vmul.f32 %v1038, 0.7978846
    %v1043 = vmul.f32 %v1039, 0.7978846
    %v1044 = vmul.f32 %v1040, 0.7978846
    %v1045 = vmul.f32 %v1041, 0.7978846
    %v1046 = vtanh.pop %v1042
    %v1047 = vtanh.pop %v1043
    %v1048 = vtanh.pop %v1044
    %v1049 = vtanh.pop %v1045
    %v1050 = vadd.f32 %v1046, 1.0
    %v1051 = vadd.f32 %v1047, 1.0
    %v1052 = vadd.f32 %v1048, 1.0
    %v1053 = vadd.f32 %v1049, 1.0
    %v1054 = vmul.f32 %v1022, %v1050
    %v1055 = vmul.f32 %v1023, %v1051
    %v1056 = vmul.f32 %v1024, %v1052
    %v1057 = vmul.f32 %v1025, %v1053
    %v1058 = vpack.c.bf16 %v1056, %v1054
    %v1059 = vpack.c.bf16 %v1057, %v1055
    %v1060 = vld [vmem:[#allocation17] sm:$0xf]
    %v1061 = vld [vmem:[#allocation17 + $0x4] sm:$0xf]
    %v1062 = vld [vmem:[#allocation17 + $0x8] sm:$0xf]
    %v1063 = vld [vmem:[#allocation17 + $0xc] sm:$0xf]
    %v1064 = vld [vmem:[#allocation17 + $0x10] sm:$0xf]
    %v1065 = vld [vmem:[#allocation17 + $0x14] sm:$0xf]
    %v1066 = vld [vmem:[#allocation17 + $0x18] sm:$0xf]
    %v1067 = vld [vmem:[#allocation17 + $0x1c] sm:$0xf]
    %v1068 = vld [vmem:[#allocation17 + $0x20] sm:$0xf]
    %v1069 = vld [vmem:[#allocation17 + $0x24] sm:$0xf]
    %v1070 = vld [vmem:[#allocation17 + $0x28] sm:$0xf]
    %v1071 = vld [vmem:[#allocation17 + $0x2c] sm:$0xf]
    %v1072 = vld [vmem:[#allocation17 + $0x30] sm:$0xf]
    %v1073 = vld [vmem:[#allocation17 + $0x34] sm:$0xf]
    %v1074 = vld [vmem:[#allocation17 + $0x38] sm:$0xf]
    %v1075 = vld [vmem:[#allocation17 + $0x3c] sm:$0xf]
    %v1076 = vld [vmem:[#allocation17 + $0x40] sm:$0xf]
    %v1077 = vld [vmem:[#allocation17 + $0x44] sm:$0xf]
    %v1078 = vld [vmem:[#allocation17 + $0x48] sm:$0xf]
    %v1079 = vld [vmem:[#allocation17 + $0x4c] sm:$0xf]
    %v1080 = vld [vmem:[#allocation17 + $0x50] sm:$0xf]
    %v1081 = vld [vmem:[#allocation17 + $0x54] sm:$0xf]
    %v1082 = vld [vmem:[#allocation17 + $0x58] sm:$0xf]
    %v1083 = vld [vmem:[#allocation17 + $0x5c] sm:$0xf]
    %v1084 = vld [vmem:[#allocation17 + $0x60] sm:$0xf]
    %v1085 = vld [vmem:[#allocation17 + $0x64] sm:$0xf]
    %v1086 = vld [vmem:[#allocation17 + $0x68] sm:$0xf]
    %v1087 = vld [vmem:[#allocation17 + $0x6c] sm:$0xf]
    %v1088 = vld [vmem:[#allocation17 + $0x70] sm:$0xf]
    %v1089 = vld [vmem:[#allocation17 + $0x74] sm:$0xf]
    %v1090 = vld [vmem:[#allocation17 + $0x78] sm:$0xf]
    %v1091 = vld [vmem:[#allocation17 + $0x7c] sm:$0xf]
    %v1092 = vld [vmem:[%s12] sm:$0x1]
    %v1094 = vperm.slane %v1092, 0
    %v1128 = vunpack.c.l.b16 %v1060
    %v1129 = vunpack.c.l.b16 %v1061
    %v1130 = vunpack.c.l.b16 %v1062
    %v1131 = vunpack.c.l.b16 %v1063
    %v1132 = vunpack.c.l.b16 %v1064
    %v1133 = vunpack.c.l.b16 %v1065
    %v1134 = vunpack.c.l.b16 %v1066
    %v1135 = vunpack.c.l.b16 %v1067
    %v1136 = vunpack.c.l.b16 %v1068
    %v1137 = vunpack.c.l.b16 %v1069
    %v1138 = vunpack.c.l.b16 %v1070
    %v1139 = vunpack.c.l.b16 %v1071
    %v1140 = vunpack.c.l.b16 %v1072
    %v1141 = vunpack.c.l.b16 %v1073
    %v1142 = vunpack.c.l.b16 %v1074
    %v1143 = vunpack.c.l.b16 %v1075
    %v1144 = vunpack.c.l.b16 %v1076
    %v1145 = vunpack.c.l.b16 %v1077
    %v1146 = vunpack.c.l.b16 %v1078
    %v1147 = vunpack.c.l.b16 %v1079
    %v1148 = vunpack.c.l.b16 %v1080
    %v1149 = vunpack.c.l.b16 %v1081
    %v1150 = vunpack.c.l.b16 %v1082
    %v1151 = vunpack.c.l.b16 %v1083
    %v1152 = vunpack.c.l.b16 %v1084
    %v1153 = vunpack.c.l.b16 %v1085
    %v1154 = vunpack.c.l.b16 %v1086
    %v1155 = vunpack.c.l.b16 %v1087
    %v1156 = vunpack.c.l.b16 %v1088
    %v1157 = vunpack.c.l.b16 %v1089
    %v1158 = vunpack.c.l.b16 %v1090
    %v1159 = vunpack.c.l.b16 %v1091
    %v1160 = vpack.c.b16 %v1129, %v1128
    %v1161 = vpack.c.b16 %v1131, %v1130
    %v1162 = vpack.c.b16 %v1133, %v1132
    %v1163 = vpack.c.b16 %v1135, %v1134
    %v1164 = vpack.c.b16 %v1137, %v1136
    %v1165 = vpack.c.b16 %v1139, %v1138
    %v1166 = vpack.c.b16 %v1141, %v1140
    %v1167 = vpack.c.b16 %v1143, %v1142
    %v1168 = vpack.c.b16 %v1145, %v1144
    %v1169 = vpack.c.b16 %v1147, %v1146
    %v1170 = vpack.c.b16 %v1149, %v1148
    %v1171 = vpack.c.b16 %v1151, %v1150
    %v1172 = vpack.c.b16 %v1153, %v1152
    %v1173 = vpack.c.b16 %v1155, %v1154
    %v1174 = vpack.c.b16 %v1157, %v1156
    %v1175 = vpack.c.b16 %v1159, %v1158
    %1192 = vmatpush.bf16.msra.mxu0 %v1167
    %1193 = vmatpush.bf16.msra.mxu0 %v1166
    %1194 = vmatpush.bf16.msra.mxu0 %v1165
    %1195 = vmatpush.bf16.msra.mxu0 %v1164
    %1196 = vmatpush.bf16.msra.mxu0 %v1163
    %1197 = vmatpush.bf16.msra.mxu0 %v1162
    %1198 = vmatpush.bf16.msra.mxu0 %v1161
    %1199 = vmatpush.bf16.msra.mxu0 %v1160
    %1200 = vmatmul.bf16.gmra.mxu0 %v1058
    %v1201 = vpop.f32.mrf.mxu0
    %v1202 = vadd.f32 %v1094, %v1201
    %v1203 = vpop.f32.mrf.mxu0
    %v1204 = vadd.f32 %v1094, %v1203
    %1205 = vdwg.mxu0
    %1206 = vmatpush.bf16.msra.mxu0 %v1175
    %1207 = vmatpush.bf16.msra.mxu0 %v1174
    %1208 = vmatpush.bf16.msra.mxu0 %v1173
    %1209 = vmatpush.bf16.msra.mxu0 %v1172
    %1210 = vmatpush.bf16.msra.mxu0 %v1171
    %1211 = vmatpush.bf16.msra.mxu0 %v1170
    %1212 = vmatpush.bf16.msra.mxu0 %v1169
    %1213 = vmatpush.bf16.msra.mxu0 %v1168
    %1214 = vmatmul.bf16.gmra.mxu0 %v1059
    %v1215 = vpop.f32.mrf.mxu0
    %v1216 = vadd.f32 %v1202, %v1215
    %v1217 = vpop.f32.mrf.mxu0
    %v1218 = vadd.f32 %v1204, %v1217
    %1219 = vdwg.mxu0
    %v1220 = vadd.f32 %v889, %v1216
    %v1221 = vadd.f32 %v890, %v1218
    %v1222 = vld [vmem:[%s13] sm:$0x1]
    %v1223 = vld [vmem:[%s14] sm:$0x1]
    %1224 = vadd.xlane.f32.xlu0 %v1220
    %v1225 = vpop.xlane.xlu0 %1224
    %1226 = vadd.xlane.f32.xlu0 %v1221
    %v1227 = vpop.xlane.xlu0 %1226
    %v1228 = vmul.f32 %v1225, %v263
    %v1229 = vmul.f32 %v1227, %v263
    %v1230 = vsub.f32 %v1220, %v1228
    %v1231 = vsub.f32 %v1221, %v1229
    %v1232 = vmul.f32 %v1230, %v1230
    %v1233 = vmul.f32 %v1231, %v1231
    %1234 = vadd.xlane.f32.xlu0 %v1232
    %v1235 = vpop.xlane.xlu0 %1234
    %1236 = vadd.xlane.f32.xlu0 %v1233
    %v1237 = vpop.xlane.xlu0 %1236
    %v1238 = vmul.f32 %v1235, %v263
    %v1239 = vmul.f32 %v1237, %v263
    %v1240 = vadd.f32 %v1238, 1e-12
    %v1241 = vadd.f32 %v1239, 1e-12
    %v1242 = vrsqrt.pop %v1240
    %v1243 = vmul.f32 %v1242, %v1240
    %v1244 = vmul.f32 %v1243, %v1242
    %v1245 = vmul.f32 0.5, %v1244
    %v1246 = vsub.f32 1.5, %v1245
    %v1247 = vmul.f32 %v1242, %v1246
    %vm1248 = vweird.f32 %v1240
    %vm1249 = vweird.f32 %v1242
    %vm1250 = vmor %vm1248, %vm1249
    %v1251 = vsel %vm1250, %v1242, %v1247
    %v1252 = vrsqrt.pop %v1241
    %v1253 = vmul.f32 %v1252, %v1241
    %v1254 = vmul.f32 %v1253, %v1252
    %v1255 = vmul.f32 0.5, %v1254
    %v1256 = vsub.f32 1.5, %v1255
    %v1257 = vmul.f32 %v1252, %v1256
    %vm1258 = vweird.f32 %v1241
    %vm1259 = vweird.f32 %v1252
    %vm1260 = vmor %vm1258, %vm1259
    %v1261 = vsel %vm1260, %v1252, %v1257
    %v1262 = vmul.f32 %v1230, %v1251
    %v1263 = vmul.f32 %v1231, %v1261
    %v1265 = vperm.slane %v1222, 0
    %v1267 = vmul.f32 %v1262, %v1265
    %v1268 = vmul.f32 %v1263, %v1265
    %v1270 = vperm.slane %v1223, 0
    %v1272 = vadd.f32 %v1267, %v1270
    %v1273 = vadd.f32 %v1268, %v1270
    %v1274 = vpack.c.bf16 %v1273, %v1272
    %s1275 = scalar_lea.vmem [#allocation8], 192
    %v1276 = vld [vmem:[%s1275] sm:$0xff]
    %v1277 = vld [vmem:[%s1275 + $0x8] sm:$0xf]
    %v1278 = vld [vmem:[%s1275 + $0xc] sm:$0xff]
    %v1279 = vld [vmem:[%s1275 + $0x14] sm:$0xf]
    %v1280 = vld [vmem:[%s1275 + $0x18] sm:$0xff]
    %v1281 = vld [vmem:[%s1275 + $0x20] sm:$0xf]
    %v1282 = vld [vmem:[%s1275 + $0x24] sm:$0xff]
    %v1283 = vld [vmem:[%s1275 + $0x2c] sm:$0xf]
    %v1284 = vld [vmem:[%s1275 + $0x30] sm:$0xff]
    %v1285 = vld [vmem:[%s1275 + $0x38] sm:$0xf]
    %v1286 = vld [vmem:[%s1275 + $0x3c] sm:$0xff]
    %v1287 = vld [vmem:[%s1275 + $0x44] sm:$0xf]
    %v1288 = vld [vmem:[%s1275 + $0x48] sm:$0xff]
    %v1289 = vld [vmem:[%s1275 + $0x50] sm:$0xf]
    %v1290 = vld [vmem:[%s1275 + $0x54] sm:$0xff]
    %v1291 = vld [vmem:[%s1275 + $0x5c] sm:$0xf]
    %v1292 = vld [vmem:[%s1275 + $0x60] sm:$0xff]
    %v1293 = vld [vmem:[%s1275 + $0x68] sm:$0xf]
    %v1294 = vld [vmem:[%s1275 + $0x6c] sm:$0xff]
    %v1295 = vld [vmem:[%s1275 + $0x74] sm:$0xf]
    %v1296 = vld [vmem:[%s1275 + $0x78] sm:$0xff]
    %v1297 = vld [vmem:[%s1275 + $0x80] sm:$0xf]
    %v1298 = vld [vmem:[%s1275 + $0x84] sm:$0xff]
    %v1299 = vld [vmem:[%s1275 + $0x8c] sm:$0xf]
    %v1300 = vld [vmem:[%s1275 + $0x90] sm:$0xff]
    %v1301 = vld [vmem:[%s1275 + $0x98] sm:$0xf]
    %v1302 = vld [vmem:[%s1275 + $0x9c] sm:$0xff]
    %v1303 = vld [vmem:[%s1275 + $0xa4] sm:$0xf]
    %v1304 = vld [vmem:[%s1275 + $0xa8] sm:$0xff]
    %v1305 = vld [vmem:[%s1275 + $0xb0] sm:$0xf]
    %v1306 = vld [vmem:[%s1275 + $0xb4] sm:$0xff]
    %v1307 = vld [vmem:[%s1275 + $0xbc] sm:$0xf]
    %s1308 = scalar_lea.vmem [#allocation10], 3
    %v1309 = vld [vmem:[%s1308] sm:$0x7]
    %v1311 = vperm.slane %v1309, 0
    %v1312 = vperm.slane %v1309, 1
    %v1313 = vperm.slane %v1309, 2
    %v1349 = vunpack.c.l.b16 %v1276
    %v1350 = vunpack.c.h.b16 %v1276
    %v1351 = vunpack.c.l.b16 %v1277
    %v1352 = vunpack.c.l.b16 %v1278
    %v1353 = vunpack.c.h.b16 %v1278
    %v1354 = vunpack.c.l.b16 %v1279
    %v1355 = vunpack.c.l.b16 %v1280
    %v1356 = vunpack.c.h.b16 %v1280
    %v1357 = vunpack.c.l.b16 %v1281
    %v1358 = vunpack.c.l.b16 %v1282
    %v1359 = vunpack.c.h.b16 %v1282
    %v1360 = vunpack.c.l.b16 %v1283
    %v1361 = vunpack.c.l.b16 %v1284
    %v1362 = vunpack.c.h.b16 %v1284
    %v1363 = vunpack.c.l.b16 %v1285
    %v1364 = vunpack.c.l.b16 %v1286
    %v1365 = vunpack.c.h.b16 %v1286
    %v1366 = vunpack.c.l.b16 %v1287
    %v1367 = vunpack.c.l.b16 %v1288
    %v1368 = vunpack.c.h.b16 %v1288
    %v1369 = vunpack.c.l.b16 %v1289
    %v1370 = vunpack.c.l.b16 %v1290
    %v1371 = vunpack.c.h.b16 %v1290
    %v1372 = vunpack.c.l.b16 %v1291
    %v1373 = vunpack.c.l.b16 %v1292
    %v1374 = vunpack.c.h.b16 %v1292
    %v1375 = vunpack.c.l.b16 %v1293
    %v1376 = vunpack.c.l.b16 %v1294
    %v1377 = vunpack.c.h.b16 %v1294
    %v1378 = vunpack.c.l.b16 %v1295
    %v1379 = vunpack.c.l.b16 %v1296
    %v1380 = vunpack.c.h.b16 %v1296
    %v1381 = vunpack.c.l.b16 %v1297
    %v1382 = vunpack.c.l.b16 %v1298
    %v1383 = vunpack.c.h.b16 %v1298
    %v1384 = vunpack.c.l.b16 %v1299
    %v1385 = vunpack.c.l.b16 %v1300
    %v1386 = vunpack.c.h.b16 %v1300
    %v1387 = vunpack.c.l.b16 %v1301
    %v1388 = vunpack.c.l.b16 %v1302
    %v1389 = vunpack.c.h.b16 %v1302
    %v1390 = vunpack.c.l.b16 %v1303
    %v1391 = vunpack.c.l.b16 %v1304
    %v1392 = vunpack.c.h.b16 %v1304
    %v1393 = vunpack.c.l.b16 %v1305
    %v1394 = vunpack.c.l.b16 %v1306
    %v1395 = vunpack.c.h.b16 %v1306
    %v1396 = vunpack.c.l.b16 %v1307
    %v1397 = vpack.c.b16 %v1352, %v1349
    %v1398 = vpack.c.b16 %v1353, %v1350
    %v1399 = vpack.c.b16 %v1354, %v1351
    %v1400 = vpack.c.b16 %v1358, %v1355
    %v1401 = vpack.c.b16 %v1359, %v1356
    %v1402 = vpack.c.b16 %v1360, %v1357
    %v1403 = vpack.c.b16 %v1364, %v1361
    %v1404 = vpack.c.b16 %v1365, %v1362
    %v1405 = vpack.c.b16 %v1366, %v1363
    %v1406 = vpack.c.b16 %v1370, %v1367
    %v1407 = vpack.c.b16 %v1371, %v1368
    %v1408 = vpack.c.b16 %v1372, %v1369
    %v1409 = vpack.c.b16 %v1376, %v1373
    %v1410 = vpack.c.b16 %v1377, %v1374
    %v1411 = vpack.c.b16 %v1378, %v1375
    %v1412 = vpack.c.b16 %v1382, %v1379
    %v1413 = vpack.c.b16 %v1383, %v1380
    %v1414 = vpack.c.b16 %v1384, %v1381
    %v1415 = vpack.c.b16 %v1388, %v1385
    %v1416 = vpack.c.b16 %v1389, %v1386
    %v1417 = vpack.c.b16 %v1390, %v1387
    %v1418 = vpack.c.b16 %v1394, %v1391
    %v1419 = vpack.c.b16 %v1395, %v1392
    %v1420 = vpack.c.b16 %v1396, %v1393
    %1445 = vmatpush.bf16.msra.mxu0 %v1418
    %1446 = vmatpush.bf16.msra.mxu0 %v1415
    %1447 = vmatpush.bf16.msra.mxu0 %v1412
    %1448 = vmatpush.bf16.msra.mxu0 %v1409
    %1449 = vmatpush.bf16.msra.mxu0 %v1406
    %1450 = vmatpush.bf16.msra.mxu0 %v1403
    %1451 = vmatpush.bf16.msra.mxu0 %v1400
    %1452 = vmatpush.bf16.msra.mxu0 %v1397
    %1453 = vmatmul.bf16.gmra.mxu0 %v1274
    %v1454 = vpop.f32.mrf.mxu0
    %v1455 = vadd.f32 %v1311, %v1454
    %v1456 = vpop.f32.mrf.mxu0
    %v1457 = vadd.f32 %v1311, %v1456
    %1458 = vdwg.mxu0
    %1459 = vmatpush.bf16.msra.mxu0 %v1419
    %1460 = vmatpush.bf16.msra.mxu0 %v1416
    %1461 = vmatpush.bf16.msra.mxu0 %v1413
    %1462 = vmatpush.bf16.msra.mxu0 %v1410
    %1463 = vmatpush.bf16.msra.mxu0 %v1407
    %1464 = vmatpush.bf16.msra.mxu0 %v1404
    %1465 = vmatpush.bf16.msra.mxu0 %v1401
    %1466 = vmatpush.bf16.msra.mxu0 %v1398
    %1467 = vmatmul.bf16.gmra.mxu0 %v1274
    %v1468 = vpop.f32.mrf.mxu0
    %v1469 = vadd.f32 %v1312, %v1468
    %v1470 = vpop.f32.mrf.mxu0
    %v1471 = vadd.f32 %v1312, %v1470
    %1472 = vdwg.mxu0
    %1473 = vmatpush.bf16.msra.mxu0 %v1420
    %1474 = vmatpush.bf16.msra.mxu0 %v1417
    %1475 = vmatpush.bf16.msra.mxu0 %v1414
    %1476 = vmatpush.bf16.msra.mxu0 %v1411
    %1477 = vmatpush.bf16.msra.mxu0 %v1408
    %1478 = vmatpush.bf16.msra.mxu0 %v1405
    %1479 = vmatpush.bf16.msra.mxu0 %v1402
    %1480 = vmatpush.bf16.msra.mxu0 %v1399
    %1481 = vmatmul.bf16.gmra.mxu0 %v1274
    %v1482 = vpop.f32.mrf.mxu0
    %v1483 = vadd.f32 %v1313, %v1482
    %v1484 = vpop.f32.mrf.mxu0
    %v1485 = vadd.f32 %v1313, %v1484
    %1486 = vdwg.mxu0
    %v1487 = vsel %vm314, %v1469, 0.0
    %v1488 = vsel %vm314, %v1471, 0.0
    %v1489 = vsel %vm317, %v1469, 0.0
    %v1490 = vsel %vm317, %v1471, 0.0
    %v1491 = vsel %vm314, %v1483, 0.0
    %v1492 = vsel %vm314, %v1485, 0.0
    %v1493 = vsel %vm317, %v1483, 0.0
    %v1494 = vsel %vm317, %v1485, 0.0
    %1495 = vmatpush.xpose.msra.mxu0 0.0
    %1496 = vmatpush.xpose.msra.mxu0 0.0
    %1497 = vmatpush.xpose.msra.mxu0 0.0
    %1498 = vmatpush.xpose.msra.mxu0 0.0
    %1499 = vmatpush.xpose.msra.mxu0 0.0
    %1500 = vmatpush.xpose.msra.mxu0 0.0
    %1501 = vmatpush.xpose.msra.mxu0 0.0
    %1502 = vmatpush.xpose.msra.mxu0 0.0
    %1503 = vmatpush.xpose.msra.mxu0 0.0
    %1504 = vmatpush.xpose.msra.mxu0 0.0
    %1505 = vmatpush.xpose.msra.mxu0 0.0
    %1506 = vmatpush.xpose.msra.mxu0 0.0
    %1507 = vmatpush.xpose.msra.mxu0 0.0
    %1508 = vmatpush.xpose.msra.mxu0 0.0
    %1509 = vmatpush.xpose.msra.mxu0 0.0
    %1510 = vmatpush.xpose.msra.mxu0 %v1487
    %1511 = vmatmul.f32.gmra.mxu0 %v1455
    %v1512 = vpop.f32.mrf.mxu0
    %v1513 = vadd.f32 0.0, %v1512
    %1514 = vdwg.mxu0
    %1515 = vmatpush.xpose.msra.mxu0 0.0
    %1516 = vmatpush.xpose.msra.mxu0 0.0
    %1517 = vmatpush.xpose.msra.mxu0 0.0
    %1518 = vmatpush.xpose.msra.mxu0 0.0
    %1519 = vmatpush.xpose.msra.mxu0 0.0
    %1520 = vmatpush.xpose.msra.mxu0 0.0
    %1521 = vmatpush.xpose.msra.mxu0 0.0
    %1522 = vmatpush.xpose.msra.mxu0 0.0
    %1523 = vmatpush.xpose.msra.mxu0 0.0
    %1524 = vmatpush.xpose.msra.mxu0 0.0
    %1525 = vmatpush.xpose.msra.mxu0 0.0
    %1526 = vmatpush.xpose.msra.mxu0 0.0
    %1527 = vmatpush.xpose.msra.mxu0 0.0
    %1528 = vmatpush.xpose.msra.mxu0 0.0
    %1529 = vmatpush.xpose.msra.mxu0 0.0
    %1530 = vmatpush.xpose.msra.mxu0 %v1489
    %1531 = vmatmul.f32.gmra.mxu0 %v1455
    %v1532 = vpop.f32.mrf.mxu0
    %v1533 = vadd.f32 0.0, %v1532
    %1534 = vdwg.mxu0
    %1535 = vmatpush.xpose.msra.mxu0 0.0
    %1536 = vmatpush.xpose.msra.mxu0 0.0
    %1537 = vmatpush.xpose.msra.mxu0 0.0
    %1538 = vmatpush.xpose.msra.mxu0 0.0
    %1539 = vmatpush.xpose.msra.mxu0 0.0
    %1540 = vmatpush.xpose.msra.mxu0 0.0
    %1541 = vmatpush.xpose.msra.mxu0 0.0
    %1542 = vmatpush.xpose.msra.mxu0 0.0
    %1543 = vmatpush.xpose.msra.mxu0 0.0
    %1544 = vmatpush.xpose.msra.mxu0 0.0
    %1545 = vmatpush.xpose.msra.mxu0 0.0
    %1546 = vmatpush.xpose.msra.mxu0 0.0
    %1547 = vmatpush.xpose.msra.mxu0 0.0
    %1548 = vmatpush.xpose.msra.mxu0 0.0
    %1549 = vmatpush.xpose.msra.mxu0 0.0
    %1550 = vmatpush.xpose.msra.mxu0 %v1488
    %1551 = vmatmul.f32.gmra.mxu0 %v1457
    %v1552 = vpop.f32.mrf.mxu0
    %v1553 = vadd.f32 0.0, %v1552
    %1554 = vdwg.mxu0
    %1555 = vmatpush.xpose.msra.mxu0 0.0
    %1556 = vmatpush.xpose.msra.mxu0 0.0
    %1557 = vmatpush.xpose.msra.mxu0 0.0
    %1558 = vmatpush.xpose.msra.mxu0 0.0
    %1559 = vmatpush.xpose.msra.mxu0 0.0
    %1560 = vmatpush.xpose.msra.mxu0 0.0
    %1561 = vmatpush.xpose.msra.mxu0 0.0
    %1562 = vmatpush.xpose.msra.mxu0 0.0
    %1563 = vmatpush.xpose.msra.mxu0 0.0
    %1564 = vmatpush.xpose.msra.mxu0 0.0
    %1565 = vmatpush.xpose.msra.mxu0 0.0
    %1566 = vmatpush.xpose.msra.mxu0 0.0
    %1567 = vmatpush.xpose.msra.mxu0 0.0
    %1568 = vmatpush.xpose.msra.mxu0 0.0
    %1569 = vmatpush.xpose.msra.mxu0 0.0
    %1570 = vmatpush.xpose.msra.mxu0 %v1490
    %1571 = vmatmul.f32.gmra.mxu0 %v1457
    %v1572 = vpop.f32.mrf.mxu0
    %v1573 = vadd.f32 0.0, %v1572
    %1574 = vdwg.mxu0
    %v1575 = vsel %vm617, %v1513, -inf
    %1576 = vmax.xlane.f32.xlu0 %v1575
    %v1577 = vpop.xlane.xlu0 %1576
    %v1578 = vsel %vm617, %v1533, -inf
    %1579 = vmax.xlane.f32.xlu0 %v1578
    %v1580 = vpop.xlane.xlu0 %1579
    %v1581 = vsel %vm617, %v1553, -inf
    %1582 = vmax.xlane.f32.xlu0 %v1581
    %v1583 = vpop.xlane.xlu0 %1582
    %v1584 = vsel %vm617, %v1573, -inf
    %1585 = vmax.xlane.f32.xlu0 %v1584
    %v1586 = vpop.xlane.xlu0 %1585
    %v1587 = vsub.f32 %v1513, %v1577
    %v1588 = vsub.f32 %v1533, %v1580
    %v1589 = vsub.f32 %v1553, %v1583
    %v1590 = vsub.f32 %v1573, %v1586
    %v1591 = vmul.f32 %v1587, 1.442695
    %v1592 = vpow.pop %v1591
    %v1593 = vmul.f32 %v1588, 1.442695
    %v1594 = vpow.pop %v1593
    %v1595 = vmul.f32 %v1589, 1.442695
    %v1596 = vpow.pop %v1595
    %v1597 = vmul.f32 %v1590, 1.442695
    %v1598 = vpow.pop %v1597
    %v1599 = vsel %vm617, %v1592, 0.0
    %1600 = vadd.xlane.f32.xlu0 %v1599
    %v1601 = vpop.xlane.xlu0 %1600
    %v1602 = vsel %vm617, %v1594, 0.0
    %1603 = vadd.xlane.f32.xlu0 %v1602
    %v1604 = vpop.xlane.xlu0 %1603
    %v1605 = vsel %vm617, %v1596, 0.0
    %1606 = vadd.xlane.f32.xlu0 %v1605
    %v1607 = vpop.xlane.xlu0 %1606
    %v1608 = vsel %vm617, %v1598, 0.0
    %1609 = vadd.xlane.f32.xlu0 %v1608
    %v1610 = vpop.xlane.xlu0 %1609
    %v1611 = vrcp.pop %v1601
    %v1612 = vrcp.pop %v1604
    %v1613 = vrcp.pop %v1607
    %v1614 = vrcp.pop %v1610
    %v1615 = vmul.f32 %v1592, %v1611
    %v1616 = vmul.f32 %v1594, %v1612
    %v1617 = vmul.f32 %v1596, %v1613
    %v1618 = vmul.f32 %v1598, %v1614
    %v1620 = vsel %vm617, %v1616, 0
    %1622 = vmatpush.msra.mxu0 0.0
    %1623 = vmatpush.msra.mxu0 0.0
    %1624 = vmatpush.msra.mxu0 0.0
    %1625 = vmatpush.msra.mxu0 0.0
    %1626 = vmatpush.msra.mxu0 0.0
    %1627 = vmatpush.msra.mxu0 0.0
    %1628 = vmatpush.msra.mxu0 0.0
    %1629 = vmatpush.msra.mxu0 0.0
    %1630 = vmatpush.msra.mxu0 0.0
    %1631 = vmatpush.msra.mxu0 0.0
    %1632 = vmatpush.msra.mxu0 0.0
    %1633 = vmatpush.msra.mxu0 0.0
    %1634 = vmatpush.msra.mxu0 0.0
    %1635 = vmatpush.msra.mxu0 0.0
    %1636 = vmatpush.msra.mxu0 0.0
    %1637 = vmatpush.msra.mxu0 %v1493
    %1638 = vmatmul.f32.gmra.mxu0 %v1620
    %v1639 = vpop.f32.mrf.mxu0
    %v1640 = vadd.f32 0.0, %v1639
    %1641 = vdwg.mxu0
    %v1643 = vsel %vm617, %v1615, 0
    %1645 = vmatpush.msra.mxu0 0.0
    %1646 = vmatpush.msra.mxu0 0.0
    %1647 = vmatpush.msra.mxu0 0.0
    %1648 = vmatpush.msra.mxu0 0.0
    %1649 = vmatpush.msra.mxu0 0.0
    %1650 = vmatpush.msra.mxu0 0.0
    %1651 = vmatpush.msra.mxu0 0.0
    %1652 = vmatpush.msra.mxu0 0.0
    %1653 = vmatpush.msra.mxu0 0.0
    %1654 = vmatpush.msra.mxu0 0.0
    %1655 = vmatpush.msra.mxu0 0.0
    %1656 = vmatpush.msra.mxu0 0.0
    %1657 = vmatpush.msra.mxu0 0.0
    %1658 = vmatpush.msra.mxu0 0.0
    %1659 = vmatpush.msra.mxu0 0.0
    %1660 = vmatpush.msra.mxu0 %v1491
    %1661 = vmatmul.f32.gmra.mxu0 %v1643
    %v1662 = vpop.f32.mrf.mxu0
    %v1663 = vadd.f32 %v1640, %v1662
    %1664 = vdwg.mxu0
    %v1666 = vsel %vm617, %v1618, 0
    %1668 = vmatpush.msra.mxu0 0.0
    %1669 = vmatpush.msra.mxu0 0.0
    %1670 = vmatpush.msra.mxu0 0.0
    %1671 = vmatpush.msra.mxu0 0.0
    %1672 = vmatpush.msra.mxu0 0.0
    %1673 = vmatpush.msra.mxu0 0.0
    %1674 = vmatpush.msra.mxu0 0.0
    %1675 = vmatpush.msra.mxu0 0.0
    %1676 = vmatpush.msra.mxu0 0.0
    %1677 = vmatpush.msra.mxu0 0.0
    %1678 = vmatpush.msra.mxu0 0.0
    %1679 = vmatpush.msra.mxu0 0.0
    %1680 = vmatpush.msra.mxu0 0.0
    %1681 = vmatpush.msra.mxu0 0.0
    %1682 = vmatpush.msra.mxu0 0.0
    %1683 = vmatpush.msra.mxu0 %v1494
    %1684 = vmatmul.f32.gmra.mxu0 %v1666
    %v1685 = vpop.f32.mrf.mxu0
    %v1686 = vadd.f32 0.0, %v1685
    %1687 = vdwg.mxu0
    %v1689 = vsel %vm617, %v1617, 0
    %1691 = vmatpush.msra.mxu0 0.0
    %1692 = vmatpush.msra.mxu0 0.0
    %1693 = vmatpush.msra.mxu0 0.0
    %1694 = vmatpush.msra.mxu0 0.0
    %1695 = vmatpush.msra.mxu0 0.0
    %1696 = vmatpush.msra.mxu0 0.0
    %1697 = vmatpush.msra.mxu0 0.0
    %1698 = vmatpush.msra.mxu0 0.0
    %1699 = vmatpush.msra.mxu0 0.0
    %1700 = vmatpush.msra.mxu0 0.0
    %1701 = vmatpush.msra.mxu0 0.0
    %1702 = vmatpush.msra.mxu0 0.0
    %1703 = vmatpush.msra.mxu0 0.0
    %1704 = vmatpush.msra.mxu0 0.0
    %1705 = vmatpush.msra.mxu0 0.0
    %1706 = vmatpush.msra.mxu0 %v1492
    %1707 = vmatmul.f32.gmra.mxu0 %v1689
    %v1708 = vpop.f32.mrf.mxu0
    %v1709 = vadd.f32 %v1686, %v1708
    %1710 = vdwg.mxu0
    %v1711 = vpack.c.bf16 %v1709, %v1663
    %s1712 = scalar_lea.vmem [#allocation11], 64
    %v1713 = vld [vmem:[%s1712] sm:$0xf]
    %v1714 = vld [vmem:[%s1712 + $0x4] sm:$0xf]
    %v1715 = vld [vmem:[%s1712 + $0x8] sm:$0xf]
    %v1716 = vld [vmem:[%s1712 + $0xc] sm:$0xf]
    %v1717 = vld [vmem:[%s1712 + $0x10] sm:$0xf]
    %v1718 = vld [vmem:[%s1712 + $0x14] sm:$0xf]
    %v1719 = vld [vmem:[%s1712 + $0x18] sm:$0xf]
    %v1720 = vld [vmem:[%s1712 + $0x1c] sm:$0xf]
    %v1721 = vld [vmem:[%s1712 + $0x20] sm:$0xf]
    %v1722 = vld [vmem:[%s1712 + $0x24] sm:$0xf]
    %v1723 = vld [vmem:[%s1712 + $0x28] sm:$0xf]
    %v1724 = vld [vmem:[%s1712 + $0x2c] sm:$0xf]
    %v1725 = vld [vmem:[%s1712 + $0x30] sm:$0xf]
    %v1726 = vld [vmem:[%s1712 + $0x34] sm:$0xf]
    %v1727 = vld [vmem:[%s1712 + $0x38] sm:$0xf]
    %v1728 = vld [vmem:[%s1712 + $0x3c] sm:$0xf]
    %s1729 = scalar_lea.vmem %s6, 1
    %v1730 = vld [vmem:[%s1729] sm:$0x1]
    %v1732 = vperm.slane %v1730, 0
    %v1750 = vunpack.c.l.b16 %v1713
    %v1751 = vunpack.c.l.b16 %v1714
    %v1752 = vunpack.c.l.b16 %v1715
    %v1753 = vunpack.c.l.b16 %v1716
    %v1754 = vunpack.c.l.b16 %v1717
    %v1755 = vunpack.c.l.b16 %v1718
    %v1756 = vunpack.c.l.b16 %v1719
    %v1757 = vunpack.c.l.b16 %v1720
    %v1758 = vunpack.c.l.b16 %v1721
    %v1759 = vunpack.c.l.b16 %v1722
    %v1760 = vunpack.c.l.b16 %v1723
    %v1761 = vunpack.c.l.b16 %v1724
    %v1762 = vunpack.c.l.b16 %v1725
    %v1763 = vunpack.c.l.b16 %v1726
    %v1764 = vunpack.c.l.b16 %v1727
    %v1765 = vunpack.c.l.b16 %v1728
    %v1766 = vpack.c.b16 %v1751, %v1750
    %v1767 = vpack.c.b16 %v1753, %v1752
    %v1768 = vpack.c.b16 %v1755, %v1754
    %v1769 = vpack.c.b16 %v1757, %v1756
    %v1770 = vpack.c.b16 %v1759, %v1758
    %v1771 = vpack.c.b16 %v1761, %v1760
    %v1772 = vpack.c.b16 %v1763, %v1762
    %v1773 = vpack.c.b16 %v1765, %v1764
    %1782 = vmatpush.bf16.msra.mxu0 %v1773
    %1783 = vmatpush.bf16.msra.mxu0 %v1772
    %1784 = vmatpush.bf16.msra.mxu0 %v1771
    %1785 = vmatpush.bf16.msra.mxu0 %v1770
    %1786 = vmatpush.bf16.msra.mxu0 %v1769
    %1787 = vmatpush.bf16.msra.mxu0 %v1768
    %1788 = vmatpush.bf16.msra.mxu0 %v1767
    %1789 = vmatpush.bf16.msra.mxu0 %v1766
    %1790 = vmatmul.bf16.gmra.mxu0 %v1711
    %v1791 = vpop.f32.mrf.mxu0
    %v1792 = vadd.f32 %v1732, %v1791
    %v1793 = vpop.f32.mrf.mxu0
    %v1794 = vadd.f32 %v1732, %v1793
    %1795 = vdwg.mxu0
    %v1796 = vadd.f32 %v1272, %v1792
    %v1797 = vadd.f32 %v1273, %v1794
    %s1798 = scalar_lea.vmem [#allocation13], 1
    %v1799 = vld [vmem:[%s1798] sm:$0x1]
    %s1800 = scalar_lea.vmem [#allocation14], 1
    %v1801 = vld [vmem:[%s1800] sm:$0x1]
    %1802 = vadd.xlane.f32.xlu0 %v1796
    %v1803 = vpop.xlane.xlu0 %1802
    %1804 = vadd.xlane.f32.xlu0 %v1797
    %v1805 = vpop.xlane.xlu0 %1804
    %v1806 = vmul.f32 %v1803, %v263
    %v1807 = vmul.f32 %v1805, %v263
    %v1808 = vsub.f32 %v1796, %v1806
    %v1809 = vsub.f32 %v1797, %v1807
    %v1810 = vmul.f32 %v1808, %v1808
    %v1811 = vmul.f32 %v1809, %v1809
    %1812 = vadd.xlane.f32.xlu0 %v1810
    %v1813 = vpop.xlane.xlu0 %1812
    %1814 = vadd.xlane.f32.xlu0 %v1811
    %v1815 = vpop.xlane.xlu0 %1814
    %v1816 = vmul.f32 %v1813, %v263
    %v1817 = vmul.f32 %v1815, %v263
    %v1818 = vadd.f32 %v1816, 1e-12
    %v1819 = vadd.f32 %v1817, 1e-12
    %v1820 = vrsqrt.pop %v1818
    %v1821 = vmul.f32 %v1820, %v1818
    %v1822 = vmul.f32 %v1821, %v1820
    %v1823 = vmul.f32 0.5, %v1822
    %v1824 = vsub.f32 1.5, %v1823
    %v1825 = vmul.f32 %v1820, %v1824
    %vm1826 = vweird.f32 %v1818
    %vm1827 = vweird.f32 %v1820
    %vm1828 = vmor %vm1826, %vm1827
    %v1829 = vsel %vm1828, %v1820, %v1825
    %v1830 = vrsqrt.pop %v1819
    %v1831 = vmul.f32 %v1830, %v1819
    %v1832 = vmul.f32 %v1831, %v1830
    %v1833 = vmul.f32 0.5, %v1832
    %v1834 = vsub.f32 1.5, %v1833
    %v1835 = vmul.f32 %v1830, %v1834
    %vm1836 = vweird.f32 %v1819
    %vm1837 = vweird.f32 %v1830
    %vm1838 = vmor %vm1836, %vm1837
    %v1839 = vsel %vm1838, %v1830, %v1835
    %v1840 = vmul.f32 %v1808, %v1829
    %v1841 = vmul.f32 %v1809, %v1839
    %v1843 = vperm.slane %v1799, 0
    %v1845 = vmul.f32 %v1840, %v1843
    %v1846 = vmul.f32 %v1841, %v1843
    %v1848 = vperm.slane %v1801, 0
    %v1850 = vadd.f32 %v1845, %v1848
    %v1851 = vadd.f32 %v1846, %v1848
    %v1852 = vpack.c.bf16 %v1851, %v1850
    %s1853 = scalar_lea.vmem [#allocation16], 128
    %v1854 = vld [vmem:[%s1853] sm:$0xff]
    %v1855 = vld [vmem:[%s1853 + $0x8] sm:$0xff]
    %v1856 = vld [vmem:[%s1853 + $0x10] sm:$0xff]
    %v1857 = vld [vmem:[%s1853 + $0x18] sm:$0xff]
    %v1858 = vld [vmem:[%s1853 + $0x20] sm:$0xff]
    %v1859 = vld [vmem:[%s1853 + $0x28] sm:$0xff]
    %v1860 = vld [vmem:[%s1853 + $0x30] sm:$0xff]
    %v1861 = vld [vmem:[%s1853 + $0x38] sm:$0xff]
    %v1862 = vld [vmem:[%s1853 + $0x40] sm:$0xff]
    %v1863 = vld [vmem:[%s1853 + $0x48] sm:$0xff]
    %v1864 = vld [vmem:[%s1853 + $0x50] sm:$0xff]
    %v1865 = vld [vmem:[%s1853 + $0x58] sm:$0xff]
    %v1866 = vld [vmem:[%s1853 + $0x60] sm:$0xff]
    %v1867 = vld [vmem:[%s1853 + $0x68] sm:$0xff]
    %v1868 = vld [vmem:[%s1853 + $0x70] sm:$0xff]
    %v1869 = vld [vmem:[%s1853 + $0x78] sm:$0xff]
    %s1870 = scalar_lea.vmem %s10, 2
    %v1871 = vld [vmem:[%s1870] sm:$0x3]
    %v1873 = vperm.slane %v1871, 0
    %v1874 = vperm.slane %v1871, 1
    %v1893 = vunpack.c.l.b16 %v1854
    %v1894 = vunpack.c.h.b16 %v1854
    %v1895 = vunpack.c.l.b16 %v1855
    %v1896 = vunpack.c.h.b16 %v1855
    %v1897 = vunpack.c.l.b16 %v1856
    %v1898 = vunpack.c.h.b16 %v1856
    %v1899 = vunpack.c.l.b16 %v1857
    %v1900 = vunpack.c.h.b16 %v1857
    %v1901 = vunpack.c.l.b16 %v1858
    %v1902 = vunpack.c.h.b16 %v1858
    %v1903 = vunpack.c.l.b16 %v1859
    %v1904 = vunpack.c.h.b16 %v1859
    %v1905 = vunpack.c.l.b16 %v1860
    %v1906 = vunpack.c.h.b16 %v1860
    %v1907 = vunpack.c.l.b16 %v1861
    %v1908 = vunpack.c.h.b16 %v1861
    %v1909 = vunpack.c.l.b16 %v1862
    %v1910 = vunpack.c.h.b16 %v1862
    %v1911 = vunpack.c.l.b16 %v1863
    %v1912 = vunpack.c.h.b16 %v1863
    %v1913 = vunpack.c.l.b16 %v1864
    %v1914 = vunpack.c.h.b16 %v1864
    %v1915 = vunpack.c.l.b16 %v1865
    %v1916 = vunpack.c.h.b16 %v1865
    %v1917 = vunpack.c.l.b16 %v1866
    %v1918 = vunpack.c.h.b16 %v1866
    %v1919 = vunpack.c.l.b16 %v1867
    %v1920 = vunpack.c.h.b16 %v1867
    %v1921 = vunpack.c.l.b16 %v1868
    %v1922 = vunpack.c.h.b16 %v1868
    %v1923 = vunpack.c.l.b16 %v1869
    %v1924 = vunpack.c.h.b16 %v1869
    %v1925 = vpack.c.b16 %v1895, %v1893
    %v1926 = vpack.c.b16 %v1896, %v1894
    %v1927 = vpack.c.b16 %v1899, %v1897
    %v1928 = vpack.c.b16 %v1900, %v1898
    %v1929 = vpack.c.b16 %v1903, %v1901
    %v1930 = vpack.c.b16 %v1904, %v1902
    %v1931 = vpack.c.b16 %v1907, %v1905
    %v1932 = vpack.c.b16 %v1908, %v1906
    %v1933 = vpack.c.b16 %v1911, %v1909
    %v1934 = vpack.c.b16 %v1912, %v1910
    %v1935 = vpack.c.b16 %v1915, %v1913
    %v1936 = vpack.c.b16 %v1916, %v1914
    %v1937 = vpack.c.b16 %v1919, %v1917
    %v1938 = vpack.c.b16 %v1920, %v1918
    %v1939 = vpack.c.b16 %v1923, %v1921
    %v1940 = vpack.c.b16 %v1924, %v1922
    %1957 = vmatpush.bf16.msra.mxu0 %v1939
    %1958 = vmatpush.bf16.msra.mxu0 %v1937
    %1959 = vmatpush.bf16.msra.mxu0 %v1935
    %1960 = vmatpush.bf16.msra.mxu0 %v1933
    %1961 = vmatpush.bf16.msra.mxu0 %v1931
    %1962 = vmatpush.bf16.msra.mxu0 %v1929
    %1963 = vmatpush.bf16.msra.mxu0 %v1927
    %1964 = vmatpush.bf16.msra.mxu0 %v1925
    %1965 = vmatmul.bf16.gmra.mxu0 %v1852
    %v1966 = vpop.f32.mrf.mxu0
    %v1967 = vadd.f32 %v1873, %v1966
    %v1968 = vpop.f32.mrf.mxu0
    %v1969 = vadd.f32 %v1873, %v1968
    %1970 = vdwg.mxu0
    %1971 = vmatpush.bf16.msra.mxu0 %v1940
    %1972 = vmatpush.bf16.msra.mxu0 %v1938
    %1973 = vmatpush.bf16.msra.mxu0 %v1936
    %1974 = vmatpush.bf16.msra.mxu0 %v1934
    %1975 = vmatpush.bf16.msra.mxu0 %v1932
    %1976 = vmatpush.bf16.msra.mxu0 %v1930
    %1977 = vmatpush.bf16.msra.mxu0 %v1928
    %1978 = vmatpush.bf16.msra.mxu0 %v1926
    %1979 = vmatmul.bf16.gmra.mxu0 %v1852
    %v1980 = vpop.f32.mrf.mxu0
    %v1981 = vadd.f32 %v1874, %v1980
    %v1982 = vpop.f32.mrf.mxu0
    %v1983 = vadd.f32 %v1874, %v1982
    %1984 = vdwg.mxu0
    %v1985 = vmul.f32 %v1967, 0.5
    %v1986 = vmul.f32 %v1981, 0.5
    %v1987 = vmul.f32 %v1969, 0.5
    %v1988 = vmul.f32 %v1983, 0.5
    %v1989 = vmul.f32 %v1967, 0.044715
    %v1990 = vmul.f32 %v1981, 0.044715
    %v1991 = vmul.f32 %v1969, 0.044715
    %v1992 = vmul.f32 %v1983, 0.044715
    %v1993 = vmul.f32 %v1989, %v1967
    %v1994 = vmul.f32 %v1990, %v1981
    %v1995 = vmul.f32 %v1991, %v1969
    %v1996 = vmul.f32 %v1992, %v1983
    %v1997 = vmul.f32 %v1993, %v1967
    %v1998 = vmul.f32 %v1994, %v1981
    %v1999 = vmul.f32 %v1995, %v1969
    %v2000 = vmul.f32 %v1996, %v1983
    %v2001 = vadd.f32 %v1967, %v1997
    %v2002 = vadd.f32 %v1981, %v1998
    %v2003 = vadd.f32 %v1969, %v1999
    %v2004 = vadd.f32 %v1983, %v2000
    %v2005 = vmul.f32 %v2001, 0.7978846
    %v2006 = vmul.f32 %v2002, 0.7978846
    %v2007 = vmul.f32 %v2003, 0.7978846
    %v2008 = vmul.f32 %v2004, 0.7978846
    %v2009 = vtanh.pop %v2005
    %v2010 = vtanh.pop %v2006
    %v2011 = vtanh.pop %v2007
    %v2012 = vtanh.pop %v2008
    %v2013 = vadd.f32 %v2009, 1.0
    %v2014 = vadd.f32 %v2010, 1.0
    %v2015 = vadd.f32 %v2011, 1.0
    %v2016 = vadd.f32 %v2012, 1.0
    %v2017 = vmul.f32 %v1985, %v2013
    %v2018 = vmul.f32 %v1986, %v2014
    %v2019 = vmul.f32 %v1987, %v2015
    %v2020 = vmul.f32 %v1988, %v2016
    %v2021 = vpack.c.bf16 %v2019, %v2017
    %v2022 = vpack.c.bf16 %v2020, %v2018
    %s2023 = scalar_lea.vmem [#allocation17], 128
    %v2024 = vld [vmem:[%s2023] sm:$0xf]
    %v2025 = vld [vmem:[%s2023 + $0x4] sm:$0xf]
    %v2026 = vld [vmem:[%s2023 + $0x8] sm:$0xf]
    %v2027 = vld [vmem:[%s2023 + $0xc] sm:$0xf]
    %v2028 = vld [vmem:[%s2023 + $0x10] sm:$0xf]
    %v2029 = vld [vmem:[%s2023 + $0x14] sm:$0xf]
    %v2030 = vld [vmem:[%s2023 + $0x18] sm:$0xf]
    %v2031 = vld [vmem:[%s2023 + $0x1c] sm:$0xf]
    %v2032 = vld [vmem:[%s2023 + $0x20] sm:$0xf]
    %v2033 = vld [vmem:[%s2023 + $0x24] sm:$0xf]
    %v2034 = vld [vmem:[%s2023 + $0x28] sm:$0xf]
    %v2035 = vld [vmem:[%s2023 + $0x2c] sm:$0xf]
    %v2036 = vld [vmem:[%s2023 + $0x30] sm:$0xf]
    %v2037 = vld [vmem:[%s2023 + $0x34] sm:$0xf]
    %v2038 = vld [vmem:[%s2023 + $0x38] sm:$0xf]
    %v2039 = vld [vmem:[%s2023 + $0x3c] sm:$0xf]
    %v2040 = vld [vmem:[%s2023 + $0x40] sm:$0xf]
    %v2041 = vld [vmem:[%s2023 + $0x44] sm:$0xf]
    %v2042 = vld [vmem:[%s2023 + $0x48] sm:$0xf]
    %v2043 = vld [vmem:[%s2023 + $0x4c] sm:$0xf]
    %v2044 = vld [vmem:[%s2023 + $0x50] sm:$0xf]
    %v2045 = vld [vmem:[%s2023 + $0x54] sm:$0xf]
    %v2046 = vld [vmem:[%s2023 + $0x58] sm:$0xf]
    %v2047 = vld [vmem:[%s2023 + $0x5c] sm:$0xf]
    %v2048 = vld [vmem:[%s2023 + $0x60] sm:$0xf]
    %v2049 = vld [vmem:[%s2023 + $0x64] sm:$0xf]
    %v2050 = vld [vmem:[%s2023 + $0x68] sm:$0xf]
    %v2051 = vld [vmem:[%s2023 + $0x6c] sm:$0xf]
    %v2052 = vld [vmem:[%s2023 + $0x70] sm:$0xf]
    %v2053 = vld [vmem:[%s2023 + $0x74] sm:$0xf]
    %v2054 = vld [vmem:[%s2023 + $0x78] sm:$0xf]
    %v2055 = vld [vmem:[%s2023 + $0x7c] sm:$0xf]
    %s2056 = scalar_lea.vmem %s12, 1
    %v2057 = vld [vmem:[%s2056] sm:$0x1]
    %v2059 = vperm.slane %v2057, 0
    %v2093 = vunpack.c.l.b16 %v2024
    %v2094 = vunpack.c.l.b16 %v2025
    %v2095 = vunpack.c.l.b16 %v2026
    %v2096 = vunpack.c.l.b16 %v2027
    %v2097 = vunpack.c.l.b16 %v2028
    %v2098 = vunpack.c.l.b16 %v2029
    %v2099 = vunpack.c.l.b16 %v2030
    %v2100 = vunpack.c.l.b16 %v2031
    %v2101 = vunpack.c.l.b16 %v2032
    %v2102 = vunpack.c.l.b16 %v2033
    %v2103 = vunpack.c.l.b16 %v2034
    %v2104 = vunpack.c.l.b16 %v2035
    %v2105 = vunpack.c.l.b16 %v2036
    %v2106 = vunpack.c.l.b16 %v2037
    %v2107 = vunpack.c.l.b16 %v2038
    %v2108 = vunpack.c.l.b16 %v2039
    %v2109 = vunpack.c.l.b16 %v2040
    %v2110 = vunpack.c.l.b16 %v2041
    %v2111 = vunpack.c.l.b16 %v2042
    %v2112 = vunpack.c.l.b16 %v2043
    %v2113 = vunpack.c.l.b16 %v2044
    %v2114 = vunpack.c.l.b16 %v2045
    %v2115 = vunpack.c.l.b16 %v2046
    %v2116 = vunpack.c.l.b16 %v2047
    %v2117 = vunpack.c.l.b16 %v2048
    %v2118 = vunpack.c.l.b16 %v2049
    %v2119 = vunpack.c.l.b16 %v2050
    %v2120 = vunpack.c.l.b16 %v2051
    %v2121 = vunpack.c.l.b16 %v2052
    %v2122 = vunpack.c.l.b16 %v2053
    %v2123 = vunpack.c.l.b16 %v2054
    %v2124 = vunpack.c.l.b16 %v2055
    %v2125 = vpack.c.b16 %v2094, %v2093
    %v2126 = vpack.c.b16 %v2096, %v2095
    %v2127 = vpack.c.b16 %v2098, %v2097
    %v2128 = vpack.c.b16 %v2100, %v2099
    %v2129 = vpack.c.b16 %v2102, %v2101
    %v2130 = vpack.c.b16 %v2104, %v2103
    %v2131 = vpack.c.b16 %v2106, %v2105
    %v2132 = vpack.c.b16 %v2108, %v2107
    %v2133 = vpack.c.b16 %v2110, %v2109
    %v2134 = vpack.c.b16 %v2112, %v2111
    %v2135 = vpack.c.b16 %v2114, %v2113
    %v2136 = vpack.c.b16 %v2116, %v2115
    %v2137 = vpack.c.b16 %v2118, %v2117
    %v2138 = vpack.c.b16 %v2120, %v2119
    %v2139 = vpack.c.b16 %v2122, %v2121
    %v2140 = vpack.c.b16 %v2124, %v2123
    %2157 = vmatpush.bf16.msra.mxu0 %v2132
    %2158 = vmatpush.bf16.msra.mxu0 %v2131
    %2159 = vmatpush.bf16.msra.mxu0 %v2130
    %2160 = vmatpush.bf16.msra.mxu0 %v2129
    %2161 = vmatpush.bf16.msra.mxu0 %v2128
    %2162 = vmatpush.bf16.msra.mxu0 %v2127
    %2163 = vmatpush.bf16.msra.mxu0 %v2126
    %2164 = vmatpush.bf16.msra.mxu0 %v2125
    %2165 = vmatmul.bf16.gmra.mxu0 %v2021
    %v2166 = vpop.f32.mrf.mxu0
    %v2167 = vadd.f32 %v2059, %v2166
    %v2168 = vpop.f32.mrf.mxu0
    %v2169 = vadd.f32 %v2059, %v2168
    %2170 = vdwg.mxu0
    %2171 = vmatpush.bf16.msra.mxu0 %v2140
    %2172 = vmatpush.bf16.msra.mxu0 %v2139
    %2173 = vmatpush.bf16.msra.mxu0 %v2138
    %2174 = vmatpush.bf16.msra.mxu0 %v2137
    %2175 = vmatpush.bf16.msra.mxu0 %v2136
    %2176 = vmatpush.bf16.msra.mxu0 %v2135
    %2177 = vmatpush.bf16.msra.mxu0 %v2134
    %2178 = vmatpush.bf16.msra.mxu0 %v2133
    %2179 = vmatmul.bf16.gmra.mxu0 %v2022
    %v2180 = vpop.f32.mrf.mxu0
    %v2181 = vadd.f32 %v2167, %v2180
    %v2182 = vpop.f32.mrf.mxu0
    %v2183 = vadd.f32 %v2169, %v2182
    %2184 = vdwg.mxu0
    %v2185 = vadd.f32 %v1850, %v2181
    %v2186 = vadd.f32 %v1851, %v2183
    %s2187 = scalar_lea.vmem %s13, 1
    %v2188 = vld [vmem:[%s2187] sm:$0x1]
    %s2189 = scalar_lea.vmem %s14, 1
    %v2190 = vld [vmem:[%s2189] sm:$0x1]
    %2191 = vadd.xlane.f32.xlu0 %v2185
    %v2192 = vpop.xlane.xlu0 %2191
    %2193 = vadd.xlane.f32.xlu0 %v2186
    %v2194 = vpop.xlane.xlu0 %2193
    %v2195 = vmul.f32 %v2192, %v263
    %v2196 = vmul.f32 %v2194, %v263
    %v2197 = vsub.f32 %v2185, %v2195
    %v2198 = vsub.f32 %v2186, %v2196
    %v2199 = vmul.f32 %v2197, %v2197
    %v2200 = vmul.f32 %v2198, %v2198
    %2201 = vadd.xlane.f32.xlu0 %v2199
    %v2202 = vpop.xlane.xlu0 %2201
    %2203 = vadd.xlane.f32.xlu0 %v2200
    %v2204 = vpop.xlane.xlu0 %2203
    %v2205 = vmul.f32 %v2202, %v263
    %v2206 = vmul.f32 %v2204, %v263
    %v2207 = vadd.f32 %v2205, 1e-12
    %v2208 = vadd.f32 %v2206, 1e-12
    %v2209 = vrsqrt.pop %v2207
    %v2210 = vmul.f32 %v2209, %v2207
    %v2211 = vmul.f32 %v2210, %v2209
    %v2212 = vmul.f32 0.5, %v2211
    %v2213 = vsub.f32 1.5, %v2212
    %v2214 = vmul.f32 %v2209, %v2213
    %vm2215 = vweird.f32 %v2207
    %vm2216 = vweird.f32 %v2209
    %vm2217 = vmor %vm2215, %vm2216
    %v2218 = vsel %vm2217, %v2209, %v2214
    %v2219 = vrsqrt.pop %v2208
    %v2220 = vmul.f32 %v2219, %v2208
    %v2221 = vmul.f32 %v2220, %v2219
    %v2222 = vmul.f32 0.5, %v2221
    %v2223 = vsub.f32 1.5, %v2222
    %v2224 = vmul.f32 %v2219, %v2223
    %vm2225 = vweird.f32 %v2208
    %vm2226 = vweird.f32 %v2219
    %vm2227 = vmor %vm2225, %vm2226
    %v2228 = vsel %vm2227, %v2219, %v2224
    %v2229 = vmul.f32 %v2197, %v2218
    %v2230 = vmul.f32 %v2198, %v2228
    %v2232 = vperm.slane %v2188, 0
    %v2234 = vmul.f32 %v2229, %v2232
    %v2235 = vmul.f32 %v2230, %v2232
    %v2237 = vperm.slane %v2190, 0
    %v2239 = vadd.f32 %v2234, %v2237
    %v2240 = vadd.f32 %v2235, %v2237
    %v2242 = vrot.slane %v2240, 7
    %vm2244 = vcmask 1040384
    %v2245 = vsel %vm2244, %v2239, %v2242
    %v2246 = vpack.c.bf16 %v2245, %v2245
    %v2247 = vld [vmem:[#allocation19] sm:$0xf]
    %v2248 = vld [vmem:[#allocation19 + $0x4] sm:$0xf]
    %v2249 = vld [vmem:[#allocation19 + $0x8] sm:$0xf]
    %v2250 = vld [vmem:[#allocation19 + $0xc] sm:$0xf]
    %v2251 = vld [vmem:[#allocation19 + $0x10] sm:$0xf]
    %v2252 = vld [vmem:[#allocation19 + $0x14] sm:$0xf]
    %v2253 = vld [vmem:[#allocation19 + $0x18] sm:$0xf]
    %v2254 = vld [vmem:[#allocation19 + $0x1c] sm:$0xf]
    %v2255 = vld [vmem:[#allocation19 + $0x20] sm:$0xf]
    %v2256 = vld [vmem:[#allocation19 + $0x24] sm:$0xf]
    %v2257 = vld [vmem:[#allocation19 + $0x28] sm:$0xf]
    %v2258 = vld [vmem:[#allocation19 + $0x2c] sm:$0xf]
    %v2259 = vld [vmem:[#allocation19 + $0x30] sm:$0xf]
    %v2260 = vld [vmem:[#allocation19 + $0x34] sm:$0xf]
    %v2261 = vld [vmem:[#allocation19 + $0x38] sm:$0xf]
    %v2262 = vld [vmem:[#allocation19 + $0x3c] sm:$0xf]
    %v2263 = vld [vmem:[%s16] sm:$0x1]
    %v2265 = vperm.slane %v2263, 0
    %v2283 = vunpack.c.l.b16 %v2247
    %v2284 = vunpack.c.l.b16 %v2248
    %v2285 = vunpack.c.l.b16 %v2249
    %v2286 = vunpack.c.l.b16 %v2250
    %v2287 = vunpack.c.l.b16 %v2251
    %v2288 = vunpack.c.l.b16 %v2252
    %v2289 = vunpack.c.l.b16 %v2253
    %v2290 = vunpack.c.l.b16 %v2254
    %v2291 = vunpack.c.l.b16 %v2255
    %v2292 = vunpack.c.l.b16 %v2256
    %v2293 = vunpack.c.l.b16 %v2257
    %v2294 = vunpack.c.l.b16 %v2258
    %v2295 = vunpack.c.l.b16 %v2259
    %v2296 = vunpack.c.l.b16 %v2260
    %v2297 = vunpack.c.l.b16 %v2261
    %v2298 = vunpack.c.l.b16 %v2262
    %v2299 = vpack.c.b16 %v2284, %v2283
    %v2300 = vpack.c.b16 %v2286, %v2285
    %v2301 = vpack.c.b16 %v2288, %v2287
    %v2302 = vpack.c.b16 %v2290, %v2289
    %v2303 = vpack.c.b16 %v2292, %v2291
    %v2304 = vpack.c.b16 %v2294, %v2293
    %v2305 = vpack.c.b16 %v2296, %v2295
    %v2306 = vpack.c.b16 %v2298, %v2297
    %2315 = vmatpush.bf16.msra.mxu0 %v2306
    %2316 = vmatpush.bf16.msra.mxu0 %v2305
    %2317 = vmatpush.bf16.msra.mxu0 %v2304
    %2318 = vmatpush.bf16.msra.mxu0 %v2303
    %2319 = vmatpush.bf16.msra.mxu0 %v2302
    %2320 = vmatpush.bf16.msra.mxu0 %v2301
    %2321 = vmatpush.bf16.msra.mxu0 %v2300
    %2322 = vmatpush.bf16.msra.mxu0 %v2299
    %2323 = vmatmul.bf16.gmra.mxu0 %v2246
    %v2324 = vpop.f32.mrf.mxu0
    %v2325 = vadd.f32 %v2265, %v2324
    %v2326 = vpop.f32.mrf.mxu0
    %2327 = vdwg.mxu0
    %v2328 = vtanh.pop %v2325
    %v2329 = vpack.c.bf16 %v2328, %v2328
    %v2330 = vld [vmem:[#allocation20] sm:$0xf]
    %v2331 = vld [vmem:[#allocation20 + $0x4] sm:$0xf]
    %v2332 = vld [vmem:[#allocation20 + $0x8] sm:$0xf]
    %v2333 = vld [vmem:[#allocation20 + $0xc] sm:$0xf]
    %v2334 = vld [vmem:[#allocation20 + $0x10] sm:$0xf]
    %v2335 = vld [vmem:[#allocation20 + $0x14] sm:$0xf]
    %v2336 = vld [vmem:[#allocation20 + $0x18] sm:$0xf]
    %v2337 = vld [vmem:[#allocation20 + $0x1c] sm:$0xf]
    %v2338 = vld [vmem:[#allocation20 + $0x20] sm:$0xf]
    %v2339 = vld [vmem:[#allocation20 + $0x24] sm:$0xf]
    %v2340 = vld [vmem:[#allocation20 + $0x28] sm:$0xf]
    %v2341 = vld [vmem:[#allocation20 + $0x2c] sm:$0xf]
    %v2342 = vld [vmem:[#allocation20 + $0x30] sm:$0xf]
    %v2343 = vld [vmem:[#allocation20 + $0x34] sm:$0xf]
    %v2344 = vld [vmem:[#allocation20 + $0x38] sm:$0xf]
    %v2345 = vld [vmem:[#allocation20 + $0x3c] sm:$0xf]
    %v2346 = vld [vmem:[%s18] sm:$0x1]
    %v2348 = vperm.slane %v2346, 0
    %v2366 = vunpack.c.l.b16 %v2330
    %v2367 = vunpack.c.l.b16 %v2331
    %v2368 = vunpack.c.l.b16 %v2332
    %v2369 = vunpack.c.l.b16 %v2333
    %v2370 = vunpack.c.l.b16 %v2334
    %v2371 = vunpack.c.l.b16 %v2335
    %v2372 = vunpack.c.l.b16 %v2336
    %v2373 = vunpack.c.l.b16 %v2337
    %v2374 = vunpack.c.l.b16 %v2338
    %v2375 = vunpack.c.l.b16 %v2339
    %v2376 = vunpack.c.l.b16 %v2340
    %v2377 = vunpack.c.l.b16 %v2341
    %v2378 = vunpack.c.l.b16 %v2342
    %v2379 = vunpack.c.l.b16 %v2343
    %v2380 = vunpack.c.l.b16 %v2344
    %v2381 = vunpack.c.l.b16 %v2345
    %v2382 = vpack.c.b16 %v2367, %v2366
    %v2383 = vpack.c.b16 %v2369, %v2368
    %v2384 = vpack.c.b16 %v2371, %v2370
    %v2385 = vpack.c.b16 %v2373, %v2372
    %v2386 = vpack.c.b16 %v2375, %v2374
    %v2387 = vpack.c.b16 %v2377, %v2376
    %v2388 = vpack.c.b16 %v2379, %v2378
    %v2389 = vpack.c.b16 %v2381, %v2380
    %2398 = vmatpush.bf16.msra.mxu0 %v2389
    %2399 = vmatpush.bf16.msra.mxu0 %v2388
    %2400 = vmatpush.bf16.msra.mxu0 %v2387
    %2401 = vmatpush.bf16.msra.mxu0 %v2386
    %2402 = vmatpush.bf16.msra.mxu0 %v2385
    %2403 = vmatpush.bf16.msra.mxu0 %v2384
    %2404 = vmatpush.bf16.msra.mxu0 %v2383
    %2405 = vmatpush.bf16.msra.mxu0 %v2382
    %2406 = vmatmul.bf16.gmra.mxu0 %v2329
    %v2407 = vpop.f32.mrf.mxu0
    %v2408 = vadd.f32 %v2348, %v2407
    %v2409 = vpop.f32.mrf.mxu0
    %2410 = vdwg.mxu0
    %2411 = vst [vmem:[#allocation22] sm:$0x3] %v2328
    %2412 = vst [vmem:[#allocation23] sm:$0x3] %v2408
    // Predicated region
    $region126: #{tpu_custom_call.1} parent=1 // pred_check
      _
    $region127: #{tpu_custom_call.1} parent=1 // pred_check_branch
      %2414 = sbr.rel (0) target = $region129
    $region128: #{tpu_custom_call.1} parent=1 // pred_region
      %2416 = vsyncadd [#allocation4], 0
      %s2418 = sshll.u32 [#allocation22], 4
      %s2419 = int_to_ptr.vmem [resolvable:$true] %s2418
      %s2420 = sshll.u32 %s19, 4
      %s2421 = int_to_ptr.hbm [resolvable:$true] %s2420
      %2423 = dma.vmem_to_hbm [thread:$0]  %s2419, 32, %s2421, [#allocation4]
    $region129: #{tpu_custom_call.1} parent=1 // pred_fallthru
      _
    // Predicated region
    $region130: #{tpu_custom_call.1} parent=1 // pred_check
      _
    $region131: #{tpu_custom_call.1} parent=1 // pred_check_branch
      %2425 = sbr.rel (0) target = $region133
    $region132: #{tpu_custom_call.1} parent=1 // pred_region
      %2427 = vsyncadd [#allocation24], 0
      %s2429 = sshll.u32 [#allocation23], 4
      %s2430 = int_to_ptr.vmem [resolvable:$true] %s2429
      %s2431 = sshll.u32 %s20, 4
      %s2432 = int_to_ptr.hbm [resolvable:$true] %s2431
      %2434 = dma.vmem_to_hbm [thread:$0]  %s2430, 32, %s2432, [#allocation24]
    $region133: #{tpu_custom_call.1} parent=1 // pred_fallthru
      _
    // Predicated region
    $region134: #{tpu_custom_call.1} parent=1 // pred_check
      _
    $region135: #{tpu_custom_call.1} parent=1 // pred_check_branch
      %2436 = sbr.rel (0) target = $region137
    $region136: #{tpu_custom_call.1} parent=1 // pred_region
      %2438 = dma.done [#allocation4], 32
    $region137: #{tpu_custom_call.1} parent=1 // pred_fallthru
      _
    // Predicated region
    $region138: #{tpu_custom_call.1} parent=1 // pred_check
      _
    $region139: #{tpu_custom_call.1} parent=1 // pred_check_branch
      %2440 = sbr.rel (0) target = $region141
    $region140: #{tpu_custom_call.1} parent=1 // pred_region
      %2442 = dma.done [#allocation24], 32
    $region141: #{tpu_custom_call.1} parent=1 // pred_fallthru
      _
    %2443 = vsyncpa [#allocation3], 1
    %2444 = vsyncpa [#allocation6], 1
    %2445 = vsyncpa [#allocation9], 1
    %2446 = vsyncpa [#allocation12], 1
    %2447 = vsyncpa [#allocation15], 1
    %2448 = vsyncpa [#allocation18], 1
    %2449 = vsyncpa [#allocation21], 1
    %2450 = vsyncpa [#allocation4], 1
    %2451 = vsyncpa [#allocation24], 1

</llo_original>
